<compile_context>
chip_gen: v5e
topology: v5e:2x2
jax: 0.10.0
libtpu: 0.0.40
codegen_flags: <defaults>
</compile_context>

<pallas_src>
import jax
import jax.numpy as jnp
from jax import lax
from jax.experimental import pallas as pl
from jax.experimental.pallas import tpu as pltpu

F32 = jnp.float32
BF16 = jnp.bfloat16
LN_EPS = 1e-5


# ------------------------------------------------------------------ shared helpers
def _layernorm(x, g, b):
    """LayerNorm over last dim, f32 math (biased variance, eps=1e-5, torch-compatible)."""
    x = x.astype(F32)
    mu = jnp.mean(x, axis=-1, keepdims=True)
    var = jnp.mean(jnp.square(x - mu), axis=-1, keepdims=True)
    return (x - mu) * lax.rsqrt(var + LN_EPS) * g + b


# ------------------------------------------------------------------ 1) embed kernel
def _embed_kernel(x_ref, pw_ref, cls_ref, pos_ref, g_ref, b_ref, o_ref):
    # x_ref: (S, C*P*P) with row 0 zeroed (class-token slot) => its matmul row is 0.
    pe = jnp.dot(x_ref[...].astype(BF16), pw_ref[...],
                 preferred_element_type=F32)                      # (S, D) f32
    S = o_ref.shape[0]
    is_cls = lax.broadcasted_iota(jnp.int32, (S, 1), 0) == 0
    tok = pos_ref[...] + jnp.where(is_cls, cls_ref[...], 0.0)     # (S, D)
    o_ref[...] = _layernorm(pe + tok, g_ref[...], b_ref[...]).astype(o_ref.dtype)


# ---------------------------------------------------------------- 2) encoder kernel
def _make_encoder_kernel(n_heads):
    def kernel(h_ref, ln1g, ln1b, wq, bq, wk, bk, wv, bv, wo, bo,
               ln2g, ln2b, f1w, f1b, f2w, f2b, o_ref, h_sc):
        layer = pl.program_id(1)

        @pl.when(layer == 0)
        def _():                                  # load embeddings once per batch row
            h_sc[...] = h_ref[...]

        h = h_sc[...]                             # (S, D) f32, VMEM-resident
        dh = wq.shape[-1]
        scale = float(dh) ** -0.5

        # ---- self-attention block (pre-LN) --------------------------------------
        x = _layernorm(h, ln1g[...], ln1b[...])
        xb = x.astype(BF16)
        # residual + out-proj bias + sum over heads of (attn_h @ Wo_h)
        h_new = h + bo[...]
        for hd in range(n_heads):
            q = jnp.dot(xb, wq[hd], preferred_element_type=F32) + bq[hd]   # (S, Dh)
            k = jnp.dot(xb, wk[hd], preferred_element_type=F32) + bk[hd]
            v = jnp.dot(xb, wv[hd], preferred_element_type=F32) + bv[hd]
            s = lax.dot_general((q * scale).astype(BF16), k.astype(BF16),
                                (((1,), (1,)), ((), ())),
                                preferred_element_type=F32)                # (S, S)
            s = s - jnp.max(s, axis=-1, keepdims=True)
            p = jnp.exp(s)
            p = p * pl.reciprocal(jnp.sum(p, axis=-1, keepdims=True), approx=True)
            o_h = jnp.dot(p.astype(BF16), v.astype(BF16),
                          preferred_element_type=F32)                      # (S, Dh)
            h_new = h_new + jnp.dot(o_h.astype(BF16), wo[hd],
                                    preferred_element_type=F32)            # (S, D)
        h = h_new

        # ---- MLP block (pre-LN) ---------------------------------------------------
        x = _layernorm(h, ln2g[...], ln2b[...])
        y = jnp.dot(x.astype(BF16), f1w[...], preferred_element_type=F32) + f1b[...]
        y = y * jax.nn.sigmoid(1.702 * y)                                  # quickGELU (f32)
        h = h + jnp.dot(y.astype(BF16), f2w[...], preferred_element_type=F32) + f2b[...]

        h_sc[...] = h

        @pl.when(layer == pl.num_programs(1) - 1)
        def _():
            o_ref[...] = h_sc[...].astype(o_ref.dtype)

    return kernel


# ------------------------------------------------------------------- 3) head kernel
def _head_kernel(h_ref, g_ref, b_ref, w_ref, cb_ref, o_ref):
    cls_tok = h_ref[0:1, :]                                       # (1, D)
    pooled = _layernorm(cls_tok, g_ref[...], b_ref[...])
    o_ref[...] = (jnp.dot(pooled.astype(BF16), w_ref[...],
                          preferred_element_type=F32) + cb_ref[...]).astype(o_ref.dtype)


# ---------------------------------------------------------------------- forward pass
def vision_classifier_forward(params, pixel_values, cfg):
    B, C, H, W = pixel_values.shape
    P, D = cfg["patch"], cfg["hidden"]
    n_heads, L, I = cfg["heads"], cfg["layers"], cfg["intermediate"]
    NL, NLP = cfg["num_labels"], cfg["num_labels_padded"]
    nH, nW = H // P, W // P
    n_patches = nH * nW
    S = n_patches + 1
    CPP = C * P * P
    Dh = D // n_heads

    # layout glue (plain JAX): conv(k=stride=P, no bias) == patchify; a zero row is
    # prepended per batch so the class-token slot's patch-matmul output is exactly 0.
    x = pixel_values.reshape(B, C, nH, P, nW, P)
    x = x.transpose(0, 2, 4, 1, 3, 5).reshape(B, n_patches, CPP)
    x = jnp.concatenate([jnp.zeros((B, 1, CPP), F32), x], axis=1)      # (B, S, CPP)

    # --- 1) fused patch-embed + class/pos embedding + pre-LN ----------------------
    hidden = pl.pallas_call(
        _embed_kernel,
        grid=(B,),
        in_specs=[
            pl.BlockSpec((None, S, CPP), lambda b: (b, 0, 0)),
            pl.BlockSpec((CPP, D), lambda b: (0, 0)),
            pl.BlockSpec((1, D), lambda b: (0, 0)),
            pl.BlockSpec((S, D), lambda b: (0, 0)),
            pl.BlockSpec((1, D), lambda b: (0, 0)),
            pl.BlockSpec((1, D), lambda b: (0, 0)),
        ],
        out_specs=pl.BlockSpec((None, S, D), lambda b: (b, 0, 0)),
        out_shape=jax.ShapeDtypeStruct((B, S, D), F32),
        compiler_params=pltpu.CompilerParams(dimension_semantics=("parallel",)),
    )(x, params["patch_w"], params["class_emb"], params["pos_emb"],
      params["pre_ln_g"], params["pre_ln_b"])

    # --- 2) the whole transformer encoder in ONE pallas_call ----------------------
    e = params["enc"]
    w3 = lambda b, l: (l, 0, 0)          # per-layer 3-D param block
    w4 = lambda b, l: (l, 0, 0, 0)       # per-layer, per-head 4-D param block
    hidden = pl.pallas_call(
        _make_encoder_kernel(n_heads),
        grid=(B, L),                     # layer axis innermost, hidden stays in VMEM
        in_specs=[
            pl.BlockSpec((None, S, D), lambda b, l: (b, 0, 0)),        # h (embeddings)
            pl.BlockSpec((None, 1, D), w3),                            # ln1_g
            pl.BlockSpec((None, 1, D), w3),                            # ln1_b
            pl.BlockSpec((None, n_heads, D, Dh), w4),                  # wq
            pl.BlockSpec((None, n_heads, 1, Dh), w4),                  # bq
            pl.BlockSpec((None, n_heads, D, Dh), w4),                  # wk
            pl.BlockSpec((None, n_heads, 1, Dh), w4),                  # bk
            pl.BlockSpec((None, n_heads, D, Dh), w4),                  # wv
            pl.BlockSpec((None, n_heads, 1, Dh), w4),                  # bv
            pl.BlockSpec((None, n_heads, Dh, D), w4),                  # wo
            pl.BlockSpec((None, 1, D), w3),                            # bo
            pl.BlockSpec((None, 1, D), w3),                            # ln2_g
            pl.BlockSpec((None, 1, D), w3),                            # ln2_b
            pl.BlockSpec((None, D, I), w3),                            # fc1_w
            pl.BlockSpec((None, 1, I), w3),                            # fc1_b
            pl.BlockSpec((None, I, D), w3),                            # fc2_w
            pl.BlockSpec((None, 1, D), w3),                            # fc2_b
        ],
        out_specs=pl.BlockSpec((None, S, D), lambda b, l: (b, 0, 0)),
        out_shape=jax.ShapeDtypeStruct((B, S, D), F32),
        scratch_shapes=[pltpu.VMEM((S, D), F32)],
        compiler_params=pltpu.CompilerParams(
            dimension_semantics=("parallel", "arbitrary")),
    )(hidden, e["ln1_g"], e["ln1_b"], e["wq"], e["bq"], e["wk"], e["bk"],
      e["wv"], e["bv"], e["wo"], e["bo"], e["ln2_g"], e["ln2_b"],
      e["fc1_w"], e["fc1_b"], e["fc2_w"], e["fc2_b"])

    # --- 3) pooler (post-LN of CLS token) + lane-dense classifier head ------------
    logits_pad = pl.pallas_call(
        _head_kernel,
        grid=(B,),
        in_specs=[
            pl.BlockSpec((None, S, D), lambda b: (b, 0, 0)),
            pl.BlockSpec((1, D), lambda b: (0, 0)),
            pl.BlockSpec((1, D), lambda b: (0, 0)),
            pl.BlockSpec((D, NLP), lambda b: (0, 0)),
            pl.BlockSpec((1, NLP), lambda b: (0, 0)),
        ],
        out_specs=pl.BlockSpec((None, 1, NLP), lambda b: (b, 0, 0)),
        out_shape=jax.ShapeDtypeStruct((B, 1, NLP), F32),
        compiler_params=pltpu.CompilerParams(dimension_semantics=("parallel",)),
    )(hidden, params["post_ln_g"], params["post_ln_b"],
      params["cls_w_pad"], params["cls_b_pad"])

    return logits_pad[:, 0, :NL]                     # un-pad the 128-wide logits


# ------------------------------------------------------------------------ init/main
def init_params(key, cfg):
    D, C, P = cfg["hidden"], cfg["channels"], cfg["patch"]
    I, L, Hn = cfg["intermediate"], cfg["layers"], cfg["heads"]
    S, NL, NLP = cfg["num_positions"], cfg["num_labels"], cfg["num_labels_padded"]
    Dh = D // Hn

    keys = jax.random.split(key, 4 + L)

    def w(k, shape):
        return jax.random.normal(k, shape, F32) * 0.02

    params = {
        "patch_w": w(keys[0], (C * P * P, D)).astype(BF16),
        "class_emb": w(keys[1], (1, D)),
        "pos_emb": w(keys[2], (S, D)),
        "pre_ln_g": jnp.ones((1, D), F32), "pre_ln_b": jnp.zeros((1, D), F32),
        "post_ln_g": jnp.ones((1, D), F32), "post_ln_b": jnp.zeros((1, D), F32),
    }
    cls_w = w(keys[3], (D, NL))
    params["cls_w_pad"] = jnp.pad(cls_w, ((0, 0), (0, NLP - NL))).astype(BF16)
    params["cls_b_pad"] = jnp.zeros((1, NLP), F32)

    fields = ["ln1_g", "ln1_b", "wq", "bq", "wk", "bk", "wv", "bv",
              "wo", "bo", "ln2_g", "ln2_b", "fc1_w", "fc1_b", "fc2_w", "fc2_b"]
    per = {f: [] for f in fields}
    for li in range(L):
        lk = jax.random.split(keys[4 + li], 6)
        qw, kw_, vw, ow = (w(lk[0], (D, D)), w(lk[1], (D, D)),
                           w(lk[2], (D, D)), w(lk[3], (D, D)))
        per["ln1_g"].append(jnp.ones((1, D), F32)); per["ln1_b"].append(jnp.zeros((1, D), F32))
        per["ln2_g"].append(jnp.ones((1, D), F32)); per["ln2_b"].append(jnp.zeros((1, D), F32))
        # pre-split per head: (D, D) -> (H, D, Dh) for Q/K/V, (H, Dh, D) for out-proj.
        per["wq"].append(qw.reshape(D, Hn, Dh).transpose(1, 0, 2))
        per["wk"].append(kw_.reshape(D, Hn, Dh).transpose(1, 0, 2))
        per["wv"].append(vw.reshape(D, Hn, Dh).transpose(1, 0, 2))
        per["wo"].append(ow.reshape(Hn, Dh, D))
        per["bq"].append(jnp.zeros((Hn, 1, Dh), F32))
        per["bk"].append(jnp.zeros((Hn, 1, Dh), F32))
        per["bv"].append(jnp.zeros((Hn, 1, Dh), F32))
        per["bo"].append(jnp.zeros((1, D), F32))
        per["fc1_w"].append(w(lk[4], (D, I)))
        per["fc1_b"].append(jnp.zeros((1, I), F32))
        per["fc2_w"].append(w(lk[5], (I, D)))
        per["fc2_b"].append(jnp.zeros((1, D), F32))

    enc = {}
    for f in fields:
        arr = jnp.stack(per[f], axis=0)
        if f in ("wq", "wk", "wv", "wo", "fc1_w", "fc2_w"):
            arr = arr.astype(BF16)          # bf16 weights for MXU, f32 accumulate
        enc[f] = arr
    params["enc"] = enc
    return params


if __name__ == "__main__":
    cfg = dict(hidden=32, channels=3, patch=8, image=16, heads=4,
               intermediate=64, layers=2, num_labels=10, num_labels_padded=128)
    cfg["num_positions"] = (cfg["image"] // cfg["patch"]) ** 2 + 1

    key = jax.random.PRNGKey(0)
    pkey, xkey = jax.random.split(key)
    params = init_params(pkey, cfg)

    pixel_values = jax.random.normal(
        xkey, (2, cfg["channels"], cfg["image"], cfg["image"]), F32)   # NCHW

    fwd = jax.jit(lambda p, px: vision_classifier_forward(p, px, cfg))
    logits = jax.block_until_ready(fwd(params, pixel_values))

    assert logits.shape == (2, cfg["num_labels"])
    assert jnp.all(jnp.isfinite(logits))
    print("KERNEL_OK")
</pallas_src>

<mosaic_0001>
module attributes {stable_mosaic.version = 11 : i64} {
  func.func @_embed_kernel(%arg0: i32, %arg1: memref<1x5x192xf32, #tpu.memory_space<vmem>>, %arg2: memref<192x32xbf16, #tpu.memory_space<vmem>>, %arg3: memref<1x32xf32, #tpu.memory_space<vmem>>, %arg4: memref<5x32xf32, #tpu.memory_space<vmem>>, %arg5: memref<1x32xf32, #tpu.memory_space<vmem>>, %arg6: memref<1x32xf32, #tpu.memory_space<vmem>>, %arg7: memref<1x5x32xf32, #tpu.memory_space<vmem>>) attributes {dimension_semantics = [#tpu.dimension_semantics<parallel>], iteration_bounds = array<i64: 2>, scalar_prefetch = 0 : i64, scratch_operands = 0 : i64, tpu.core_type = #tpu.core_type<tc>, window_params = [{transform_indices = @transform_0, window_bounds = array<i64: 1, 5, 192>}, {pipeline_mode = #tpu.pipeline_mode<synchronous>, transform_indices = @transform_1, window_bounds = array<i64: 192, 32>}, {pipeline_mode = #tpu.pipeline_mode<synchronous>, transform_indices = @transform_2, window_bounds = array<i64: 1, 32>}, {pipeline_mode = #tpu.pipeline_mode<synchronous>, transform_indices = @transform_3, window_bounds = array<i64: 5, 32>}, {pipeline_mode = #tpu.pipeline_mode<synchronous>, transform_indices = @transform_4, window_bounds = array<i64: 1, 32>}, {pipeline_mode = #tpu.pipeline_mode<synchronous>, transform_indices = @transform_5, window_bounds = array<i64: 1, 32>}, {transform_indices = @transform_6, window_bounds = array<i64: 1, 5, 32>}]} {
    %c0 = arith.constant 0 : index
    %c0_0 = arith.constant 0 : index
    %c0_1 = arith.constant 0 : index
    %0 = vector.load %arg1[%c0, %c0_0, %c0_1] : memref<1x5x192xf32, #tpu.memory_space<vmem>>, vector<1x5x192xf32>
    %1 = vector.shape_cast %0 : vector<1x5x192xf32> to vector<5x192xf32>
    %2 = arith.truncf %1 : vector<5x192xf32> to vector<5x192xbf16>
    %c0_2 = arith.constant 0 : index
    %c0_3 = arith.constant 0 : index
    %3 = vector.load %arg2[%c0_2, %c0_3] : memref<192x32xbf16, #tpu.memory_space<vmem>>, vector<192x32xbf16>
    %cst = arith.constant dense<0.000000e+00> : vector<5x32xf32>
    %4 = tpu.matmul %2, %3, %cst {dimension_numbers = #tpu.dot_dimension_numbers<[1], [0], [0], [1], [0, 0, 1, 1], [], []>} : vector<5x192xbf16>, vector<192x32xbf16>, vector<5x32xf32> -> vector<5x32xf32>
    %5 = tpu.iota {dimensions = array<i32: 0>} : vector<5x1xi32>
    %c0_i32 = arith.constant 0 : i32
    %6 = vector.broadcast %c0_i32 : i32 to vector<5x1xi32>
    %7 = arith.cmpi eq, %5, %6 : vector<5x1xi32>
    %c0_4 = arith.constant 0 : index
    %c0_5 = arith.constant 0 : index
    %8 = vector.load %arg4[%c0_4, %c0_5] : memref<5x32xf32, #tpu.memory_space<vmem>>, vector<5x32xf32>
    %c0_6 = arith.constant 0 : index
    %c0_7 = arith.constant 0 : index
    %9 = vector.load %arg3[%c0_6, %c0_7] : memref<1x32xf32, #tpu.memory_space<vmem>>, vector<1x32xf32>
    %cst_8 = arith.constant 0.000000e+00 : f32
    %10 = vector.shape_cast %7 : vector<5x1xi1> to vector<5x1xi1>
    %11 = vector.broadcast %10 : vector<5x1xi1> to vector<5x32xi1>
    %12 = vector.shape_cast %9 : vector<1x32xf32> to vector<1x32xf32>
    %13 = vector.broadcast %12 : vector<1x32xf32> to vector<5x32xf32>
    %14 = vector.broadcast %cst_8 : f32 to vector<5x32xf32>
    %15 = arith.select %11, %13, %14 : vector<5x32xi1>, vector<5x32xf32>
    %16 = arith.addf %8, %15 : vector<5x32xf32>
    %17 = arith.addf %4, %16 : vector<5x32xf32>
    %c0_9 = arith.constant 0 : index
    %c0_10 = arith.constant 0 : index
    %18 = vector.load %arg5[%c0_9, %c0_10] : memref<1x32xf32, #tpu.memory_space<vmem>>, vector<1x32xf32>
    %c0_11 = arith.constant 0 : index
    %c0_12 = arith.constant 0 : index
    %19 = vector.load %arg6[%c0_11, %c0_12] : memref<1x32xf32, #tpu.memory_space<vmem>>, vector<1x32xf32>
    %cst_13 = arith.constant dense<0.000000e+00> : vector<5xf32>
    %20 = vector.multi_reduction <add>, %17, %cst_13 [1] : vector<5x32xf32> to vector<5xf32>
    %21 = vector.shape_cast %20 : vector<5xf32> to vector<5x1xf32>
    %cst_14 = arith.constant 3.200000e+01 : f32
    %22 = vector.broadcast %cst_14 : f32 to vector<5x1xf32>
    %23 = arith.divf %21, %22 : vector<5x1xf32>
    %24 = vector.broadcast %23 : vector<5x1xf32> to vector<5x32xf32>
    %25 = arith.subf %17, %24 : vector<5x32xf32>
    %26 = arith.mulf %25, %25 : vector<5x32xf32>
    %cst_15 = arith.constant dense<0.000000e+00> : vector<5xf32>
    %27 = vector.multi_reduction <add>, %26, %cst_15 [1] : vector<5x32xf32> to vector<5xf32>
    %28 = vector.shape_cast %27 : vector<5xf32> to vector<5x1xf32>
    %cst_16 = arith.constant 3.200000e+01 : f32
    %29 = vector.broadcast %cst_16 : f32 to vector<5x1xf32>
    %30 = arith.divf %28, %29 : vector<5x1xf32>
    %31 = vector.broadcast %23 : vector<5x1xf32> to vector<5x32xf32>
    %32 = arith.subf %17, %31 : vector<5x32xf32>
    %cst_17 = arith.constant 9.99999974E-6 : f32
    %33 = vector.broadcast %cst_17 : f32 to vector<5x1xf32>
    %34 = arith.addf %30, %33 : vector<5x1xf32>
    %35 = math.rsqrt %34 : vector<5x1xf32>
    %36 = vector.broadcast %35 : vector<5x1xf32> to vector<5x32xf32>
    %37 = arith.mulf %32, %36 : vector<5x32xf32>
    %38 = vector.broadcast %18 : vector<1x32xf32> to vector<5x32xf32>
    %39 = arith.mulf %37, %38 : vector<5x32xf32>
    %40 = vector.broadcast %19 : vector<1x32xf32> to vector<5x32xf32>
    %41 = arith.addf %39, %40 : vector<5x32xf32>
    %c0_18 = arith.constant 0 : index
    %c0_19 = arith.constant 0 : index
    %c0_20 = arith.constant 0 : index
    %42 = vector.load %arg7[%c0_18, %c0_19, %c0_20] : memref<1x5x32xf32, #tpu.memory_space<vmem>>, vector<1x5x32xf32>
    %43 = vector.shape_cast %42 : vector<1x5x32xf32> to vector<5x32xf32>
    %44 = vector.shape_cast %41 : vector<5x32xf32> to vector<1x5x32xf32>
    tpu.vector_store %arg7[%c0_18, %c0_19, %c0_20], %44 {strides = array<i32>} : memref<1x5x32xf32, #tpu.memory_space<vmem>>, vector<1x5x32xf32>,
    return
  }
  func.func @transform_0(%arg0: i32) -> (i32, i32, i32) {
    %c0_i32 = arith.constant 0 : i32
    %c0_i32_0 = arith.constant 0 : i32
    %c0_i32_1 = arith.constant 0 : i32
    return %arg0, %c0_i32, %c0_i32_0 : i32, i32, i32
  }
  func.func @transform_1(%arg0: i32) -> (i32, i32) {
    %c0_i32 = arith.constant 0 : i32
    %c0_i32_0 = arith.constant 0 : i32
    %c0_i32_1 = arith.constant 0 : i32
    return %c0_i32, %c0_i32_0 : i32, i32
  }
  func.func @transform_2(%arg0: i32) -> (i32, i32) {
    %c0_i32 = arith.constant 0 : i32
    %c0_i32_0 = arith.constant 0 : i32
    %c0_i32_1 = arith.constant 0 : i32
    return %c0_i32, %c0_i32_0 : i32, i32
  }
  func.func @transform_3(%arg0: i32) -> (i32, i32) {
    %c0_i32 = arith.constant 0 : i32
    %c0_i32_0 = arith.constant 0 : i32
    %c0_i32_1 = arith.constant 0 : i32
    return %c0_i32, %c0_i32_0 : i32, i32
  }
  func.func @transform_4(%arg0: i32) -> (i32, i32) {
    %c0_i32 = arith.constant 0 : i32
    %c0_i32_0 = arith.constant 0 : i32
    %c0_i32_1 = arith.constant 0 : i32
    return %c0_i32, %c0_i32_0 : i32, i32
  }
  func.func @transform_5(%arg0: i32) -> (i32, i32) {
    %c0_i32 = arith.constant 0 : i32
    %c0_i32_0 = arith.constant 0 : i32
    %c0_i32_1 = arith.constant 0 : i32
    return %c0_i32, %c0_i32_0 : i32, i32
  }
  func.func @transform_6(%arg0: i32) -> (i32, i32, i32) {
    %c0_i32 = arith.constant 0 : i32
    %c0_i32_0 = arith.constant 0 : i32
    %c0_i32_1 = arith.constant 0 : i32
    return %arg0, %c0_i32, %c0_i32_0 : i32, i32, i32
  }
}

module attributes {stable_mosaic.version = 11 : i64} {
  func.func @_head_kernel(%arg0: i32, %arg1: memref<1x5x32xf32, #tpu.memory_space<vmem>>, %arg2: memref<1x32xf32, #tpu.memory_space<vmem>>, %arg3: memref<1x32xf32, #tpu.memory_space<vmem>>, %arg4: memref<32x128xbf16, #tpu.memory_space<vmem>>, %arg5: memref<1x128xf32, #tpu.memory_space<vmem>>, %arg6: memref<1x1x128xf32, #tpu.memory_space<vmem>>) attributes {dimension_semantics = [#tpu.dimension_semantics<parallel>], iteration_bounds = array<i64: 2>, scalar_prefetch = 0 : i64, scratch_operands = 0 : i64, tpu.core_type = #tpu.core_type<tc>, window_params = [{transform_indices = @transform_0, window_bounds = array<i64: 1, 5, 32>}, {pipeline_mode = #tpu.pipeline_mode<synchronous>, transform_indices = @transform_1, window_bounds = array<i64: 1, 32>}, {pipeline_mode = #tpu.pipeline_mode<synchronous>, transform_indices = @transform_2, window_bounds = array<i64: 1, 32>}, {pipeline_mode = #tpu.pipeline_mode<synchronous>, transform_indices = @transform_3, window_bounds = array<i64: 32, 128>}, {pipeline_mode = #tpu.pipeline_mode<synchronous>, transform_indices = @transform_4, window_bounds = array<i64: 1, 128>}, {transform_indices = @transform_5, window_bounds = array<i64: 1, 1, 128>}]} {
    %c0 = arith.constant 0 : index
    %c0_0 = arith.constant 0 : index
    %c0_1 = arith.constant 0 : index
    %0 = vector.load %arg1[%c0, %c0_0, %c0_1] : memref<1x5x32xf32, #tpu.memory_space<vmem>>, vector<1x1x32xf32>
    %1 = vector.shape_cast %0 : vector<1x1x32xf32> to vector<1x32xf32>
    %c0_2 = arith.constant 0 : index
    %c0_3 = arith.constant 0 : index
    %2 = vector.load %arg2[%c0_2, %c0_3] : memref<1x32xf32, #tpu.memory_space<vmem>>, vector<1x32xf32>
    %c0_4 = arith.constant 0 : index
    %c0_5 = arith.constant 0 : index
    %3 = vector.load %arg3[%c0_4, %c0_5] : memref<1x32xf32, #tpu.memory_space<vmem>>, vector<1x32xf32>
    %cst = arith.constant dense<0.000000e+00> : vector<1xf32>
    %4 = vector.multi_reduction <add>, %1, %cst [1] : vector<1x32xf32> to vector<1xf32>
    %5 = vector.shape_cast %4 : vector<1xf32> to vector<1x1xf32>
    %cst_6 = arith.constant 3.200000e+01 : f32
    %6 = vector.broadcast %cst_6 : f32 to vector<1x1xf32>
    %7 = arith.divf %5, %6 : vector<1x1xf32>
    %8 = vector.broadcast %7 : vector<1x1xf32> to vector<1x32xf32>
    %9 = arith.subf %1, %8 : vector<1x32xf32>
    %10 = arith.mulf %9, %9 : vector<1x32xf32>
    %cst_7 = arith.constant dense<0.000000e+00> : vector<1xf32>
    %11 = vector.multi_reduction <add>, %10, %cst_7 [1] : vector<1x32xf32> to vector<1xf32>
    %12 = vector.shape_cast %11 : vector<1xf32> to vector<1x1xf32>
    %cst_8 = arith.constant 3.200000e+01 : f32
    %13 = vector.broadcast %cst_8 : f32 to vector<1x1xf32>
    %14 = arith.divf %12, %13 : vector<1x1xf32>
    %15 = vector.broadcast %7 : vector<1x1xf32> to vector<1x32xf32>
    %16 = arith.subf %1, %15 : vector<1x32xf32>
    %cst_9 = arith.constant 9.99999974E-6 : f32
    %17 = vector.broadcast %cst_9 : f32 to vector<1x1xf32>
    %18 = arith.addf %14, %17 : vector<1x1xf32>
    %19 = math.rsqrt %18 : vector<1x1xf32>
    %20 = vector.broadcast %19 : vector<1x1xf32> to vector<1x32xf32>
    %21 = arith.mulf %16, %20 : vector<1x32xf32>
    %22 = arith.mulf %21, %2 : vector<1x32xf32>
    %23 = arith.addf %22, %3 : vector<1x32xf32>
    %24 = arith.truncf %23 : vector<1x32xf32> to vector<1x32xbf16>
    %c0_10 = arith.constant 0 : index
    %c0_11 = arith.constant 0 : index
    %25 = vector.load %arg4[%c0_10, %c0_11] : memref<32x128xbf16, #tpu.memory_space<vmem>>, vector<32x128xbf16>
    %cst_12 = arith.constant dense<0.000000e+00> : vector<1x128xf32>
    %26 = tpu.matmul %24, %25, %cst_12 {dimension_numbers = #tpu.dot_dimension_numbers<[1], [0], [0], [1], [0, 0, 1, 1], [], []>} : vector<1x32xbf16>, vector<32x128xbf16>, vector<1x128xf32> -> vector<1x128xf32>
    %c0_13 = arith.constant 0 : index
    %c0_14 = arith.constant 0 : index
    %27 = vector.load %arg5[%c0_13, %c0_14] : memref<1x128xf32, #tpu.memory_space<vmem>>, vector<1x128xf32>
    %28 = arith.addf %26, %27 : vector<1x128xf32>
    %c0_15 = arith.constant 0 : index
    %c0_16 = arith.constant 0 : index
    %c0_17 = arith.constant 0 : index
    %29 = vector.load %arg6[%c0_15, %c0_16, %c0_17] : memref<1x1x128xf32, #tpu.memory_space<vmem>>, vector<1x1x128xf32>
    %30 = vector.shape_cast %29 : vector<1x1x128xf32> to vector<1x128xf32>
    %31 = vector.shape_cast %28 : vector<1x128xf32> to vector<1x1x128xf32>
    tpu.vector_store %arg6[%c0_15, %c0_16, %c0_17], %31 {strides = array<i32>} : memref<1x1x128xf32, #tpu.memory_space<vmem>>, vector<1x1x128xf32>,
    return
  }
  func.func @transform_0(%arg0: i32) -> (i32, i32, i32) {
    %c0_i32 = arith.constant 0 : i32
    %c0_i32_0 = arith.constant 0 : i32
    %c0_i32_1 = arith.constant 0 : i32
    return %arg0, %c0_i32, %c0_i32_0 : i32, i32, i32
  }
  func.func @transform_1(%arg0: i32) -> (i32, i32) {
    %c0_i32 = arith.constant 0 : i32
    %c0_i32_0 = arith.constant 0 : i32
    %c0_i32_1 = arith.constant 0 : i32
    return %c0_i32, %c0_i32_0 : i32, i32
  }
  func.func @transform_2(%arg0: i32) -> (i32, i32) {
    %c0_i32 = arith.constant 0 : i32
    %c0_i32_0 = arith.constant 0 : i32
    %c0_i32_1 = arith.constant 0 : i32
    return %c0_i32, %c0_i32_0 : i32, i32
  }
  func.func @transform_3(%arg0: i32) -> (i32, i32) {
    %c0_i32 = arith.constant 0 : i32
    %c0_i32_0 = arith.constant 0 : i32
    %c0_i32_1 = arith.constant 0 : i32
    return %c0_i32, %c0_i32_0 : i32, i32
  }
  func.func @transform_4(%arg0: i32) -> (i32, i32) {
    %c0_i32 = arith.constant 0 : i32
    %c0_i32_0 = arith.constant 0 : i32
    %c0_i32_1 = arith.constant 0 : i32
    return %c0_i32, %c0_i32_0 : i32, i32
  }
  func.func @transform_5(%arg0: i32) -> (i32, i32, i32) {
    %c0_i32 = arith.constant 0 : i32
    %c0_i32_0 = arith.constant 0 : i32
    %c0_i32_1 = arith.constant 0 : i32
    return %arg0, %c0_i32, %c0_i32_0 : i32, i32, i32
  }
}

module attributes {stable_mosaic.version = 11 : i64} {
  func.func @kernel(%arg0: i32, %arg1: i32, %arg2: memref<1x5x32xf32, #tpu.memory_space<vmem>>, %arg3: memref<1x1x32xf32, #tpu.memory_space<vmem>>, %arg4: memref<1x1x32xf32, #tpu.memory_space<vmem>>, %arg5: memref<1x4x32x8xbf16, #tpu.memory_space<vmem>>, %arg6: memref<1x4x1x8xf32, #tpu.memory_space<vmem>>, %arg7: memref<1x4x32x8xbf16, #tpu.memory_space<vmem>>, %arg8: memref<1x4x1x8xf32, #tpu.memory_space<vmem>>, %arg9: memref<1x4x32x8xbf16, #tpu.memory_space<vmem>>, %arg10: memref<1x4x1x8xf32, #tpu.memory_space<vmem>>, %arg11: memref<1x4x8x32xbf16, #tpu.memory_space<vmem>>, %arg12: memref<1x1x32xf32, #tpu.memory_space<vmem>>, %arg13: memref<1x1x32xf32, #tpu.memory_space<vmem>>, %arg14: memref<1x1x32xf32, #tpu.memory_space<vmem>>, %arg15: memref<1x32x64xbf16, #tpu.memory_space<vmem>>, %arg16: memref<1x1x64xf32, #tpu.memory_space<vmem>>, %arg17: memref<1x64x32xbf16, #tpu.memory_space<vmem>>, %arg18: memref<1x1x32xf32, #tpu.memory_space<vmem>>, %arg19: memref<1x5x32xf32, #tpu.memory_space<vmem>>, %arg20: memref<5x32xf32, #tpu.memory_space<vmem>>) attributes {dimension_semantics = [#tpu.dimension_semantics<parallel>, #tpu.dimension_semantics<arbitrary>], iteration_bounds = array<i64: 2, 2>, scalar_prefetch = 0 : i64, scratch_operands = 1 : i64, tpu.core_type = #tpu.core_type<tc>, window_params = [{transform_indices = @transform_0, window_bounds = array<i64: 1, 5, 32>}, {transform_indices = @transform_1, window_bounds = array<i64: 1, 1, 32>}, {transform_indices = @transform_2, window_bounds = array<i64: 1, 1, 32>}, {transform_indices = @transform_3, window_bounds = array<i64: 1, 4, 32, 8>}, {transform_indices = @transform_4, window_bounds = array<i64: 1, 4, 1, 8>}, {transform_indices = @transform_5, window_bounds = array<i64: 1, 4, 32, 8>}, {transform_indices = @transform_6, window_bounds = array<i64: 1, 4, 1, 8>}, {transform_indices = @transform_7, window_bounds = array<i64: 1, 4, 32, 8>}, {transform_indices = @transform_8, window_bounds = array<i64: 1, 4, 1, 8>}, {transform_indices = @transform_9, window_bounds = array<i64: 1, 4, 8, 32>}, {transform_indices = @transform_10, window_bounds = array<i64: 1, 1, 32>}, {transform_indices = @transform_11, window_bounds = array<i64: 1, 1, 32>}, {transform_indices = @transform_12, window_bounds = array<i64: 1, 1, 32>}, {transform_indices = @transform_13, window_bounds = array<i64: 1, 32, 64>}, {transform_indices = @transform_14, window_bounds = array<i64: 1, 1, 64>}, {transform_indices = @transform_15, window_bounds = array<i64: 1, 64, 32>}, {transform_indices = @transform_16, window_bounds = array<i64: 1, 1, 32>}, {transform_indices = @transform_17, window_bounds = array<i64: 1, 5, 32>}]} {
    %c0_i32 = arith.constant 0 : i32
    %0 = arith.cmpi eq, %arg1, %c0_i32 : i32
    %1 = arith.extui %0 : i1 to i32
    %c0_i32_0 = arith.constant 0 : i32
    %2 = arith.cmpi ne, %1, %c0_i32_0 : i32
    scf.if %2 {
      %c0_190 = arith.constant 0 : index
      %c0_191 = arith.constant 0 : index
      %c0_192 = arith.constant 0 : index
      %266 = vector.load %arg2[%c0_190, %c0_191, %c0_192] : memref<1x5x32xf32, #tpu.memory_space<vmem>>, vector<1x5x32xf32>
      %267 = vector.shape_cast %266 : vector<1x5x32xf32> to vector<5x32xf32>
      %c0_193 = arith.constant 0 : index
      %c0_194 = arith.constant 0 : index
      %268 = vector.load %arg20[%c0_193, %c0_194] : memref<5x32xf32, #tpu.memory_space<vmem>>, vector<5x32xf32>
      tpu.vector_store %arg20[%c0_193, %c0_194], %267 {strides = array<i32>} : memref<5x32xf32, #tpu.memory_space<vmem>>, vector<5x32xf32>,
    } else {
    }
    %c0 = arith.constant 0 : index
    %c0_1 = arith.constant 0 : index
    %3 = vector.load %arg20[%c0, %c0_1] : memref<5x32xf32, #tpu.memory_space<vmem>>, vector<5x32xf32>
    %c0_2 = arith.constant 0 : index
    %c0_3 = arith.constant 0 : index
    %c0_4 = arith.constant 0 : index
    %4 = vector.load %arg3[%c0_2, %c0_3, %c0_4] : memref<1x1x32xf32, #tpu.memory_space<vmem>>, vector<1x1x32xf32>
    %5 = vector.shape_cast %4 : vector<1x1x32xf32> to vector<1x32xf32>
    %c0_5 = arith.constant 0 : index
    %c0_6 = arith.constant 0 : index
    %c0_7 = arith.constant 0 : index
    %6 = vector.load %arg4[%c0_5, %c0_6, %c0_7] : memref<1x1x32xf32, #tpu.memory_space<vmem>>, vector<1x1x32xf32>
    %7 = vector.shape_cast %6 : vector<1x1x32xf32> to vector<1x32xf32>
    %cst = arith.constant dense<0.000000e+00> : vector<5xf32>
    %8 = vector.multi_reduction <add>, %3, %cst [1] : vector<5x32xf32> to vector<5xf32>
    %9 = vector.shape_cast %8 : vector<5xf32> to vector<5x1xf32>
    %cst_8 = arith.constant 3.200000e+01 : f32
    %10 = vector.broadcast %cst_8 : f32 to vector<5x1xf32>
    %11 = arith.divf %9, %10 : vector<5x1xf32>
    %12 = vector.broadcast %11 : vector<5x1xf32> to vector<5x32xf32>
    %13 = arith.subf %3, %12 : vector<5x32xf32>
    %14 = arith.mulf %13, %13 : vector<5x32xf32>
    %cst_9 = arith.constant dense<0.000000e+00> : vector<5xf32>
    %15 = vector.multi_reduction <add>, %14, %cst_9 [1] : vector<5x32xf32> to vector<5xf32>
    %16 = vector.shape_cast %15 : vector<5xf32> to vector<5x1xf32>
    %cst_10 = arith.constant 3.200000e+01 : f32
    %17 = vector.broadcast %cst_10 : f32 to vector<5x1xf32>
    %18 = arith.divf %16, %17 : vector<5x1xf32>
    %19 = vector.broadcast %11 : vector<5x1xf32> to vector<5x32xf32>
    %20 = arith.subf %3, %19 : vector<5x32xf32>
    %cst_11 = arith.constant 9.99999974E-6 : f32
    %21 = vector.broadcast %cst_11 : f32 to vector<5x1xf32>
    %22 = arith.addf %18, %21 : vector<5x1xf32>
    %23 = math.rsqrt %22 : vector<5x1xf32>
    %24 = vector.broadcast %23 : vector<5x1xf32> to vector<5x32xf32>
    %25 = arith.mulf %20, %24 : vector<5x32xf32>
    %26 = vector.broadcast %5 : vector<1x32xf32> to vector<5x32xf32>
    %27 = arith.mulf %25, %26 : vector<5x32xf32>
    %28 = vector.broadcast %7 : vector<1x32xf32> to vector<5x32xf32>
    %29 = arith.addf %27, %28 : vector<5x32xf32>
    %30 = arith.truncf %29 : vector<5x32xf32> to vector<5x32xbf16>
    %c0_12 = arith.constant 0 : index
    %c0_13 = arith.constant 0 : index
    %c0_14 = arith.constant 0 : index
    %31 = vector.load %arg12[%c0_12, %c0_13, %c0_14] : memref<1x1x32xf32, #tpu.memory_space<vmem>>, vector<1x1x32xf32>
    %32 = vector.shape_cast %31 : vector<1x1x32xf32> to vector<1x32xf32>
    %33 = vector.broadcast %32 : vector<1x32xf32> to vector<5x32xf32>
    %34 = arith.addf %3, %33 : vector<5x32xf32>
    %c0_15 = arith.constant 0 : index
    %c0_16 = arith.constant 0 : index
    %c0_17 = arith.constant 0 : index
    %c0_18 = arith.constant 0 : index
    %35 = vector.load %arg5[%c0_15, %c0_16, %c0_17, %c0_18] : memref<1x4x32x8xbf16, #tpu.memory_space<vmem>>, vector<1x1x32x8xbf16>
    %36 = vector.shape_cast %35 : vector<1x1x32x8xbf16> to vector<32x8xbf16>
    %cst_19 = arith.constant dense<0.000000e+00> : vector<5x8xf32>
    %37 = tpu.matmul %30, %36, %cst_19 {dimension_numbers = #tpu.dot_dimension_numbers<[1], [0], [0], [1], [0, 0, 1, 1], [], []>} : vector<5x32xbf16>, vector<32x8xbf16>, vector<5x8xf32> -> vector<5x8xf32>
    %c0_20 = arith.constant 0 : index
    %c0_21 = arith.constant 0 : index
    %c0_22 = arith.constant 0 : index
    %c0_23 = arith.constant 0 : index
    %38 = vector.load %arg6[%c0_20, %c0_21, %c0_22, %c0_23] : memref<1x4x1x8xf32, #tpu.memory_space<vmem>>, vector<1x1x1x8xf32>
    %39 = vector.shape_cast %38 : vector<1x1x1x8xf32> to vector<1x8xf32>
    %40 = vector.broadcast %39 : vector<1x8xf32> to vector<5x8xf32>
    %41 = arith.addf %37, %40 : vector<5x8xf32>
    %c0_24 = arith.constant 0 : index
    %c0_25 = arith.constant 0 : index
    %c0_26 = arith.constant 0 : index
    %c0_27 = arith.constant 0 : index
    %42 = vector.load %arg7[%c0_24, %c0_25, %c0_26, %c0_27] : memref<1x4x32x8xbf16, #tpu.memory_space<vmem>>, vector<1x1x32x8xbf16>
    %43 = vector.shape_cast %42 : vector<1x1x32x8xbf16> to vector<32x8xbf16>
    %cst_28 = arith.constant dense<0.000000e+00> : vector<5x8xf32>
    %44 = tpu.matmul %30, %43, %cst_28 {dimension_numbers = #tpu.dot_dimension_numbers<[1], [0], [0], [1], [0, 0, 1, 1], [], []>} : vector<5x32xbf16>, vector<32x8xbf16>, vector<5x8xf32> -> vector<5x8xf32>
    %c0_29 = arith.constant 0 : index
    %c0_30 = arith.constant 0 : index
    %c0_31 = arith.constant 0 : index
    %c0_32 = arith.constant 0 : index
    %45 = vector.load %arg8[%c0_29, %c0_30, %c0_31, %c0_32] : memref<1x4x1x8xf32, #tpu.memory_space<vmem>>, vector<1x1x1x8xf32>
    %46 = vector.shape_cast %45 : vector<1x1x1x8xf32> to vector<1x8xf32>
    %47 = vector.broadcast %46 : vector<1x8xf32> to vector<5x8xf32>
    %48 = arith.addf %44, %47 : vector<5x8xf32>
    %c0_33 = arith.constant 0 : index
    %c0_34 = arith.constant 0 : index
    %c0_35 = arith.constant 0 : index
    %c0_36 = arith.constant 0 : index
    %49 = vector.load %arg9[%c0_33, %c0_34, %c0_35, %c0_36] : memref<1x4x32x8xbf16, #tpu.memory_space<vmem>>, vector<1x1x32x8xbf16>
    %50 = vector.shape_cast %49 : vector<1x1x32x8xbf16> to vector<32x8xbf16>
    %cst_37 = arith.constant dense<0.000000e+00> : vector<5x8xf32>
    %51 = tpu.matmul %30, %50, %cst_37 {dimension_numbers = #tpu.dot_dimension_numbers<[1], [0], [0], [1], [0, 0, 1, 1], [], []>} : vector<5x32xbf16>, vector<32x8xbf16>, vector<5x8xf32> -> vector<5x8xf32>
    %c0_38 = arith.constant 0 : index
    %c0_39 = arith.constant 0 : index
    %c0_40 = arith.constant 0 : index
    %c0_41 = arith.constant 0 : index
    %52 = vector.load %arg10[%c0_38, %c0_39, %c0_40, %c0_41] : memref<1x4x1x8xf32, #tpu.memory_space<vmem>>, vector<1x1x1x8xf32>
    %53 = vector.shape_cast %52 : vector<1x1x1x8xf32> to vector<1x8xf32>
    %54 = vector.broadcast %53 : vector<1x8xf32> to vector<5x8xf32>
    %55 = arith.addf %51, %54 : vector<5x8xf32>
    %cst_42 = arith.constant 0.353553385 : f32
    %56 = vector.broadcast %cst_42 : f32 to vector<5x8xf32>
    %57 = arith.mulf %41, %56 : vector<5x8xf32>
    %58 = arith.truncf %57 : vector<5x8xf32> to vector<5x8xbf16>
    %59 = arith.truncf %48 : vector<5x8xf32> to vector<5x8xbf16>
    %cst_43 = arith.constant dense<0.000000e+00> : vector<5x5xf32>
    %60 = tpu.matmul %58, %59, %cst_43 {dimension_numbers = #tpu.dot_dimension_numbers<[1], [1], [0], [0], [0, 0, 1, 0], [], []>} : vector<5x8xbf16>, vector<5x8xbf16>, vector<5x5xf32> -> vector<5x5xf32>
    %cst_44 = arith.constant dense<0xFF800000> : vector<5xf32>
    %61 = vector.multi_reduction <maximumf>, %60, %cst_44 [1] : vector<5x5xf32> to vector<5xf32>
    %62 = vector.shape_cast %61 : vector<5xf32> to vector<5x1xf32>
    %63 = vector.broadcast %62 : vector<5x1xf32> to vector<5x5xf32>
    %64 = arith.subf %60, %63 : vector<5x5xf32>
    %65 = math.exp %64 : vector<5x5xf32>
    %cst_45 = arith.constant dense<0.000000e+00> : vector<5xf32>
    %66 = vector.multi_reduction <add>, %65, %cst_45 [1] : vector<5x5xf32> to vector<5xf32>
    %67 = vector.shape_cast %66 : vector<5xf32> to vector<5x1xf32>
    %68 = tpu.reciprocal %67 {approx = true} : vector<5x1xf32> -> vector<5x1xf32>
    %69 = vector.broadcast %68 : vector<5x1xf32> to vector<5x5xf32>
    %70 = arith.mulf %65, %69 : vector<5x5xf32>
    %71 = arith.truncf %70 : vector<5x5xf32> to vector<5x5xbf16>
    %72 = arith.truncf %55 : vector<5x8xf32> to vector<5x8xbf16>
    %cst_46 = arith.constant dense<0.000000e+00> : vector<5x8xf32>
    %73 = tpu.matmul %71, %72, %cst_46 {dimension_numbers = #tpu.dot_dimension_numbers<[1], [0], [0], [1], [0, 0, 1, 1], [], []>} : vector<5x5xbf16>, vector<5x8xbf16>, vector<5x8xf32> -> vector<5x8xf32>
    %74 = arith.truncf %73 : vector<5x8xf32> to vector<5x8xbf16>
    %c0_47 = arith.constant 0 : index
    %c0_48 = arith.constant 0 : index
    %c0_49 = arith.constant 0 : index
    %c0_50 = arith.constant 0 : index
    %75 = vector.load %arg11[%c0_47, %c0_48, %c0_49, %c0_50] : memref<1x4x8x32xbf16, #tpu.memory_space<vmem>>, vector<1x1x8x32xbf16>
    %76 = vector.shape_cast %75 : vector<1x1x8x32xbf16> to vector<8x32xbf16>
    %cst_51 = arith.constant dense<0.000000e+00> : vector<5x32xf32>
    %77 = tpu.matmul %74, %76, %cst_51 {dimension_numbers = #tpu.dot_dimension_numbers<[1], [0], [0], [1], [0, 0, 1, 1], [], []>} : vector<5x8xbf16>, vector<8x32xbf16>, vector<5x32xf32> -> vector<5x32xf32>
    %78 = arith.addf %34, %77 : vector<5x32xf32>
    %c0_52 = arith.constant 0 : index
    %c1 = arith.constant 1 : index
    %c0_53 = arith.constant 0 : index
    %c0_54 = arith.constant 0 : index
    %79 = vector.load %arg5[%c0_52, %c1, %c0_53, %c0_54] : memref<1x4x32x8xbf16, #tpu.memory_space<vmem>>, vector<1x1x32x8xbf16>
    %80 = vector.shape_cast %79 : vector<1x1x32x8xbf16> to vector<32x8xbf16>
    %cst_55 = arith.constant dense<0.000000e+00> : vector<5x8xf32>
    %81 = tpu.matmul %30, %80, %cst_55 {dimension_numbers = #tpu.dot_dimension_numbers<[1], [0], [0], [1], [0, 0, 1, 1], [], []>} : vector<5x32xbf16>, vector<32x8xbf16>, vector<5x8xf32> -> vector<5x8xf32>
    %c0_56 = arith.constant 0 : index
    %c1_57 = arith.constant 1 : index
    %c0_58 = arith.constant 0 : index
    %c0_59 = arith.constant 0 : index
    %82 = vector.load %arg6[%c0_56, %c1_57, %c0_58, %c0_59] : memref<1x4x1x8xf32, #tpu.memory_space<vmem>>, vector<1x1x1x8xf32>
    %83 = vector.shape_cast %82 : vector<1x1x1x8xf32> to vector<1x8xf32>
    %84 = vector.broadcast %83 : vector<1x8xf32> to vector<5x8xf32>
    %85 = arith.addf %81, %84 : vector<5x8xf32>
    %c0_60 = arith.constant 0 : index
    %c1_61 = arith.constant 1 : index
    %c0_62 = arith.constant 0 : index
    %c0_63 = arith.constant 0 : index
    %86 = vector.load %arg7[%c0_60, %c1_61, %c0_62, %c0_63] : memref<1x4x32x8xbf16, #tpu.memory_space<vmem>>, vector<1x1x32x8xbf16>
    %87 = vector.shape_cast %86 : vector<1x1x32x8xbf16> to vector<32x8xbf16>
    %cst_64 = arith.constant dense<0.000000e+00> : vector<5x8xf32>
    %88 = tpu.matmul %30, %87, %cst_64 {dimension_numbers = #tpu.dot_dimension_numbers<[1], [0], [0], [1], [0, 0, 1, 1], [], []>} : vector<5x32xbf16>, vector<32x8xbf16>, vector<5x8xf32> -> vector<5x8xf32>
    %c0_65 = arith.constant 0 : index
    %c1_66 = arith.constant 1 : index
    %c0_67 = arith.constant 0 : index
    %c0_68 = arith.constant 0 : index
    %89 = vector.load %arg8[%c0_65, %c1_66, %c0_67, %c0_68] : memref<1x4x1x8xf32, #tpu.memory_space<vmem>>, vector<1x1x1x8xf32>
    %90 = vector.shape_cast %89 : vector<1x1x1x8xf32> to vector<1x8xf32>
    %91 = vector.broadcast %90 : vector<1x8xf32> to vector<5x8xf32>
    %92 = arith.addf %88, %91 : vector<5x8xf32>
    %c0_69 = arith.constant 0 : index
    %c1_70 = arith.constant 1 : index
    %c0_71 = arith.constant 0 : index
    %c0_72 = arith.constant 0 : index
    %93 = vector.load %arg9[%c0_69, %c1_70, %c0_71, %c0_72] : memref<1x4x32x8xbf16, #tpu.memory_space<vmem>>, vector<1x1x32x8xbf16>
    %94 = vector.shape_cast %93 : vector<1x1x32x8xbf16> to vector<32x8xbf16>
    %cst_73 = arith.constant dense<0.000000e+00> : vector<5x8xf32>
    %95 = tpu.matmul %30, %94, %cst_73 {dimension_numbers = #tpu.dot_dimension_numbers<[1], [0], [0], [1], [0, 0, 1, 1], [], []>} : vector<5x32xbf16>, vector<32x8xbf16>, vector<5x8xf32> -> vector<5x8xf32>
    %c0_74 = arith.constant 0 : index
    %c1_75 = arith.constant 1 : index
    %c0_76 = arith.constant 0 : index
    %c0_77 = arith.constant 0 : index
    %96 = vector.load %arg10[%c0_74, %c1_75, %c0_76, %c0_77] : memref<1x4x1x8xf32, #tpu.memory_space<vmem>>, vector<1x1x1x8xf32>
    %97 = vector.shape_cast %96 : vector<1x1x1x8xf32> to vector<1x8xf32>
    %98 = vector.broadcast %97 : vector<1x8xf32> to vector<5x8xf32>
    %99 = arith.addf %95, %98 : vector<5x8xf32>
    %cst_78 = arith.constant 0.353553385 : f32
    %100 = vector.broadcast %cst_78 : f32 to vector<5x8xf32>
    %101 = arith.mulf %85, %100 : vector<5x8xf32>
    %102 = arith.truncf %101 : vector<5x8xf32> to vector<5x8xbf16>
    %103 = arith.truncf %92 : vector<5x8xf32> to vector<5x8xbf16>
    %cst_79 = arith.constant dense<0.000000e+00> : vector<5x5xf32>
    %104 = tpu.matmul %102, %103, %cst_79 {dimension_numbers = #tpu.dot_dimension_numbers<[1], [1], [0], [0], [0, 0, 1, 0], [], []>} : vector<5x8xbf16>, vector<5x8xbf16>, vector<5x5xf32> -> vector<5x5xf32>
    %cst_80 = arith.constant dense<0xFF800000> : vector<5xf32>
    %105 = vector.multi_reduction <maximumf>, %104, %cst_80 [1] : vector<5x5xf32> to vector<5xf32>
    %106 = vector.shape_cast %105 : vector<5xf32> to vector<5x1xf32>
    %107 = vector.broadcast %106 : vector<5x1xf32> to vector<5x5xf32>
    %108 = arith.subf %104, %107 : vector<5x5xf32>
    %109 = math.exp %108 : vector<5x5xf32>
    %cst_81 = arith.constant dense<0.000000e+00> : vector<5xf32>
    %110 = vector.multi_reduction <add>, %109, %cst_81 [1] : vector<5x5xf32> to vector<5xf32>
    %111 = vector.shape_cast %110 : vector<5xf32> to vector<5x1xf32>
    %112 = tpu.reciprocal %111 {approx = true} : vector<5x1xf32> -> vector<5x1xf32>
    %113 = vector.broadcast %112 : vector<5x1xf32> to vector<5x5xf32>
    %114 = arith.mulf %109, %113 : vector<5x5xf32>
    %115 = arith.truncf %114 : vector<5x5xf32> to vector<5x5xbf16>
    %116 = arith.truncf %99 : vector<5x8xf32> to vector<5x8xbf16>
    %cst_82 = arith.constant dense<0.000000e+00> : vector<5x8xf32>
    %117 = tpu.matmul %115, %116, %cst_82 {dimension_numbers = #tpu.dot_dimension_numbers<[1], [0], [0], [1], [0, 0, 1, 1], [], []>} : vector<5x5xbf16>, vector<5x8xbf16>, vector<5x8xf32> -> vector<5x8xf32>
    %118 = arith.truncf %117 : vector<5x8xf32> to vector<5x8xbf16>
    %c0_83 = arith.constant 0 : index
    %c1_84 = arith.constant 1 : index
    %c0_85 = arith.constant 0 : index
    %c0_86 = arith.constant 0 : index
    %119 = vector.load %arg11[%c0_83, %c1_84, %c0_85, %c0_86] : memref<1x4x8x32xbf16, #tpu.memory_space<vmem>>, vector<1x1x8x32xbf16>
    %120 = vector.shape_cast %119 : vector<1x1x8x32xbf16> to vector<8x32xbf16>
    %cst_87 = arith.constant dense<0.000000e+00> : vector<5x32xf32>
    %121 = tpu.matmul %118, %120, %cst_87 {dimension_numbers = #tpu.dot_dimension_numbers<[1], [0], [0], [1], [0, 0, 1, 1], [], []>} : vector<5x8xbf16>, vector<8x32xbf16>, vector<5x32xf32> -> vector<5x32xf32>
    %122 = arith.addf %78, %121 : vector<5x32xf32>
    %c0_88 = arith.constant 0 : index
    %c2 = arith.constant 2 : index
    %c0_89 = arith.constant 0 : index
    %c0_90 = arith.constant 0 : index
    %123 = vector.load %arg5[%c0_88, %c2, %c0_89, %c0_90] : memref<1x4x32x8xbf16, #tpu.memory_space<vmem>>, vector<1x1x32x8xbf16>
    %124 = vector.shape_cast %123 : vector<1x1x32x8xbf16> to vector<32x8xbf16>
    %cst_91 = arith.constant dense<0.000000e+00> : vector<5x8xf32>
    %125 = tpu.matmul %30, %124, %cst_91 {dimension_numbers = #tpu.dot_dimension_numbers<[1], [0], [0], [1], [0, 0, 1, 1], [], []>} : vector<5x32xbf16>, vector<32x8xbf16>, vector<5x8xf32> -> vector<5x8xf32>
    %c0_92 = arith.constant 0 : index
    %c2_93 = arith.constant 2 : index
    %c0_94 = arith.constant 0 : index
    %c0_95 = arith.constant 0 : index
    %126 = vector.load %arg6[%c0_92, %c2_93, %c0_94, %c0_95] : memref<1x4x1x8xf32, #tpu.memory_space<vmem>>, vector<1x1x1x8xf32>
    %127 = vector.shape_cast %126 : vector<1x1x1x8xf32> to vector<1x8xf32>
    %128 = vector.broadcast %127 : vector<1x8xf32> to vector<5x8xf32>
    %129 = arith.addf %125, %128 : vector<5x8xf32>
    %c0_96 = arith.constant 0 : index
    %c2_97 = arith.constant 2 : index
    %c0_98 = arith.constant 0 : index
    %c0_99 = arith.constant 0 : index
    %130 = vector.load %arg7[%c0_96, %c2_97, %c0_98, %c0_99] : memref<1x4x32x8xbf16, #tpu.memory_space<vmem>>, vector<1x1x32x8xbf16>
    %131 = vector.shape_cast %130 : vector<1x1x32x8xbf16> to vector<32x8xbf16>
    %cst_100 = arith.constant dense<0.000000e+00> : vector<5x8xf32>
    %132 = tpu.matmul %30, %131, %cst_100 {dimension_numbers = #tpu.dot_dimension_numbers<[1], [0], [0], [1], [0, 0, 1, 1], [], []>} : vector<5x32xbf16>, vector<32x8xbf16>, vector<5x8xf32> -> vector<5x8xf32>
    %c0_101 = arith.constant 0 : index
    %c2_102 = arith.constant 2 : index
    %c0_103 = arith.constant 0 : index
    %c0_104 = arith.constant 0 : index
    %133 = vector.load %arg8[%c0_101, %c2_102, %c0_103, %c0_104] : memref<1x4x1x8xf32, #tpu.memory_space<vmem>>, vector<1x1x1x8xf32>
    %134 = vector.shape_cast %133 : vector<1x1x1x8xf32> to vector<1x8xf32>
    %135 = vector.broadcast %134 : vector<1x8xf32> to vector<5x8xf32>
    %136 = arith.addf %132, %135 : vector<5x8xf32>
    %c0_105 = arith.constant 0 : index
    %c2_106 = arith.constant 2 : index
    %c0_107 = arith.constant 0 : index
    %c0_108 = arith.constant 0 : index
    %137 = vector.load %arg9[%c0_105, %c2_106, %c0_107, %c0_108] : memref<1x4x32x8xbf16, #tpu.memory_space<vmem>>, vector<1x1x32x8xbf16>
    %138 = vector.shape_cast %137 : vector<1x1x32x8xbf16> to vector<32x8xbf16>
    %cst_109 = arith.constant dense<0.000000e+00> : vector<5x8xf32>
    %139 = tpu.matmul %30, %138, %cst_109 {dimension_numbers = #tpu.dot_dimension_numbers<[1], [0], [0], [1], [0, 0, 1, 1], [], []>} : vector<5x32xbf16>, vector<32x8xbf16>, vector<5x8xf32> -> vector<5x8xf32>
    %c0_110 = arith.constant 0 : index
    %c2_111 = arith.constant 2 : index
    %c0_112 = arith.constant 0 : index
    %c0_113 = arith.constant 0 : index
    %140 = vector.load %arg10[%c0_110, %c2_111, %c0_112, %c0_113] : memref<1x4x1x8xf32, #tpu.memory_space<vmem>>, vector<1x1x1x8xf32>
    %141 = vector.shape_cast %140 : vector<1x1x1x8xf32> to vector<1x8xf32>
    %142 = vector.broadcast %141 : vector<1x8xf32> to vector<5x8xf32>
    %143 = arith.addf %139, %142 : vector<5x8xf32>
    %cst_114 = arith.constant 0.353553385 : f32
    %144 = vector.broadcast %cst_114 : f32 to vector<5x8xf32>
    %145 = arith.mulf %129, %144 : vector<5x8xf32>
    %146 = arith.truncf %145 : vector<5x8xf32> to vector<5x8xbf16>
    %147 = arith.truncf %136 : vector<5x8xf32> to vector<5x8xbf16>
    %cst_115 = arith.constant dense<0.000000e+00> : vector<5x5xf32>
    %148 = tpu.matmul %146, %147, %cst_115 {dimension_numbers = #tpu.dot_dimension_numbers<[1], [1], [0], [0], [0, 0, 1, 0], [], []>} : vector<5x8xbf16>, vector<5x8xbf16>, vector<5x5xf32> -> vector<5x5xf32>
    %cst_116 = arith.constant dense<0xFF800000> : vector<5xf32>
    %149 = vector.multi_reduction <maximumf>, %148, %cst_116 [1] : vector<5x5xf32> to vector<5xf32>
    %150 = vector.shape_cast %149 : vector<5xf32> to vector<5x1xf32>
    %151 = vector.broadcast %150 : vector<5x1xf32> to vector<5x5xf32>
    %152 = arith.subf %148, %151 : vector<5x5xf32>
    %153 = math.exp %152 : vector<5x5xf32>
    %cst_117 = arith.constant dense<0.000000e+00> : vector<5xf32>
    %154 = vector.multi_reduction <add>, %153, %cst_117 [1] : vector<5x5xf32> to vector<5xf32>
    %155 = vector.shape_cast %154 : vector<5xf32> to vector<5x1xf32>
    %156 = tpu.reciprocal %155 {approx = true} : vector<5x1xf32> -> vector<5x1xf32>
    %157 = vector.broadcast %156 : vector<5x1xf32> to vector<5x5xf32>
    %158 = arith.mulf %153, %157 : vector<5x5xf32>
    %159 = arith.truncf %158 : vector<5x5xf32> to vector<5x5xbf16>
    %160 = arith.truncf %143 : vector<5x8xf32> to vector<5x8xbf16>
    %cst_118 = arith.constant dense<0.000000e+00> : vector<5x8xf32>
    %161 = tpu.matmul %159, %160, %cst_118 {dimension_numbers = #tpu.dot_dimension_numbers<[1], [0], [0], [1], [0, 0, 1, 1], [], []>} : vector<5x5xbf16>, vector<5x8xbf16>, vector<5x8xf32> -> vector<5x8xf32>
    %162 = arith.truncf %161 : vector<5x8xf32> to vector<5x8xbf16>
    %c0_119 = arith.constant 0 : index
    %c2_120 = arith.constant 2 : index
    %c0_121 = arith.constant 0 : index
    %c0_122 = arith.constant 0 : index
    %163 = vector.load %arg11[%c0_119, %c2_120, %c0_121, %c0_122] : memref<1x4x8x32xbf16, #tpu.memory_space<vmem>>, vector<1x1x8x32xbf16>
    %164 = vector.shape_cast %163 : vector<1x1x8x32xbf16> to vector<8x32xbf16>
    %cst_123 = arith.constant dense<0.000000e+00> : vector<5x32xf32>
    %165 = tpu.matmul %162, %164, %cst_123 {dimension_numbers = #tpu.dot_dimension_numbers<[1], [0], [0], [1], [0, 0, 1, 1], [], []>} : vector<5x8xbf16>, vector<8x32xbf16>, vector<5x32xf32> -> vector<5x32xf32>
    %166 = arith.addf %122, %165 : vector<5x32xf32>
    %c0_124 = arith.constant 0 : index
    %c3 = arith.constant 3 : index
    %c0_125 = arith.constant 0 : index
    %c0_126 = arith.constant 0 : index
    %167 = vector.load %arg5[%c0_124, %c3, %c0_125, %c0_126] : memref<1x4x32x8xbf16, #tpu.memory_space<vmem>>, vector<1x1x32x8xbf16>
    %168 = vector.shape_cast %167 : vector<1x1x32x8xbf16> to vector<32x8xbf16>
    %cst_127 = arith.constant dense<0.000000e+00> : vector<5x8xf32>
    %169 = tpu.matmul %30, %168, %cst_127 {dimension_numbers = #tpu.dot_dimension_numbers<[1], [0], [0], [1], [0, 0, 1, 1], [], []>} : vector<5x32xbf16>, vector<32x8xbf16>, vector<5x8xf32> -> vector<5x8xf32>
    %c0_128 = arith.constant 0 : index
    %c3_129 = arith.constant 3 : index
    %c0_130 = arith.constant 0 : index
    %c0_131 = arith.constant 0 : index
    %170 = vector.load %arg6[%c0_128, %c3_129, %c0_130, %c0_131] : memref<1x4x1x8xf32, #tpu.memory_space<vmem>>, vector<1x1x1x8xf32>
    %171 = vector.shape_cast %170 : vector<1x1x1x8xf32> to vector<1x8xf32>
    %172 = vector.broadcast %171 : vector<1x8xf32> to vector<5x8xf32>
    %173 = arith.addf %169, %172 : vector<5x8xf32>
    %c0_132 = arith.constant 0 : index
    %c3_133 = arith.constant 3 : index
    %c0_134 = arith.constant 0 : index
    %c0_135 = arith.constant 0 : index
    %174 = vector.load %arg7[%c0_132, %c3_133, %c0_134, %c0_135] : memref<1x4x32x8xbf16, #tpu.memory_space<vmem>>, vector<1x1x32x8xbf16>
    %175 = vector.shape_cast %174 : vector<1x1x32x8xbf16> to vector<32x8xbf16>
    %cst_136 = arith.constant dense<0.000000e+00> : vector<5x8xf32>
    %176 = tpu.matmul %30, %175, %cst_136 {dimension_numbers = #tpu.dot_dimension_numbers<[1], [0], [0], [1], [0, 0, 1, 1], [], []>} : vector<5x32xbf16>, vector<32x8xbf16>, vector<5x8xf32> -> vector<5x8xf32>
    %c0_137 = arith.constant 0 : index
    %c3_138 = arith.constant 3 : index
    %c0_139 = arith.constant 0 : index
    %c0_140 = arith.constant 0 : index
    %177 = vector.load %arg8[%c0_137, %c3_138, %c0_139, %c0_140] : memref<1x4x1x8xf32, #tpu.memory_space<vmem>>, vector<1x1x1x8xf32>
    %178 = vector.shape_cast %177 : vector<1x1x1x8xf32> to vector<1x8xf32>
    %179 = vector.broadcast %178 : vector<1x8xf32> to vector<5x8xf32>
    %180 = arith.addf %176, %179 : vector<5x8xf32>
    %c0_141 = arith.constant 0 : index
    %c3_142 = arith.constant 3 : index
    %c0_143 = arith.constant 0 : index
    %c0_144 = arith.constant 0 : index
    %181 = vector.load %arg9[%c0_141, %c3_142, %c0_143, %c0_144] : memref<1x4x32x8xbf16, #tpu.memory_space<vmem>>, vector<1x1x32x8xbf16>
    %182 = vector.shape_cast %181 : vector<1x1x32x8xbf16> to vector<32x8xbf16>
    %cst_145 = arith.constant dense<0.000000e+00> : vector<5x8xf32>
    %183 = tpu.matmul %30, %182, %cst_145 {dimension_numbers = #tpu.dot_dimension_numbers<[1], [0], [0], [1], [0, 0, 1, 1], [], []>} : vector<5x32xbf16>, vector<32x8xbf16>, vector<5x8xf32> -> vector<5x8xf32>
    %c0_146 = arith.constant 0 : index
    %c3_147 = arith.constant 3 : index
    %c0_148 = arith.constant 0 : index
    %c0_149 = arith.constant 0 : index
    %184 = vector.load %arg10[%c0_146, %c3_147, %c0_148, %c0_149] : memref<1x4x1x8xf32, #tpu.memory_space<vmem>>, vector<1x1x1x8xf32>
    %185 = vector.shape_cast %184 : vector<1x1x1x8xf32> to vector<1x8xf32>
    %186 = vector.broadcast %185 : vector<1x8xf32> to vector<5x8xf32>
    %187 = arith.addf %183, %186 : vector<5x8xf32>
    %cst_150 = arith.constant 0.353553385 : f32
    %188 = vector.broadcast %cst_150 : f32 to vector<5x8xf32>
    %189 = arith.mulf %173, %188 : vector<5x8xf32>
    %190 = arith.truncf %189 : vector<5x8xf32> to vector<5x8xbf16>
    %191 = arith.truncf %180 : vector<5x8xf32> to vector<5x8xbf16>
    %cst_151 = arith.constant dense<0.000000e+00> : vector<5x5xf32>
    %192 = tpu.matmul %190, %191, %cst_151 {dimension_numbers = #tpu.dot_dimension_numbers<[1], [1], [0], [0], [0, 0, 1, 0], [], []>} : vector<5x8xbf16>, vector<5x8xbf16>, vector<5x5xf32> -> vector<5x5xf32>
    %cst_152 = arith.constant dense<0xFF800000> : vector<5xf32>
    %193 = vector.multi_reduction <maximumf>, %192, %cst_152 [1] : vector<5x5xf32> to vector<5xf32>
    %194 = vector.shape_cast %193 : vector<5xf32> to vector<5x1xf32>
    %195 = vector.broadcast %194 : vector<5x1xf32> to vector<5x5xf32>
    %196 = arith.subf %192, %195 : vector<5x5xf32>
    %197 = math.exp %196 : vector<5x5xf32>
    %cst_153 = arith.constant dense<0.000000e+00> : vector<5xf32>
    %198 = vector.multi_reduction <add>, %197, %cst_153 [1] : vector<5x5xf32> to vector<5xf32>
    %199 = vector.shape_cast %198 : vector<5xf32> to vector<5x1xf32>
    %200 = tpu.reciprocal %199 {approx = true} : vector<5x1xf32> -> vector<5x1xf32>
    %201 = vector.broadcast %200 : vector<5x1xf32> to vector<5x5xf32>
    %202 = arith.mulf %197, %201 : vector<5x5xf32>
    %203 = arith.truncf %202 : vector<5x5xf32> to vector<5x5xbf16>
    %204 = arith.truncf %187 : vector<5x8xf32> to vector<5x8xbf16>
    %cst_154 = arith.constant dense<0.000000e+00> : vector<5x8xf32>
    %205 = tpu.matmul %203, %204, %cst_154 {dimension_numbers = #tpu.dot_dimension_numbers<[1], [0], [0], [1], [0, 0, 1, 1], [], []>} : vector<5x5xbf16>, vector<5x8xbf16>, vector<5x8xf32> -> vector<5x8xf32>
    %206 = arith.truncf %205 : vector<5x8xf32> to vector<5x8xbf16>
    %c0_155 = arith.constant 0 : index
    %c3_156 = arith.constant 3 : index
    %c0_157 = arith.constant 0 : index
    %c0_158 = arith.constant 0 : index
    %207 = vector.load %arg11[%c0_155, %c3_156, %c0_157, %c0_158] : memref<1x4x8x32xbf16, #tpu.memory_space<vmem>>, vector<1x1x8x32xbf16>
    %208 = vector.shape_cast %207 : vector<1x1x8x32xbf16> to vector<8x32xbf16>
    %cst_159 = arith.constant dense<0.000000e+00> : vector<5x32xf32>
    %209 = tpu.matmul %206, %208, %cst_159 {dimension_numbers = #tpu.dot_dimension_numbers<[1], [0], [0], [1], [0, 0, 1, 1], [], []>} : vector<5x8xbf16>, vector<8x32xbf16>, vector<5x32xf32> -> vector<5x32xf32>
    %210 = arith.addf %166, %209 : vector<5x32xf32>
    %c0_160 = arith.constant 0 : index
    %c0_161 = arith.constant 0 : index
    %c0_162 = arith.constant 0 : index
    %211 = vector.load %arg13[%c0_160, %c0_161, %c0_162] : memref<1x1x32xf32, #tpu.memory_space<vmem>>, vector<1x1x32xf32>
    %212 = vector.shape_cast %211 : vector<1x1x32xf32> to vector<1x32xf32>
    %c0_163 = arith.constant 0 : index
    %c0_164 = arith.constant 0 : index
    %c0_165 = arith.constant 0 : index
    %213 = vector.load %arg14[%c0_163, %c0_164, %c0_165] : memref<1x1x32xf32, #tpu.memory_space<vmem>>, vector<1x1x32xf32>
    %214 = vector.shape_cast %213 : vector<1x1x32xf32> to vector<1x32xf32>
    %cst_166 = arith.constant dense<0.000000e+00> : vector<5xf32>
    %215 = vector.multi_reduction <add>, %210, %cst_166 [1] : vector<5x32xf32> to vector<5xf32>
    %216 = vector.shape_cast %215 : vector<5xf32> to vector<5x1xf32>
    %cst_167 = arith.constant 3.200000e+01 : f32
    %217 = vector.broadcast %cst_167 : f32 to vector<5x1xf32>
    %218 = arith.divf %216, %217 : vector<5x1xf32>
    %219 = vector.broadcast %218 : vector<5x1xf32> to vector<5x32xf32>
    %220 = arith.subf %210, %219 : vector<5x32xf32>
    %221 = arith.mulf %220, %220 : vector<5x32xf32>
    %cst_168 = arith.constant dense<0.000000e+00> : vector<5xf32>
    %222 = vector.multi_reduction <add>, %221, %cst_168 [1] : vector<5x32xf32> to vector<5xf32>
    %223 = vector.shape_cast %222 : vector<5xf32> to vector<5x1xf32>
    %cst_169 = arith.constant 3.200000e+01 : f32
    %224 = vector.broadcast %cst_169 : f32 to vector<5x1xf32>
    %225 = arith.divf %223, %224 : vector<5x1xf32>
    %226 = vector.broadcast %218 : vector<5x1xf32> to vector<5x32xf32>
    %227 = arith.subf %210, %226 : vector<5x32xf32>
    %cst_170 = arith.constant 9.99999974E-6 : f32
    %228 = vector.broadcast %cst_170 : f32 to vector<5x1xf32>
    %229 = arith.addf %225, %228 : vector<5x1xf32>
    %230 = math.rsqrt %229 : vector<5x1xf32>
    %231 = vector.broadcast %230 : vector<5x1xf32> to vector<5x32xf32>
    %232 = arith.mulf %227, %231 : vector<5x32xf32>
    %233 = vector.broadcast %212 : vector<1x32xf32> to vector<5x32xf32>
    %234 = arith.mulf %232, %233 : vector<5x32xf32>
    %235 = vector.broadcast %214 : vector<1x32xf32> to vector<5x32xf32>
    %236 = arith.addf %234, %235 : vector<5x32xf32>
    %237 = arith.truncf %236 : vector<5x32xf32> to vector<5x32xbf16>
    %c0_171 = arith.constant 0 : index
    %c0_172 = arith.constant 0 : index
    %c0_173 = arith.constant 0 : index
    %238 = vector.load %arg15[%c0_171, %c0_172, %c0_173] : memref<1x32x64xbf16, #tpu.memory_space<vmem>>, vector<1x32x64xbf16>
    %239 = vector.shape_cast %238 : vector<1x32x64xbf16> to vector<32x64xbf16>
    %cst_174 = arith.constant dense<0.000000e+00> : vector<5x64xf32>
    %240 = tpu.matmul %237, %239, %cst_174 {dimension_numbers = #tpu.dot_dimension_numbers<[1], [0], [0], [1], [0, 0, 1, 1], [], []>} : vector<5x32xbf16>, vector<32x64xbf16>, vector<5x64xf32> -> vector<5x64xf32>
    %c0_175 = arith.constant 0 : index
    %c0_176 = arith.constant 0 : index
    %c0_177 = arith.constant 0 : index
    %241 = vector.load %arg16[%c0_175, %c0_176, %c0_177] : memref<1x1x64xf32, #tpu.memory_space<vmem>>, vector<1x1x64xf32>
    %242 = vector.shape_cast %241 : vector<1x1x64xf32> to vector<1x64xf32>
    %243 = vector.broadcast %242 : vector<1x64xf32> to vector<5x64xf32>
    %244 = arith.addf %240, %243 : vector<5x64xf32>
    %cst_178 = arith.constant 1.702000e+00 : f32
    %245 = vector.broadcast %cst_178 : f32 to vector<5x64xf32>
    %246 = arith.mulf %245, %244 : vector<5x64xf32>
    %247 = arith.negf %246 : vector<5x64xf32>
    %248 = math.exp %247 : vector<5x64xf32>
    %cst_179 = arith.constant 1.000000e+00 : f32
    %249 = vector.broadcast %cst_179 : f32 to vector<5x64xf32>
    %250 = arith.addf %249, %248 : vector<5x64xf32>
    %251 = arith.divf %249, %250 : vector<5x64xf32>
    %252 = arith.mulf %244, %251 : vector<5x64xf32>
    %253 = arith.truncf %252 : vector<5x64xf32> to vector<5x64xbf16>
    %c0_180 = arith.constant 0 : index
    %c0_181 = arith.constant 0 : index
    %c0_182 = arith.constant 0 : index
    %254 = vector.load %arg17[%c0_180, %c0_181, %c0_182] : memref<1x64x32xbf16, #tpu.memory_space<vmem>>, vector<1x64x32xbf16>
    %255 = vector.shape_cast %254 : vector<1x64x32xbf16> to vector<64x32xbf16>
    %cst_183 = arith.constant dense<0.000000e+00> : vector<5x32xf32>
    %256 = tpu.matmul %253, %255, %cst_183 {dimension_numbers = #tpu.dot_dimension_numbers<[1], [0], [0], [1], [0, 0, 1, 1], [], []>} : vector<5x64xbf16>, vector<64x32xbf16>, vector<5x32xf32> -> vector<5x32xf32>
    %257 = arith.addf %210, %256 : vector<5x32xf32>
    %c0_184 = arith.constant 0 : index
    %c0_185 = arith.constant 0 : index
    %c0_186 = arith.constant 0 : index
    %258 = vector.load %arg18[%c0_184, %c0_185, %c0_186] : memref<1x1x32xf32, #tpu.memory_space<vmem>>, vector<1x1x32xf32>
    %259 = vector.shape_cast %258 : vector<1x1x32xf32> to vector<1x32xf32>
    %260 = vector.broadcast %259 : vector<1x32xf32> to vector<5x32xf32>
    %261 = arith.addf %257, %260 : vector<5x32xf32>
    %c0_187 = arith.constant 0 : index
    %c0_188 = arith.constant 0 : index
    %262 = vector.load %arg20[%c0_187, %c0_188] : memref<5x32xf32, #tpu.memory_space<vmem>>, vector<5x32xf32>
    tpu.vector_store %arg20[%c0_187, %c0_188], %261 {strides = array<i32>} : memref<5x32xf32, #tpu.memory_space<vmem>>, vector<5x32xf32>,
    %c1_i32 = arith.constant 1 : i32
    %263 = arith.cmpi eq, %arg1, %c1_i32 : i32
    %264 = arith.extui %263 : i1 to i32
    %c0_i32_189 = arith.constant 0 : i32
    %265 = arith.cmpi ne, %264, %c0_i32_189 : i32
    scf.if %265 {
      %c0_190 = arith.constant 0 : index
      %c0_191 = arith.constant 0 : index
      %266 = vector.load %arg20[%c0_190, %c0_191] : memref<5x32xf32, #tpu.memory_space<vmem>>, vector<5x32xf32>
      %c0_192 = arith.constant 0 : index
      %c0_193 = arith.constant 0 : index
      %c0_194 = arith.constant 0 : index
      %267 = vector.load %arg19[%c0_192, %c0_193, %c0_194] : memref<1x5x32xf32, #tpu.memory_space<vmem>>, vector<1x5x32xf32>
      %268 = vector.shape_cast %267 : vector<1x5x32xf32> to vector<5x32xf32>
      %269 = vector.shape_cast %266 : vector<5x32xf32> to vector<1x5x32xf32>
      tpu.vector_store %arg19[%c0_192, %c0_193, %c0_194], %269 {strides = array<i32>} : memref<1x5x32xf32, #tpu.memory_space<vmem>>, vector<1x5x32xf32>,
    } else {
    }
    return
  }
  func.func @transform_0(%arg0: i32, %arg1: i32) -> (i32, i32, i32) {
    %c0_i32 = arith.constant 0 : i32
    %c0_i32_0 = arith.constant 0 : i32
    %c0_i32_1 = arith.constant 0 : i32
    return %arg0, %c0_i32, %c0_i32_0 : i32, i32, i32
  }
  func.func @transform_1(%arg0: i32, %arg1: i32) -> (i32, i32, i32) {
    %c0_i32 = arith.constant 0 : i32
    %c0_i32_0 = arith.constant 0 : i32
    %c0_i32_1 = arith.constant 0 : i32
    return %arg1, %c0_i32, %c0_i32_0 : i32, i32, i32
  }
  func.func @transform_2(%arg0: i32, %arg1: i32) -> (i32, i32, i32) {
    %c0_i32 = arith.constant 0 : i32
    %c0_i32_0 = arith.constant 0 : i32
    %c0_i32_1 = arith.constant 0 : i32
    return %arg1, %c0_i32, %c0_i32_0 : i32, i32, i32
  }
  func.func @transform_3(%arg0: i32, %arg1: i32) -> (i32, i32, i32, i32) {
    %c0_i32 = arith.constant 0 : i32
    %c0_i32_0 = arith.constant 0 : i32
    %c0_i32_1 = arith.constant 0 : i32
    %c0_i32_2 = arith.constant 0 : i32
    return %arg1, %c0_i32, %c0_i32_0, %c0_i32_1 : i32, i32, i32, i32
  }
  func.func @transform_4(%arg0: i32, %arg1: i32) -> (i32, i32, i32, i32) {
    %c0_i32 = arith.constant 0 : i32
    %c0_i32_0 = arith.constant 0 : i32
    %c0_i32_1 = arith.constant 0 : i32
    %c0_i32_2 = arith.constant 0 : i32
    return %arg1, %c0_i32, %c0_i32_0, %c0_i32_1 : i32, i32, i32, i32
  }
  func.func @transform_5(%arg0: i32, %arg1: i32) -> (i32, i32, i32, i32) {
    %c0_i32 = arith.constant 0 : i32
    %c0_i32_0 = arith.constant 0 : i32
    %c0_i32_1 = arith.constant 0 : i32
    %c0_i32_2 = arith.constant 0 : i32
    return %arg1, %c0_i32, %c0_i32_0, %c0_i32_1 : i32, i32, i32, i32
  }
  func.func @transform_6(%arg0: i32, %arg1: i32) -> (i32, i32, i32, i32) {
    %c0_i32 = arith.constant 0 : i32
    %c0_i32_0 = arith.constant 0 : i32
    %c0_i32_1 = arith.constant 0 : i32
    %c0_i32_2 = arith.constant 0 : i32
    return %arg1, %c0_i32, %c0_i32_0, %c0_i32_1 : i32, i32, i32, i32
  }
  func.func @transform_7(%arg0: i32, %arg1: i32) -> (i32, i32, i32, i32) {
    %c0_i32 = arith.constant 0 : i32
    %c0_i32_0 = arith.constant 0 : i32
    %c0_i32_1 = arith.constant 0 : i32
    %c0_i32_2 = arith.constant 0 : i32
    return %arg1, %c0_i32, %c0_i32_0, %c0_i32_1 : i32, i32, i32, i32
  }
  func.func @transform_8(%arg0: i32, %arg1: i32) -> (i32, i32, i32, i32) {
    %c0_i32 = arith.constant 0 : i32
    %c0_i32_0 = arith.constant 0 : i32
    %c0_i32_1 = arith.constant 0 : i32
    %c0_i32_2 = arith.constant 0 : i32
    return %arg1, %c0_i32, %c0_i32_0, %c0_i32_1 : i32, i32, i32, i32
  }
  func.func @transform_9(%arg0: i32, %arg1: i32) -> (i32, i32, i32, i32) {
    %c0_i32 = arith.constant 0 : i32
    %c0_i32_0 = arith.constant 0 : i32
    %c0_i32_1 = arith.constant 0 : i32
    %c0_i32_2 = arith.constant 0 : i32
    return %arg1, %c0_i32, %c0_i32_0, %c0_i32_1 : i32, i32, i32, i32
  }
  func.func @transform_10(%arg0: i32, %arg1: i32) -> (i32, i32, i32) {
    %c0_i32 = arith.constant 0 : i32
    %c0_i32_0 = arith.constant 0 : i32
    %c0_i32_1 = arith.constant 0 : i32
    return %arg1, %c0_i32, %c0_i32_0 : i32, i32, i32
  }
  func.func @transform_11(%arg0: i32, %arg1: i32) -> (i32, i32, i32) {
    %c0_i32 = arith.constant 0 : i32
    %c0_i32_0 = arith.constant 0 : i32
    %c0_i32_1 = arith.constant 0 : i32
    return %arg1, %c0_i32, %c0_i32_0 : i32, i32, i32
  }
  func.func @transform_12(%arg0: i32, %arg1: i32) -> (i32, i32, i32) {
    %c0_i32 = arith.constant 0 : i32
    %c0_i32_0 = arith.constant 0 : i32
    %c0_i32_1 = arith.constant 0 : i32
    return %arg1, %c0_i32, %c0_i32_0 : i32, i32, i32
  }
  func.func @transform_13(%arg0: i32, %arg1: i32) -> (i32, i32, i32) {
    %c0_i32 = arith.constant 0 : i32
    %c0_i32_0 = arith.constant 0 : i32
    %c0_i32_1 = arith.constant 0 : i32
    return %arg1, %c0_i32, %c0_i32_0 : i32, i32, i32
  }
  func.func @transform_14(%arg0: i32, %arg1: i32) -> (i32, i32, i32) {
    %c0_i32 = arith.constant 0 : i32
    %c0_i32_0 = arith.constant 0 : i32
    %c0_i32_1 = arith.constant 0 : i32
    return %arg1, %c0_i32, %c0_i32_0 : i32, i32, i32
  }
  func.func @transform_15(%arg0: i32, %arg1: i32) -> (i32, i32, i32) {
    %c0_i32 = arith.constant 0 : i32
    %c0_i32_0 = arith.constant 0 : i32
    %c0_i32_1 = arith.constant 0 : i32
    return %arg1, %c0_i32, %c0_i32_0 : i32, i32, i32
  }
  func.func @transform_16(%arg0: i32, %arg1: i32) -> (i32, i32, i32) {
    %c0_i32 = arith.constant 0 : i32
    %c0_i32_0 = arith.constant 0 : i32
    %c0_i32_1 = arith.constant 0 : i32
    return %arg1, %c0_i32, %c0_i32_0 : i32, i32, i32
  }
  func.func @transform_17(%arg0: i32, %arg1: i32) -> (i32, i32, i32) {
    %c0_i32 = arith.constant 0 : i32
    %c0_i32_0 = arith.constant 0 : i32
    %c0_i32_1 = arith.constant 0 : i32
    return %arg0, %c0_i32, %c0_i32_0 : i32, i32, i32
  }
}

</mosaic_0001>

<llo_original>
// kernel: _lambda_.5
$region0: #{_lambda_.5}
  #allocation0 [shape = 'u32[]', space=smem, size = 0x4, offset = 0x4, fixed_abs, tag = 'smem constant byte address 0x4 - core index']
  #allocation1 [shape = 'u32[72,128]{1,0:T(1,128)}', space=vmem, size = 0x9000, scoped, tag = 'internal scratch']
  %s0 = inlined_call_operand.vmem [shape: f32[2,5,32], index: 0, kind: input, shape index: {}]
  %s1 = inlined_call_operand.vmem [shape: f32[1,32], index: 1, kind: input, shape index: {}]
  %s2 = inlined_call_operand.vmem [shape: f32[1,32], index: 2, kind: input, shape index: {}]
  %s3 = inlined_call_operand.vmem [shape: bf16[32,128], index: 3, kind: input, shape index: {}]
  %s4 = inlined_call_operand.vmem [shape: f32[1,128], index: 4, kind: input, shape index: {}]
  %s5 = inlined_call_operand.hbm [shape: f32[2,1,128], index: 5, kind: output, shape index: {}]
  %s6 = sld [smem:[#allocation0]]
  $region53: #{_lambda_.5} parent=0
    _
  %s8 = ssub.s32 1, %s6
  %s9 = scalar_select 0, %s8, %s6
  $region1: #{_lambda_.5} parent=0
    #allocation2 [shape = 'u8[1024]{0}', space=vmem, size = 0x400, scoped, tag = 'output window, operand 0']
    #allocation3 [shape = 's32[2]{0}', space=sflag, size = 0x8, scoped, tag = 'scoped memory for _lambda_.5']
    %10 = vsyncpa [#allocation3], 0
    %s11 = scalar_lea.sflag [#allocation3], 1
    %12 = vsyncpa %s11, 0
    loop: start=0, step=1, limit=4
    $region2: #{_lambda_.5} parent=1 // loop_pre_header
      _
    $region3: #{_lambda_.5} parent=1 // loop_header
      %s14 = sphi 0, %s18
      %p15 = scmp.ge.s32.totalorder %s14, 4
      %s24 = sphi 0, %s26
      %s27 = sphi 0, %s24
      %s28 = sphi 0, %s27
      %s44 = sphi 0, %s28
      %s48 = sphi 0, %s48
      %s50 = sphi 0, %s48
      %s51 = sphi 0, %s50
      %s65 = sphi 0, %s51
      %s69 = sphi 0, %s69
      %s71 = sphi 0, %s69
      %s72 = sphi 0, %s71
      %s86 = sphi 0, %s72
      %s90 = sphi 0, %s90
      %s92 = sphi 0, %s90
      %s93 = sphi 0, %s92
      %s107 = sphi 0, %s93
      %s111 = sphi 0, %s111
      %s113 = sphi 0, %s111
      %s114 = sphi 0, %s113
      %s128 = sphi 0, %s114
      %s134 = sphi 0, %s136
      %s137 = sphi 0, %s134
      %s138 = sphi 0, %s137
      %s154 = sphi 0, %s138
    $region4: #{_lambda_.5} parent=1 // loop_header_branch
      %17 = sbr.rel (%p15) target = $region8
    $region5: #{_lambda_.5} parent=1 // loop_body
      %s19 = ssub.s32 %s14, 1
      %s20 = ssub.s32 %s14, 2
      %s21 = sadd.s32 %s14, 1
      %s22 = ssub.s32 %s14, %s21
      %p23 = scmp.eq.s32.totalorder %s22, 0
      %s25 = sadd.s32 %s24, 1
      %s26 = scalar_select %p23, %s24, %s25
      %p29 = pneg %p23
      %p30 = scmp.eq.s32.totalorder %s14, 1
      %p31 = por %p29, %p30
      %p32 = scmp.ne.s32.totalorder %s24, %s27
      %p33 = scmp.eq.s32.totalorder %s14, 0
      %p34 = por %p32, %p33
      %p35 = scmp.ne.s32.totalorder %s24, %s27
      %p36 = scmp.eq.s32.totalorder %s19, 1
      %p37 = por %p35, %p36
      %p38 = scmp.ne.s32.totalorder %s27, %s28
      %p39 = scmp.eq.s32.totalorder %s19, 0
      %p40 = por %p38, %p39
      %p41 = scmp.ne.s32.totalorder %s27, %s28
      %p42 = scmp.eq.s32.totalorder %s20, 1
      %p43 = por %p41, %p42
      %p45 = scmp.ne.s32.totalorder %s28, %s44
      %p46 = scmp.eq.s32.totalorder %s20, 0
      %p47 = por %p45, %p46
      %s49 = sadd.s32 %s48, 1
      %p52 = scmp.eq.s32.totalorder %s14, 1
      %p53 = scmp.ne.s32.totalorder %s48, %s50
      %p54 = scmp.eq.s32.totalorder %s14, 0
      %p55 = por %p53, %p54
      %p56 = scmp.ne.s32.totalorder %s48, %s50
      %p57 = scmp.eq.s32.totalorder %s19, 1
      %p58 = por %p56, %p57
      %p59 = scmp.ne.s32.totalorder %s50, %s51
      %p60 = scmp.eq.s32.totalorder %s19, 0
      %p61 = por %p59, %p60
      %p62 = scmp.ne.s32.totalorder %s50, %s51
      %p63 = scmp.eq.s32.totalorder %s20, 1
      %p64 = por %p62, %p63
      %p66 = scmp.ne.s32.totalorder %s51, %s65
      %p67 = scmp.eq.s32.totalorder %s20, 0
      %p68 = por %p66, %p67
      %s70 = sadd.s32 %s69, 1
      %p73 = scmp.eq.s32.totalorder %s14, 1
      %p74 = scmp.ne.s32.totalorder %s69, %s71
      %p75 = scmp.eq.s32.totalorder %s14, 0
      %p76 = por %p74, %p75
      %p77 = scmp.ne.s32.totalorder %s69, %s71
      %p78 = scmp.eq.s32.totalorder %s19, 1
      %p79 = por %p77, %p78
      %p80 = scmp.ne.s32.totalorder %s71, %s72
      %p81 = scmp.eq.s32.totalorder %s19, 0
      %p82 = por %p80, %p81
      %p83 = scmp.ne.s32.totalorder %s71, %s72
      %p84 = scmp.eq.s32.totalorder %s20, 1
      %p85 = por %p83, %p84
      %p87 = scmp.ne.s32.totalorder %s72, %s86
      %p88 = scmp.eq.s32.totalorder %s20, 0
      %p89 = por %p87, %p88
      %s91 = sadd.s32 %s90, 1
      %p94 = scmp.eq.s32.totalorder %s14, 1
      %p95 = scmp.ne.s32.totalorder %s90, %s92
      %p96 = scmp.eq.s32.totalorder %s14, 0
      %p97 = por %p95, %p96
      %p98 = scmp.ne.s32.totalorder %s90, %s92
      %p99 = scmp.eq.s32.totalorder %s19, 1
      %p100 = por %p98, %p99
      %p101 = scmp.ne.s32.totalorder %s92, %s93
      %p102 = scmp.eq.s32.totalorder %s19, 0
      %p103 = por %p101, %p102
      %p104 = scmp.ne.s32.totalorder %s92, %s93
      %p105 = scmp.eq.s32.totalorder %s20, 1
      %p106 = por %p104, %p105
      %p108 = scmp.ne.s32.totalorder %s93, %s107
      %p109 = scmp.eq.s32.totalorder %s20, 0
      %p110 = por %p108, %p109
      %s112 = sadd.s32 %s111, 1
      %p115 = scmp.eq.s32.totalorder %s14, 1
      %p116 = scmp.ne.s32.totalorder %s111, %s113
      %p117 = scmp.eq.s32.totalorder %s14, 0
      %p118 = por %p116, %p117
      %p119 = scmp.ne.s32.totalorder %s111, %s113
      %p120 = scmp.eq.s32.totalorder %s19, 1
      %p121 = por %p119, %p120
      %p122 = scmp.ne.s32.totalorder %s113, %s114
      %p123 = scmp.eq.s32.totalorder %s19, 0
      %p124 = por %p122, %p123
      %p125 = scmp.ne.s32.totalorder %s113, %s114
      %p126 = scmp.eq.s32.totalorder %s20, 1
      %p127 = por %p125, %p126
      %p129 = scmp.ne.s32.totalorder %s114, %s128
      %p130 = scmp.eq.s32.totalorder %s20, 0
      %p131 = por %p129, %p130
      %s132 = ssub.s32 %s14, %s21
      %p133 = scmp.eq.s32.totalorder %s132, 0
      %s135 = sadd.s32 %s134, 1
      %s136 = scalar_select %p133, %s134, %s135
      %p139 = pneg %p133
      %p140 = scmp.eq.s32.totalorder %s14, 1
      %p141 = por %p139, %p140
      %p142 = scmp.ne.s32.totalorder %s134, %s137
      %p143 = scmp.eq.s32.totalorder %s14, 0
      %p144 = por %p142, %p143
      %p145 = scmp.ne.s32.totalorder %s134, %s137
      %p146 = scmp.eq.s32.totalorder %s19, 1
      %p147 = por %p145, %p146
      %p148 = scmp.ne.s32.totalorder %s137, %s138
      %p149 = scmp.eq.s32.totalorder %s19, 0
      %p150 = por %p148, %p149
      %p151 = scmp.ne.s32.totalorder %s137, %s138
      %p152 = scmp.eq.s32.totalorder %s20, 1
      %p153 = por %p151, %p152
      %p155 = scmp.ne.s32.totalorder %s138, %s154
      %p156 = scmp.eq.s32.totalorder %s20, 0
      %p157 = por %p155, %p156
      %p158 = scmp.le.s32.totalorder 1, %s14
      %p159 = scmp.lt.s32.totalorder %s14, 3
      %p160 = pnand %p158, %p159
      %p161 = pneg %p160
      // Predicated region
      $region9: #{_lambda_.5} parent=5 // pred_check
        _
      $region10: #{_lambda_.5} parent=5 // pred_check_branch
        %163 = sbr.rel (%p160) target = $region12
      $region11: #{_lambda_.5} parent=5 // pred_region
        %s164 = ssub.s32 %s14, 1
        // Predicated region
        $region13: #{_lambda_.5} parent=11 // pred_check
          %p165 = pneg %p61
        $region14: #{_lambda_.5} parent=11 // pred_check_branch
          %167 = sbr.rel (%p165) target = $region16
        $region15: #{_lambda_.5} parent=11 // pred_region
          _
        $region16: #{_lambda_.5} parent=11 // pred_fallthru
          _
        // Predicated region
        $region17: #{_lambda_.5} parent=11 // pred_check
          %p168 = pneg %p82
        $region18: #{_lambda_.5} parent=11 // pred_check_branch
          %170 = sbr.rel (%p168) target = $region20
        $region19: #{_lambda_.5} parent=11 // pred_region
          _
        $region20: #{_lambda_.5} parent=11 // pred_fallthru
          _
        // Predicated region
        $region21: #{_lambda_.5} parent=11 // pred_check
          %p171 = pneg %p103
        $region22: #{_lambda_.5} parent=11 // pred_check_branch
          %173 = sbr.rel (%p171) target = $region24
        $region23: #{_lambda_.5} parent=11 // pred_region
          _
        $region24: #{_lambda_.5} parent=11 // pred_fallthru
          _
        // Predicated region
        $region25: #{_lambda_.5} parent=11 // pred_check
          %p174 = pneg %p124
        $region26: #{_lambda_.5} parent=11 // pred_check_branch
          %176 = sbr.rel (%p174) target = $region28
        $region27: #{_lambda_.5} parent=11 // pred_region
          _
        $region28: #{_lambda_.5} parent=11 // pred_fallthru
          _
      $region12: #{_lambda_.5} parent=5 // pred_fallthru
        _
      %p177 = scmp.lt.s32.totalorder %s14, 2
      // Predicated region
      $region29: #{_lambda_.5} parent=5 // pred_check
        %p178 = pneg %p177
      $region30: #{_lambda_.5} parent=5 // pred_check_branch
        %180 = sbr.rel (%p178) target = $region32
      $region31: #{_lambda_.5} parent=5 // pred_region
        // Predicated region
        $region33: #{_lambda_.5} parent=31 // pred_check
          %p181 = pneg %p34
        $region34: #{_lambda_.5} parent=31 // pred_check_branch
          %183 = sbr.rel (%p181) target = $region36
        $region35: #{_lambda_.5} parent=31 // pred_region
          %p184 = scmp.lt.s32.totalorder %s14, 1
          %s185 = scalar_select %p184, %s14, 1
          %s186 = smul.addr %s185, 8
          %s187 = scalar_lea.vmem %s0, %s186
        $region36: #{_lambda_.5} parent=31 // pred_fallthru
          _
      $region32: #{_lambda_.5} parent=5 // pred_fallthru
        _
      %p188 = scmp.le.s32.totalorder 1, %s14
      %p189 = scmp.lt.s32.totalorder %s14, 3
      %p190 = pnand %p188, %p189
      %p191 = pneg %p190
      // Predicated region
      $region37: #{_lambda_.5} parent=5 // pred_check
        _
      $region38: #{_lambda_.5} parent=5 // pred_check_branch
        %193 = sbr.rel (%p190) target = $region40
      $region39: #{_lambda_.5} parent=5 // pred_region
        %s194 = ssub.s32 %s14, 1
        %p195 = scmp.lt.s32.totalorder %s19, 1
        %s196 = scalar_select %p195, %s19, 1
        %s197 = smul.addr %s196, 8
        %s198 = scalar_lea.vmem %s0, %s197
        %p199 = pneg %p40
        %p200 = pneg %p37
        %p201 = pneg %p61
        %p202 = pneg %p58
        %p203 = pneg %p82
        %p204 = pneg %p79
        %p205 = pneg %p103
        %p206 = pneg %p100
        %p207 = pneg %p124
        %p208 = pneg %p121
        %p209 = pneg %p150
        %p210 = pneg %p147
        %s211 = sand.u32 %s137, 1
        %s212 = scalar_lea.sflag [#allocation3], %s211
        %s213 = sand.u32 %s137, 1
        %s214 = scalar_lea.vmem [#allocation2], %s213
        %p215 = scmp.lt.s32.totalorder %s19, 1
        %s216 = scalar_select %p215, %s19, 1
        %s217 = smul.addr %s216, 8
        %s218 = scalar_lea.vmem %s0, %s217
        %v220 = vld [vmem:[%s218] sm:$0x1]
        %v221 = vld [vmem:[%s1] sm:$0x1]
        %v222 = vld [vmem:[%s2] sm:$0x1]
        %vm223 = vcmask 253952
        %v224 = vsel %vm223, %v220, 0.0
        %225 = vadd.xlane.f32.xlu0 %v224
        %v226 = vpop.xlane.xlu0 %225
        %v227 = vrcp.pop 32.0
        %v228 = vmul.f32 32.0, %v227
        %v229 = vsub.f32 1.0, %v228
        %v230 = vmul.f32 %v227, %v229
        %v231 = vadd.f32 %v227, %v230
        %vm232 = vweird.f32 %v227
        %v233 = vsel %vm232, %v227, %v231
        %v234 = vmul.f32 %v226, %v233
        %v235 = vsub.f32 %v220, %v234
        %v236 = vmul.f32 %v235, %v235
        %v237 = vsel %vm223, %v236, 0.0
        %238 = vadd.xlane.f32.xlu0 %v237
        %v239 = vpop.xlane.xlu0 %238
        %v240 = vmul.f32 %v239, %v233
        %v241 = vadd.f32 %v240, 1e-05
        %v242 = vrsqrt.pop %v241
        %v243 = vmul.f32 %v242, %v241
        %v244 = vmul.f32 %v243, %v242
        %v245 = vmul.f32 0.5, %v244
        %v246 = vsub.f32 1.5, %v245
        %v247 = vmul.f32 %v242, %v246
        %vm248 = vweird.f32 %v241
        %vm249 = vweird.f32 %v242
        %vm250 = vmor %vm248, %vm249
        %v251 = vsel %vm250, %v242, %v247
        %v252 = vmul.f32 %v235, %v251
        %v253 = vmul.f32 %v252, %v221
        %v254 = vadd.f32 %v253, %v222
        %v255 = vpack.c.bf16 %v254, %v254
        %v256 = vld [vmem:[%s3] sm:$0xf]
        %v257 = vld [vmem:[%s3 + $0x4] sm:$0xf]
        %v258 = vld [vmem:[%s3 + $0x8] sm:$0xf]
        %v259 = vld [vmem:[%s3 + $0xc] sm:$0xf]
        %v260 = vld [vmem:[%s4] sm:$0x1]
        %v265 = vunpack.c.l.b16 %v256
        %v266 = vunpack.c.l.b16 %v257
        %v267 = vunpack.c.l.b16 %v258
        %v268 = vunpack.c.l.b16 %v259
        %v269 = vpack.c.b16 %v266, %v265
        %v270 = vpack.c.b16 %v268, %v267
        %vm273 = vcmask 261120
        %v275 = vsel %vm273, %v255, 0
        %277 = vmatpush.bf16.msra.mxu0 0
        %278 = vmatpush.bf16.msra.mxu0 0
        %279 = vmatpush.bf16.msra.mxu0 0
        %280 = vmatpush.bf16.msra.mxu0 0
        %281 = vmatpush.bf16.msra.mxu0 0
        %282 = vmatpush.bf16.msra.mxu0 0
        %283 = vmatpush.bf16.msra.mxu0 %v270
        %284 = vmatpush.bf16.msra.mxu0 %v269
        %285 = vmatmul.bf16.gmra.mxu0 %v275
        %v286 = vpop.f32.mrf.mxu0
        %v287 = vadd.f32 %v260, %v286
        %v288 = vpop.f32.mrf.mxu0
        %289 = vdwg.mxu0
        %290 = vst [vmem:[%s214] sm:$0x1] %v287
        %s291 = sand.u32 %s137, 1
        %s292 = scalar_lea.sflag [#allocation3], %s291
        %s293 = sand.u32 %s137, 1
        %s294 = scalar_lea.vmem [#allocation2], %s293
        // Predicated region
        $region41: #{_lambda_.5} parent=39 // pred_check
          %p295 = pneg %p147
        $region42: #{_lambda_.5} parent=39 // pred_check_branch
          %297 = sbr.rel (%p295) target = $region44
        $region43: #{_lambda_.5} parent=39 // pred_region
          %299 = vsyncadd %s292, 0
          %s300 = scalar_lea.hbm %s5, %s19
          %s302 = sshll.u32 %s294, 4
          %s303 = int_to_ptr.vmem [resolvable:$true] %s302
          %s304 = sshll.u32 %s300, 4
          %s305 = int_to_ptr.hbm [resolvable:$true] %s304
          %307 = dma.vmem_to_hbm [thread:$0]  %s303, 16, %s305, %s292
        $region44: #{_lambda_.5} parent=39 // pred_fallthru
          _
      $region40: #{_lambda_.5} parent=5 // pred_fallthru
        _
      %p308 = scmp.le.s32.totalorder 2, %s14
      // Predicated region
      $region45: #{_lambda_.5} parent=5 // pred_check
        %p309 = pneg %p308
      $region46: #{_lambda_.5} parent=5 // pred_check_branch
        %311 = sbr.rel (%p309) target = $region48
      $region47: #{_lambda_.5} parent=5 // pred_region
        %s312 = ssub.s32 %s14, 2
        // Predicated region
        $region49: #{_lambda_.5} parent=47 // pred_check
          %p313 = pneg %p153
        $region50: #{_lambda_.5} parent=47 // pred_check_branch
          %315 = sbr.rel (%p313) target = $region52
        $region51: #{_lambda_.5} parent=47 // pred_region
          %s316 = sand.u32 %s138, 1
          %s317 = scalar_lea.sflag [#allocation3], %s316
          %s318 = sand.u32 %s138, 1
          %s319 = scalar_lea.vmem [#allocation2], %s318
          %321 = dma.done %s317, 16
        $region52: #{_lambda_.5} parent=47 // pred_fallthru
          _
      $region48: #{_lambda_.5} parent=5 // pred_fallthru
        _
    $region6: #{_lambda_.5} parent=1 // loop_footer
      %s18 = sadd.s32 1, %s14
    $region7: #{_lambda_.5} parent=1 // loop_footer_branch
      %13 = sbr.rel target = $region3
    $region8: #{_lambda_.5} parent=1 // loop_exit
      _
    %322 = vsyncpa [#allocation3], 1
    %s323 = scalar_lea.sflag [#allocation3], 1
    %324 = vsyncpa %s323, 1

// kernel: _lambda_.3
$region0: #{_lambda_.3}
  #allocation0 [shape = 'u32[]', space=smem, size = 0x4, offset = 0x4, fixed_abs, tag = 'smem constant byte address 0x4 - core index']
  #allocation1 [shape = 'u32[72,128]{1,0:T(1,128)}', space=vmem, size = 0x9000, scoped, tag = 'internal scratch']
  %s0 = inlined_call_operand.vmem [shape: f32[2,5,192], index: 0, kind: input, shape index: {}]
  %s1 = inlined_call_operand.vmem [shape: bf16[192,32], index: 1, kind: input, shape index: {}]
  %s2 = inlined_call_operand.vmem [shape: f32[1,32], index: 2, kind: input, shape index: {}]
  %s3 = inlined_call_operand.vmem [shape: f32[5,32], index: 3, kind: input, shape index: {}]
  %s4 = inlined_call_operand.vmem [shape: f32[1,32], index: 4, kind: input, shape index: {}]
  %s5 = inlined_call_operand.vmem [shape: f32[1,32], index: 5, kind: input, shape index: {}]
  %s6 = inlined_call_operand.vmem [shape: f32[2,5,32], index: 6, kind: output, shape index: {}]
  %s7 = sld [smem:[#allocation0]]
  $region57: #{_lambda_.3} parent=0
    _
  %s9 = ssub.s32 1, %s7
  %s10 = scalar_select 0, %s9, %s7
  loop: start=0, step=1, limit=4
  $region2: #{_lambda_.3} parent=0 // loop_pre_header
    _
  $region3: #{_lambda_.3} parent=0 // loop_header
    %s12 = sphi 0, %s16
    %p13 = scmp.ge.s32.totalorder %s12, 4
    %s22 = sphi 0, %s24
    %s25 = sphi 0, %s22
    %s26 = sphi 0, %s25
    %s42 = sphi 0, %s26
    %s46 = sphi 0, %s46
    %s48 = sphi 0, %s46
    %s49 = sphi 0, %s48
    %s63 = sphi 0, %s49
    %s67 = sphi 0, %s67
    %s69 = sphi 0, %s67
    %s70 = sphi 0, %s69
    %s84 = sphi 0, %s70
    %s88 = sphi 0, %s88
    %s90 = sphi 0, %s88
    %s91 = sphi 0, %s90
    %s105 = sphi 0, %s91
    %s109 = sphi 0, %s109
    %s111 = sphi 0, %s109
    %s112 = sphi 0, %s111
    %s126 = sphi 0, %s112
    %s130 = sphi 0, %s130
    %s132 = sphi 0, %s130
    %s133 = sphi 0, %s132
    %s147 = sphi 0, %s133
    %s153 = sphi 0, %s155
    %s156 = sphi 0, %s153
    %s157 = sphi 0, %s156
    %s173 = sphi 0, %s157
  $region4: #{_lambda_.3} parent=0 // loop_header_branch
    %15 = sbr.rel (%p13) target = $region8
  $region5: #{_lambda_.3} parent=0 // loop_body
    %s17 = ssub.s32 %s12, 1
    %s18 = ssub.s32 %s12, 2
    %s19 = sadd.s32 %s12, 1
    %s20 = ssub.s32 %s12, %s19
    %p21 = scmp.eq.s32.totalorder %s20, 0
    %s23 = sadd.s32 %s22, 1
    %s24 = scalar_select %p21, %s22, %s23
    %p27 = pneg %p21
    %p28 = scmp.eq.s32.totalorder %s12, 1
    %p29 = por %p27, %p28
    %p30 = scmp.ne.s32.totalorder %s22, %s25
    %p31 = scmp.eq.s32.totalorder %s12, 0
    %p32 = por %p30, %p31
    %p33 = scmp.ne.s32.totalorder %s22, %s25
    %p34 = scmp.eq.s32.totalorder %s17, 1
    %p35 = por %p33, %p34
    %p36 = scmp.ne.s32.totalorder %s25, %s26
    %p37 = scmp.eq.s32.totalorder %s17, 0
    %p38 = por %p36, %p37
    %p39 = scmp.ne.s32.totalorder %s25, %s26
    %p40 = scmp.eq.s32.totalorder %s18, 1
    %p41 = por %p39, %p40
    %p43 = scmp.ne.s32.totalorder %s26, %s42
    %p44 = scmp.eq.s32.totalorder %s18, 0
    %p45 = por %p43, %p44
    %s47 = sadd.s32 %s46, 1
    %p50 = scmp.eq.s32.totalorder %s12, 1
    %p51 = scmp.ne.s32.totalorder %s46, %s48
    %p52 = scmp.eq.s32.totalorder %s12, 0
    %p53 = por %p51, %p52
    %p54 = scmp.ne.s32.totalorder %s46, %s48
    %p55 = scmp.eq.s32.totalorder %s17, 1
    %p56 = por %p54, %p55
    %p57 = scmp.ne.s32.totalorder %s48, %s49
    %p58 = scmp.eq.s32.totalorder %s17, 0
    %p59 = por %p57, %p58
    %p60 = scmp.ne.s32.totalorder %s48, %s49
    %p61 = scmp.eq.s32.totalorder %s18, 1
    %p62 = por %p60, %p61
    %p64 = scmp.ne.s32.totalorder %s49, %s63
    %p65 = scmp.eq.s32.totalorder %s18, 0
    %p66 = por %p64, %p65
    %s68 = sadd.s32 %s67, 1
    %p71 = scmp.eq.s32.totalorder %s12, 1
    %p72 = scmp.ne.s32.totalorder %s67, %s69
    %p73 = scmp.eq.s32.totalorder %s12, 0
    %p74 = por %p72, %p73
    %p75 = scmp.ne.s32.totalorder %s67, %s69
    %p76 = scmp.eq.s32.totalorder %s17, 1
    %p77 = por %p75, %p76
    %p78 = scmp.ne.s32.totalorder %s69, %s70
    %p79 = scmp.eq.s32.totalorder %s17, 0
    %p80 = por %p78, %p79
    %p81 = scmp.ne.s32.totalorder %s69, %s70
    %p82 = scmp.eq.s32.totalorder %s18, 1
    %p83 = por %p81, %p82
    %p85 = scmp.ne.s32.totalorder %s70, %s84
    %p86 = scmp.eq.s32.totalorder %s18, 0
    %p87 = por %p85, %p86
    %s89 = sadd.s32 %s88, 1
    %p92 = scmp.eq.s32.totalorder %s12, 1
    %p93 = scmp.ne.s32.totalorder %s88, %s90
    %p94 = scmp.eq.s32.totalorder %s12, 0
    %p95 = por %p93, %p94
    %p96 = scmp.ne.s32.totalorder %s88, %s90
    %p97 = scmp.eq.s32.totalorder %s17, 1
    %p98 = por %p96, %p97
    %p99 = scmp.ne.s32.totalorder %s90, %s91
    %p100 = scmp.eq.s32.totalorder %s17, 0
    %p101 = por %p99, %p100
    %p102 = scmp.ne.s32.totalorder %s90, %s91
    %p103 = scmp.eq.s32.totalorder %s18, 1
    %p104 = por %p102, %p103
    %p106 = scmp.ne.s32.totalorder %s91, %s105
    %p107 = scmp.eq.s32.totalorder %s18, 0
    %p108 = por %p106, %p107
    %s110 = sadd.s32 %s109, 1
    %p113 = scmp.eq.s32.totalorder %s12, 1
    %p114 = scmp.ne.s32.totalorder %s109, %s111
    %p115 = scmp.eq.s32.totalorder %s12, 0
    %p116 = por %p114, %p115
    %p117 = scmp.ne.s32.totalorder %s109, %s111
    %p118 = scmp.eq.s32.totalorder %s17, 1
    %p119 = por %p117, %p118
    %p120 = scmp.ne.s32.totalorder %s111, %s112
    %p121 = scmp.eq.s32.totalorder %s17, 0
    %p122 = por %p120, %p121
    %p123 = scmp.ne.s32.totalorder %s111, %s112
    %p124 = scmp.eq.s32.totalorder %s18, 1
    %p125 = por %p123, %p124
    %p127 = scmp.ne.s32.totalorder %s112, %s126
    %p128 = scmp.eq.s32.totalorder %s18, 0
    %p129 = por %p127, %p128
    %s131 = sadd.s32 %s130, 1
    %p134 = scmp.eq.s32.totalorder %s12, 1
    %p135 = scmp.ne.s32.totalorder %s130, %s132
    %p136 = scmp.eq.s32.totalorder %s12, 0
    %p137 = por %p135, %p136
    %p138 = scmp.ne.s32.totalorder %s130, %s132
    %p139 = scmp.eq.s32.totalorder %s17, 1
    %p140 = por %p138, %p139
    %p141 = scmp.ne.s32.totalorder %s132, %s133
    %p142 = scmp.eq.s32.totalorder %s17, 0
    %p143 = por %p141, %p142
    %p144 = scmp.ne.s32.totalorder %s132, %s133
    %p145 = scmp.eq.s32.totalorder %s18, 1
    %p146 = por %p144, %p145
    %p148 = scmp.ne.s32.totalorder %s133, %s147
    %p149 = scmp.eq.s32.totalorder %s18, 0
    %p150 = por %p148, %p149
    %s151 = ssub.s32 %s12, %s19
    %p152 = scmp.eq.s32.totalorder %s151, 0
    %s154 = sadd.s32 %s153, 1
    %s155 = scalar_select %p152, %s153, %s154
    %p158 = pneg %p152
    %p159 = scmp.eq.s32.totalorder %s12, 1
    %p160 = por %p158, %p159
    %p161 = scmp.ne.s32.totalorder %s153, %s156
    %p162 = scmp.eq.s32.totalorder %s12, 0
    %p163 = por %p161, %p162
    %p164 = scmp.ne.s32.totalorder %s153, %s156
    %p165 = scmp.eq.s32.totalorder %s17, 1
    %p166 = por %p164, %p165
    %p167 = scmp.ne.s32.totalorder %s156, %s157
    %p168 = scmp.eq.s32.totalorder %s17, 0
    %p169 = por %p167, %p168
    %p170 = scmp.ne.s32.totalorder %s156, %s157
    %p171 = scmp.eq.s32.totalorder %s18, 1
    %p172 = por %p170, %p171
    %p174 = scmp.ne.s32.totalorder %s157, %s173
    %p175 = scmp.eq.s32.totalorder %s18, 0
    %p176 = por %p174, %p175
    %p177 = scmp.le.s32.totalorder 1, %s12
    %p178 = scmp.lt.s32.totalorder %s12, 3
    %p179 = pnand %p177, %p178
    %p180 = pneg %p179
    // Predicated region
    $region9: #{_lambda_.3} parent=5 // pred_check
      _
    $region10: #{_lambda_.3} parent=5 // pred_check_branch
      %182 = sbr.rel (%p179) target = $region12
    $region11: #{_lambda_.3} parent=5 // pred_region
      %s183 = ssub.s32 %s12, 1
      // Predicated region
      $region13: #{_lambda_.3} parent=11 // pred_check
        %p184 = pneg %p59
      $region14: #{_lambda_.3} parent=11 // pred_check_branch
        %186 = sbr.rel (%p184) target = $region16
      $region15: #{_lambda_.3} parent=11 // pred_region
        _
      $region16: #{_lambda_.3} parent=11 // pred_fallthru
        _
      // Predicated region
      $region17: #{_lambda_.3} parent=11 // pred_check
        %p187 = pneg %p80
      $region18: #{_lambda_.3} parent=11 // pred_check_branch
        %189 = sbr.rel (%p187) target = $region20
      $region19: #{_lambda_.3} parent=11 // pred_region
        _
      $region20: #{_lambda_.3} parent=11 // pred_fallthru
        _
      // Predicated region
      $region21: #{_lambda_.3} parent=11 // pred_check
        %p190 = pneg %p101
      $region22: #{_lambda_.3} parent=11 // pred_check_branch
        %192 = sbr.rel (%p190) target = $region24
      $region23: #{_lambda_.3} parent=11 // pred_region
        _
      $region24: #{_lambda_.3} parent=11 // pred_fallthru
        _
      // Predicated region
      $region25: #{_lambda_.3} parent=11 // pred_check
        %p193 = pneg %p122
      $region26: #{_lambda_.3} parent=11 // pred_check_branch
        %195 = sbr.rel (%p193) target = $region28
      $region27: #{_lambda_.3} parent=11 // pred_region
        _
      $region28: #{_lambda_.3} parent=11 // pred_fallthru
        _
      // Predicated region
      $region29: #{_lambda_.3} parent=11 // pred_check
        %p196 = pneg %p143
      $region30: #{_lambda_.3} parent=11 // pred_check_branch
        %198 = sbr.rel (%p196) target = $region32
      $region31: #{_lambda_.3} parent=11 // pred_region
        _
      $region32: #{_lambda_.3} parent=11 // pred_fallthru
        _
    $region12: #{_lambda_.3} parent=5 // pred_fallthru
      _
    %p199 = scmp.lt.s32.totalorder %s12, 2
    // Predicated region
    $region33: #{_lambda_.3} parent=5 // pred_check
      %p200 = pneg %p199
    $region34: #{_lambda_.3} parent=5 // pred_check_branch
      %202 = sbr.rel (%p200) target = $region36
    $region35: #{_lambda_.3} parent=5 // pred_region
      // Predicated region
      $region37: #{_lambda_.3} parent=35 // pred_check
        %p203 = pneg %p32
      $region38: #{_lambda_.3} parent=35 // pred_check_branch
        %205 = sbr.rel (%p203) target = $region40
      $region39: #{_lambda_.3} parent=35 // pred_region
        %p206 = scmp.lt.s32.totalorder %s12, 1
        %s207 = scalar_select %p206, %s12, 1
        %s208 = smul.addr %s207, 2
        %s209 = smul.addr %s208, 8
        %s210 = scalar_lea.vmem %s0, %s209
      $region40: #{_lambda_.3} parent=35 // pred_fallthru
        _
    $region36: #{_lambda_.3} parent=5 // pred_fallthru
      _
    %p211 = scmp.le.s32.totalorder 1, %s12
    %p212 = scmp.lt.s32.totalorder %s12, 3
    %p213 = pnand %p211, %p212
    %p214 = pneg %p213
    // Predicated region
    $region41: #{_lambda_.3} parent=5 // pred_check
      _
    $region42: #{_lambda_.3} parent=5 // pred_check_branch
      %216 = sbr.rel (%p213) target = $region44
    $region43: #{_lambda_.3} parent=5 // pred_region
      %s217 = ssub.s32 %s12, 1
      %p218 = scmp.lt.s32.totalorder %s17, 1
      %s219 = scalar_select %p218, %s17, 1
      %s220 = smul.addr %s219, 2
      %s221 = smul.addr %s220, 8
      %s222 = scalar_lea.vmem %s0, %s221
      %p223 = pneg %p38
      %p224 = pneg %p35
      %p225 = pneg %p59
      %p226 = pneg %p56
      %p227 = pneg %p80
      %p228 = pneg %p77
      %p229 = pneg %p101
      %p230 = pneg %p98
      %p231 = pneg %p122
      %p232 = pneg %p119
      %p233 = pneg %p143
      %p234 = pneg %p140
      %p235 = pneg %p169
      %p236 = pneg %p166
      %p237 = scmp.lt.s32.totalorder %s17, 1
      %s238 = scalar_select %p237, %s17, 1
      %s239 = smul.addr %s238, 8
      %s240 = scalar_lea.vmem %s6, %s239
      %p241 = scmp.lt.s32.totalorder %s17, 1
      %s242 = scalar_select %p241, %s17, 1
      %s243 = smul.addr %s242, 2
      %s244 = smul.addr %s243, 8
      %s245 = scalar_lea.vmem %s0, %s244
      %p246 = scmp.lt.s32.totalorder %s17, 1
      %s247 = scalar_select %p246, %s17, 1
      %s248 = smul.addr %s247, 8
      %s249 = scalar_lea.vmem %s6, %s248
      %v251 = vld [vmem:[%s245] sm:$0x1f]
      %v252 = vld [vmem:[%s245 + $0x8] sm:$0x1f]
      %v253 = vpack.c.bf16 %v251, %v251
      %v254 = vpack.c.bf16 %v252, %v252
      %v255 = vld [vmem:[%s1] sm:$0xf]
      %v256 = vld [vmem:[%s1 + $0x4] sm:$0xf]
      %v257 = vld [vmem:[%s1 + $0x8] sm:$0xf]
      %v258 = vld [vmem:[%s1 + $0xc] sm:$0xf]
      %v259 = vld [vmem:[%s1 + $0x10] sm:$0xf]
      %v260 = vld [vmem:[%s1 + $0x14] sm:$0xf]
      %v261 = vld [vmem:[%s1 + $0x18] sm:$0xf]
      %v262 = vld [vmem:[%s1 + $0x1c] sm:$0xf]
      %v263 = vld [vmem:[%s1 + $0x20] sm:$0xf]
      %v264 = vld [vmem:[%s1 + $0x24] sm:$0xf]
      %v265 = vld [vmem:[%s1 + $0x28] sm:$0xf]
      %v266 = vld [vmem:[%s1 + $0x2c] sm:$0xf]
      %v267 = vld [vmem:[%s1 + $0x30] sm:$0xf]
      %v268 = vld [vmem:[%s1 + $0x34] sm:$0xf]
      %v269 = vld [vmem:[%s1 + $0x38] sm:$0xf]
      %v270 = vld [vmem:[%s1 + $0x3c] sm:$0xf]
      %v271 = vld [vmem:[%s1 + $0x40] sm:$0xf]
      %v272 = vld [vmem:[%s1 + $0x44] sm:$0xf]
      %v273 = vld [vmem:[%s1 + $0x48] sm:$0xf]
      %v274 = vld [vmem:[%s1 + $0x4c] sm:$0xf]
      %v275 = vld [vmem:[%s1 + $0x50] sm:$0xf]
      %v276 = vld [vmem:[%s1 + $0x54] sm:$0xf]
      %v277 = vld [vmem:[%s1 + $0x58] sm:$0xf]
      %v278 = vld [vmem:[%s1 + $0x5c] sm:$0xf]
      %v279 = vlaneseq
      %v280 = vshrl.u32 %v279, 7
      %vm281 = vcmp.eq.s32.totalorder %v280, 0
      %v282 = vld [vmem:[%s3] sm:$0x1f]
      %v283 = vld [vmem:[%s2] sm:$0x1]
      %v284 = vsel %vm281, 1, 0
      %vm285 = vcmp.eq.s32.totalorder %v284, 1
      %v287 = vperm.slane %v283, 0
      %v289 = vsel %vm285, %v287, 0.0
      %v290 = vadd.f32 %v282, %v289
      %v315 = vunpack.c.l.b16 %v255
      %v316 = vunpack.c.l.b16 %v256
      %v317 = vunpack.c.l.b16 %v257
      %v318 = vunpack.c.l.b16 %v258
      %v319 = vunpack.c.l.b16 %v259
      %v320 = vunpack.c.l.b16 %v260
      %v321 = vunpack.c.l.b16 %v261
      %v322 = vunpack.c.l.b16 %v262
      %v323 = vunpack.c.l.b16 %v263
      %v324 = vunpack.c.l.b16 %v264
      %v325 = vunpack.c.l.b16 %v265
      %v326 = vunpack.c.l.b16 %v266
      %v327 = vunpack.c.l.b16 %v267
      %v328 = vunpack.c.l.b16 %v268
      %v329 = vunpack.c.l.b16 %v269
      %v330 = vunpack.c.l.b16 %v270
      %v331 = vunpack.c.l.b16 %v271
      %v332 = vunpack.c.l.b16 %v272
      %v333 = vunpack.c.l.b16 %v273
      %v334 = vunpack.c.l.b16 %v274
      %v335 = vunpack.c.l.b16 %v275
      %v336 = vunpack.c.l.b16 %v276
      %v337 = vunpack.c.l.b16 %v277
      %v338 = vunpack.c.l.b16 %v278
      %v339 = vpack.c.b16 %v316, %v315
      %v340 = vpack.c.b16 %v318, %v317
      %v341 = vpack.c.b16 %v320, %v319
      %v342 = vpack.c.b16 %v322, %v321
      %v343 = vpack.c.b16 %v324, %v323
      %v344 = vpack.c.b16 %v326, %v325
      %v345 = vpack.c.b16 %v328, %v327
      %v346 = vpack.c.b16 %v330, %v329
      %v347 = vpack.c.b16 %v332, %v331
      %v348 = vpack.c.b16 %v334, %v333
      %v349 = vpack.c.b16 %v336, %v335
      %v350 = vpack.c.b16 %v338, %v337
      %vm363 = vcmask 523264
      %v365 = vsel %vm363, %v254, 0
      %367 = vmatpush.bf16.msra.mxu0 %v346
      %368 = vmatpush.bf16.msra.mxu0 %v345
      %369 = vmatpush.bf16.msra.mxu0 %v344
      %370 = vmatpush.bf16.msra.mxu0 %v343
      %371 = vmatpush.bf16.msra.mxu0 %v342
      %372 = vmatpush.bf16.msra.mxu0 %v341
      %373 = vmatpush.bf16.msra.mxu0 %v340
      %374 = vmatpush.bf16.msra.mxu0 %v339
      %375 = vmatmul.bf16.gmra.mxu0 %v253
      %v376 = vpop.f32.mrf.mxu0
      %v377 = vadd.f32 %v290, %v376
      %v378 = vpop.f32.mrf.mxu0
      %379 = vdwg.mxu0
      %380 = vmatpush.bf16.msra.mxu0 0
      %381 = vmatpush.bf16.msra.mxu0 0
      %382 = vmatpush.bf16.msra.mxu0 0
      %383 = vmatpush.bf16.msra.mxu0 0
      %384 = vmatpush.bf16.msra.mxu0 %v350
      %385 = vmatpush.bf16.msra.mxu0 %v349
      %386 = vmatpush.bf16.msra.mxu0 %v348
      %387 = vmatpush.bf16.msra.mxu0 %v347
      %388 = vmatmul.bf16.gmra.mxu0 %v365
      %v389 = vpop.f32.mrf.mxu0
      %v390 = vadd.f32 %v377, %v389
      %v391 = vpop.f32.mrf.mxu0
      %392 = vdwg.mxu0
      %v393 = vld [vmem:[%s4] sm:$0x1]
      %v394 = vld [vmem:[%s5] sm:$0x1]
      %vm395 = vcmask 258048
      %v396 = vsel %vm395, %v390, 0.0
      %397 = vadd.xlane.f32.xlu0 %v396
      %v398 = vpop.xlane.xlu0 %397
      %v399 = vrcp.pop 32.0
      %v400 = vmul.f32 32.0, %v399
      %v401 = vsub.f32 1.0, %v400
      %v402 = vmul.f32 %v399, %v401
      %v403 = vadd.f32 %v399, %v402
      %vm404 = vweird.f32 %v399
      %v405 = vsel %vm404, %v399, %v403
      %v406 = vmul.f32 %v398, %v405
      %v407 = vsub.f32 %v390, %v406
      %v408 = vmul.f32 %v407, %v407
      %v409 = vsel %vm395, %v408, 0.0
      %410 = vadd.xlane.f32.xlu0 %v409
      %v411 = vpop.xlane.xlu0 %410
      %v412 = vmul.f32 %v411, %v405
      %v413 = vadd.f32 %v412, 1e-05
      %v414 = vrsqrt.pop %v413
      %v415 = vmul.f32 %v414, %v413
      %v416 = vmul.f32 %v415, %v414
      %v417 = vmul.f32 0.5, %v416
      %v418 = vsub.f32 1.5, %v417
      %v419 = vmul.f32 %v414, %v418
      %vm420 = vweird.f32 %v413
      %vm421 = vweird.f32 %v414
      %vm422 = vmor %vm420, %vm421
      %v423 = vsel %vm422, %v414, %v419
      %v424 = vmul.f32 %v407, %v423
      %v426 = vperm.slane %v393, 0
      %v428 = vmul.f32 %v424, %v426
      %v430 = vperm.slane %v394, 0
      %v432 = vadd.f32 %v428, %v430
      %433 = vst.msk [vmem:[%s249] sm:$0x1f] %vm395, %v432
      %p434 = scmp.lt.s32.totalorder %s17, 1
      %s435 = scalar_select %p434, %s17, 1
      %s436 = smul.addr %s435, 8
      %s437 = scalar_lea.vmem %s6, %s436
      // Predicated region
      $region45: #{_lambda_.3} parent=43 // pred_check
        %p438 = pneg %p166
      $region46: #{_lambda_.3} parent=43 // pred_check_branch
        %440 = sbr.rel (%p438) target = $region48
      $region47: #{_lambda_.3} parent=43 // pred_region
        _
      $region48: #{_lambda_.3} parent=43 // pred_fallthru
        _
    $region44: #{_lambda_.3} parent=5 // pred_fallthru
      _
    %p441 = scmp.le.s32.totalorder 2, %s12
    // Predicated region
    $region49: #{_lambda_.3} parent=5 // pred_check
      %p442 = pneg %p441
    $region50: #{_lambda_.3} parent=5 // pred_check_branch
      %444 = sbr.rel (%p442) target = $region52
    $region51: #{_lambda_.3} parent=5 // pred_region
      %s445 = ssub.s32 %s12, 2
      // Predicated region
      $region53: #{_lambda_.3} parent=51 // pred_check
        %p446 = pneg %p172
      $region54: #{_lambda_.3} parent=51 // pred_check_branch
        %448 = sbr.rel (%p446) target = $region56
      $region55: #{_lambda_.3} parent=51 // pred_region
        %p449 = scmp.lt.s32.totalorder %s18, 1
        %s450 = scalar_select %p449, %s18, 1
        %s451 = smul.addr %s450, 8
        %s452 = scalar_lea.vmem %s6, %s451
      $region56: #{_lambda_.3} parent=51 // pred_fallthru
        _
    $region52: #{_lambda_.3} parent=5 // pred_fallthru
      _
  $region6: #{_lambda_.3} parent=0 // loop_footer
    %s16 = sadd.s32 1, %s12
  $region7: #{_lambda_.3} parent=0 // loop_footer_branch
    %11 = sbr.rel target = $region3
  $region8: #{_lambda_.3} parent=0 // loop_exit
    _

// kernel: _lambda_.4
$region0: #{_lambda_.4}
  #allocation0 [shape = 'u32[]', space=smem, size = 0x4, offset = 0x4, fixed_abs, tag = 'smem constant byte address 0x4 - core index']
  #allocation1 [shape = 'u32[72,128]{1,0:T(1,128)}', space=vmem, size = 0x9000, scoped, tag = 'internal scratch']
  #allocation2 [shape = 'f32[5,32]{1,0:T(8,128)}', space=vmem, size = 0x1000, scoped, tag = 'scratch operand']
  %s0 = inlined_call_operand.vmem [shape: f32[2,5,32], index: 0, kind: input, shape index: {}]
  %s1 = inlined_call_operand.vmem [shape: f32[2,1,32], index: 1, kind: input, shape index: {}]
  %s2 = inlined_call_operand.vmem [shape: f32[2,1,32], index: 2, kind: input, shape index: {}]
  %s3 = inlined_call_operand.vmem [shape: bf16[2,4,32,8], index: 3, kind: input, shape index: {}]
  %s4 = inlined_call_operand.vmem [shape: f32[2,4,1,8], index: 4, kind: input, shape index: {}]
  %s5 = inlined_call_operand.vmem [shape: bf16[2,4,32,8], index: 5, kind: input, shape index: {}]
  %s6 = inlined_call_operand.vmem [shape: f32[2,4,1,8], index: 6, kind: input, shape index: {}]
  %s7 = inlined_call_operand.vmem [shape: bf16[2,4,32,8], index: 7, kind: input, shape index: {}]
  %s8 = inlined_call_operand.vmem [shape: f32[2,4,1,8], index: 8, kind: input, shape index: {}]
  %s9 = inlined_call_operand.vmem [shape: bf16[2,4,8,32], index: 9, kind: input, shape index: {}]
  %s10 = inlined_call_operand.vmem [shape: f32[2,1,32], index: 10, kind: input, shape index: {}]
  %s11 = inlined_call_operand.vmem [shape: f32[2,1,32], index: 11, kind: input, shape index: {}]
  %s12 = inlined_call_operand.vmem [shape: f32[2,1,32], index: 12, kind: input, shape index: {}]
  %s13 = inlined_call_operand.vmem [shape: bf16[2,32,64], index: 13, kind: input, shape index: {}]
  %s14 = inlined_call_operand.vmem [shape: f32[2,1,64], index: 14, kind: input, shape index: {}]
  %s15 = inlined_call_operand.vmem [shape: bf16[2,64,32], index: 15, kind: input, shape index: {}]
  %s16 = inlined_call_operand.vmem [shape: f32[2,1,32], index: 16, kind: input, shape index: {}]
  %s17 = inlined_call_operand.vmem [shape: f32[2,5,32], index: 17, kind: output, shape index: {}]
  %s18 = sld [smem:[#allocation0]]
  $region109: #{_lambda_.4} parent=0
    _
  %s20 = ssub.s32 1, %s18
  %s21 = scalar_select 0, %s20, %s18
  loop: start=0, step=1, limit=6
  $region2: #{_lambda_.4} parent=0 // loop_pre_header
    _
  $region3: #{_lambda_.4} parent=0 // loop_header
    %s23 = sphi 0, %s27
    %p24 = scmp.ge.s32.totalorder %s23, 6
    %s30 = sphi 0, %s42
    %s31 = sphi 0, %s38
    %s32 = sphi 0, %s30
    %s33 = sphi 0, %s31
    %s34 = sphi 0, %s32
    %s35 = sphi 0, %s33
    %s45 = sphi 0, %s47
    %s48 = sphi 0, %s45
    %s49 = sphi 0, %s48
    %s65 = sphi 0, %s49
    %s71 = sphi 0, %s73
    %s74 = sphi 0, %s71
    %s75 = sphi 0, %s74
    %s91 = sphi 0, %s75
    %s97 = sphi 0, %s99
    %s100 = sphi 0, %s97
    %s101 = sphi 0, %s100
    %s117 = sphi 0, %s101
    %s123 = sphi 0, %s125
    %s126 = sphi 0, %s123
    %s127 = sphi 0, %s126
    %s143 = sphi 0, %s127
    %s149 = sphi 0, %s151
    %s152 = sphi 0, %s149
    %s153 = sphi 0, %s152
    %s169 = sphi 0, %s153
    %s175 = sphi 0, %s177
    %s178 = sphi 0, %s175
    %s179 = sphi 0, %s178
    %s195 = sphi 0, %s179
    %s201 = sphi 0, %s203
    %s204 = sphi 0, %s201
    %s205 = sphi 0, %s204
    %s221 = sphi 0, %s205
    %s227 = sphi 0, %s229
    %s230 = sphi 0, %s227
    %s231 = sphi 0, %s230
    %s247 = sphi 0, %s231
    %s253 = sphi 0, %s255
    %s256 = sphi 0, %s253
    %s257 = sphi 0, %s256
    %s273 = sphi 0, %s257
    %s279 = sphi 0, %s281
    %s282 = sphi 0, %s279
    %s283 = sphi 0, %s282
    %s299 = sphi 0, %s283
    %s305 = sphi 0, %s307
    %s308 = sphi 0, %s305
    %s309 = sphi 0, %s308
    %s325 = sphi 0, %s309
    %s331 = sphi 0, %s333
    %s334 = sphi 0, %s331
    %s335 = sphi 0, %s334
    %s351 = sphi 0, %s335
    %s357 = sphi 0, %s359
    %s360 = sphi 0, %s357
    %s361 = sphi 0, %s360
    %s377 = sphi 0, %s361
    %s383 = sphi 0, %s385
    %s386 = sphi 0, %s383
    %s387 = sphi 0, %s386
    %s403 = sphi 0, %s387
    %s409 = sphi 0, %s411
    %s412 = sphi 0, %s409
    %s413 = sphi 0, %s412
    %s429 = sphi 0, %s413
    %s435 = sphi 0, %s437
    %s438 = sphi 0, %s435
    %s439 = sphi 0, %s438
    %s455 = sphi 0, %s439
    %s461 = sphi 0, %s463
    %s464 = sphi 0, %s461
    %s465 = sphi 0, %s464
    %s481 = sphi 0, %s465
    %s487 = sphi 0, %s489
    %s490 = sphi 0, %s487
    %s491 = sphi 0, %s490
    %s507 = sphi 0, %s491
  $region4: #{_lambda_.4} parent=0 // loop_header_branch
    %26 = sbr.rel (%p24) target = $region8
  $region5: #{_lambda_.4} parent=0 // loop_body
    %s28 = ssub.s32 %s23, 1
    %s29 = ssub.s32 %s23, 2
    %s36 = sadd.s32 1, %s31
    %p37 = scmp.ge.s32.totalorder %s36, 2
    %s38 = scalar_select %p37, 0, %s36
    %s39 = sadd.s32 1, %s30
    %s40 = scalar_select %p37, %s39, %s30
    %p41 = scmp.ge.s32.totalorder %s40, 2
    %s42 = scalar_select %p41, 0, %s40
    %s43 = ssub.s32 %s30, %s42
    %p44 = scmp.eq.s32.totalorder %s43, 0
    %s46 = sadd.s32 %s45, 1
    %s47 = scalar_select %p44, %s45, %s46
    %p50 = pneg %p44
    %p51 = scmp.eq.s32.totalorder %s23, 3
    %p52 = por %p50, %p51
    %p53 = scmp.ne.s32.totalorder %s45, %s48
    %p54 = scmp.eq.s32.totalorder %s23, 0
    %p55 = por %p53, %p54
    %p56 = scmp.ne.s32.totalorder %s45, %s48
    %p57 = scmp.eq.s32.totalorder %s28, 3
    %p58 = por %p56, %p57
    %p59 = scmp.ne.s32.totalorder %s48, %s49
    %p60 = scmp.eq.s32.totalorder %s28, 0
    %p61 = por %p59, %p60
    %p62 = scmp.ne.s32.totalorder %s48, %s49
    %p63 = scmp.eq.s32.totalorder %s29, 3
    %p64 = por %p62, %p63
    %p66 = scmp.ne.s32.totalorder %s49, %s65
    %p67 = scmp.eq.s32.totalorder %s29, 0
    %p68 = por %p66, %p67
    %s69 = ssub.s32 %s31, %s38
    %p70 = scmp.eq.s32.totalorder %s69, 0
    %s72 = sadd.s32 %s71, 1
    %s73 = scalar_select %p70, %s71, %s72
    %p76 = pneg %p70
    %p77 = scmp.eq.s32.totalorder %s23, 3
    %p78 = por %p76, %p77
    %p79 = scmp.ne.s32.totalorder %s71, %s74
    %p80 = scmp.eq.s32.totalorder %s23, 0
    %p81 = por %p79, %p80
    %p82 = scmp.ne.s32.totalorder %s71, %s74
    %p83 = scmp.eq.s32.totalorder %s28, 3
    %p84 = por %p82, %p83
    %p85 = scmp.ne.s32.totalorder %s74, %s75
    %p86 = scmp.eq.s32.totalorder %s28, 0
    %p87 = por %p85, %p86
    %p88 = scmp.ne.s32.totalorder %s74, %s75
    %p89 = scmp.eq.s32.totalorder %s29, 3
    %p90 = por %p88, %p89
    %p92 = scmp.ne.s32.totalorder %s75, %s91
    %p93 = scmp.eq.s32.totalorder %s29, 0
    %p94 = por %p92, %p93
    %s95 = ssub.s32 %s31, %s38
    %p96 = scmp.eq.s32.totalorder %s95, 0
    %s98 = sadd.s32 %s97, 1
    %s99 = scalar_select %p96, %s97, %s98
    %p102 = pneg %p96
    %p103 = scmp.eq.s32.totalorder %s23, 3
    %p104 = por %p102, %p103
    %p105 = scmp.ne.s32.totalorder %s97, %s100
    %p106 = scmp.eq.s32.totalorder %s23, 0
    %p107 = por %p105, %p106
    %p108 = scmp.ne.s32.totalorder %s97, %s100
    %p109 = scmp.eq.s32.totalorder %s28, 3
    %p110 = por %p108, %p109
    %p111 = scmp.ne.s32.totalorder %s100, %s101
    %p112 = scmp.eq.s32.totalorder %s28, 0
    %p113 = por %p111, %p112
    %p114 = scmp.ne.s32.totalorder %s100, %s101
    %p115 = scmp.eq.s32.totalorder %s29, 3
    %p116 = por %p114, %p115
    %p118 = scmp.ne.s32.totalorder %s101, %s117
    %p119 = scmp.eq.s32.totalorder %s29, 0
    %p120 = por %p118, %p119
    %s121 = ssub.s32 %s31, %s38
    %p122 = scmp.eq.s32.totalorder %s121, 0
    %s124 = sadd.s32 %s123, 1
    %s125 = scalar_select %p122, %s123, %s124
    %p128 = pneg %p122
    %p129 = scmp.eq.s32.totalorder %s23, 3
    %p130 = por %p128, %p129
    %p131 = scmp.ne.s32.totalorder %s123, %s126
    %p132 = scmp.eq.s32.totalorder %s23, 0
    %p133 = por %p131, %p132
    %p134 = scmp.ne.s32.totalorder %s123, %s126
    %p135 = scmp.eq.s32.totalorder %s28, 3
    %p136 = por %p134, %p135
    %p137 = scmp.ne.s32.totalorder %s126, %s127
    %p138 = scmp.eq.s32.totalorder %s28, 0
    %p139 = por %p137, %p138
    %p140 = scmp.ne.s32.totalorder %s126, %s127
    %p141 = scmp.eq.s32.totalorder %s29, 3
    %p142 = por %p140, %p141
    %p144 = scmp.ne.s32.totalorder %s127, %s143
    %p145 = scmp.eq.s32.totalorder %s29, 0
    %p146 = por %p144, %p145
    %s147 = ssub.s32 %s31, %s38
    %p148 = scmp.eq.s32.totalorder %s147, 0
    %s150 = sadd.s32 %s149, 1
    %s151 = scalar_select %p148, %s149, %s150
    %p154 = pneg %p148
    %p155 = scmp.eq.s32.totalorder %s23, 3
    %p156 = por %p154, %p155
    %p157 = scmp.ne.s32.totalorder %s149, %s152
    %p158 = scmp.eq.s32.totalorder %s23, 0
    %p159 = por %p157, %p158
    %p160 = scmp.ne.s32.totalorder %s149, %s152
    %p161 = scmp.eq.s32.totalorder %s28, 3
    %p162 = por %p160, %p161
    %p163 = scmp.ne.s32.totalorder %s152, %s153
    %p164 = scmp.eq.s32.totalorder %s28, 0
    %p165 = por %p163, %p164
    %p166 = scmp.ne.s32.totalorder %s152, %s153
    %p167 = scmp.eq.s32.totalorder %s29, 3
    %p168 = por %p166, %p167
    %p170 = scmp.ne.s32.totalorder %s153, %s169
    %p171 = scmp.eq.s32.totalorder %s29, 0
    %p172 = por %p170, %p171
    %s173 = ssub.s32 %s31, %s38
    %p174 = scmp.eq.s32.totalorder %s173, 0
    %s176 = sadd.s32 %s175, 1
    %s177 = scalar_select %p174, %s175, %s176
    %p180 = pneg %p174
    %p181 = scmp.eq.s32.totalorder %s23, 3
    %p182 = por %p180, %p181
    %p183 = scmp.ne.s32.totalorder %s175, %s178
    %p184 = scmp.eq.s32.totalorder %s23, 0
    %p185 = por %p183, %p184
    %p186 = scmp.ne.s32.totalorder %s175, %s178
    %p187 = scmp.eq.s32.totalorder %s28, 3
    %p188 = por %p186, %p187
    %p189 = scmp.ne.s32.totalorder %s178, %s179
    %p190 = scmp.eq.s32.totalorder %s28, 0
    %p191 = por %p189, %p190
    %p192 = scmp.ne.s32.totalorder %s178, %s179
    %p193 = scmp.eq.s32.totalorder %s29, 3
    %p194 = por %p192, %p193
    %p196 = scmp.ne.s32.totalorder %s179, %s195
    %p197 = scmp.eq.s32.totalorder %s29, 0
    %p198 = por %p196, %p197
    %s199 = ssub.s32 %s31, %s38
    %p200 = scmp.eq.s32.totalorder %s199, 0
    %s202 = sadd.s32 %s201, 1
    %s203 = scalar_select %p200, %s201, %s202
    %p206 = pneg %p200
    %p207 = scmp.eq.s32.totalorder %s23, 3
    %p208 = por %p206, %p207
    %p209 = scmp.ne.s32.totalorder %s201, %s204
    %p210 = scmp.eq.s32.totalorder %s23, 0
    %p211 = por %p209, %p210
    %p212 = scmp.ne.s32.totalorder %s201, %s204
    %p213 = scmp.eq.s32.totalorder %s28, 3
    %p214 = por %p212, %p213
    %p215 = scmp.ne.s32.totalorder %s204, %s205
    %p216 = scmp.eq.s32.totalorder %s28, 0
    %p217 = por %p215, %p216
    %p218 = scmp.ne.s32.totalorder %s204, %s205
    %p219 = scmp.eq.s32.totalorder %s29, 3
    %p220 = por %p218, %p219
    %p222 = scmp.ne.s32.totalorder %s205, %s221
    %p223 = scmp.eq.s32.totalorder %s29, 0
    %p224 = por %p222, %p223
    %s225 = ssub.s32 %s31, %s38
    %p226 = scmp.eq.s32.totalorder %s225, 0
    %s228 = sadd.s32 %s227, 1
    %s229 = scalar_select %p226, %s227, %s228
    %p232 = pneg %p226
    %p233 = scmp.eq.s32.totalorder %s23, 3
    %p234 = por %p232, %p233
    %p235 = scmp.ne.s32.totalorder %s227, %s230
    %p236 = scmp.eq.s32.totalorder %s23, 0
    %p237 = por %p235, %p236
    %p238 = scmp.ne.s32.totalorder %s227, %s230
    %p239 = scmp.eq.s32.totalorder %s28, 3
    %p240 = por %p238, %p239
    %p241 = scmp.ne.s32.totalorder %s230, %s231
    %p242 = scmp.eq.s32.totalorder %s28, 0
    %p243 = por %p241, %p242
    %p244 = scmp.ne.s32.totalorder %s230, %s231
    %p245 = scmp.eq.s32.totalorder %s29, 3
    %p246 = por %p244, %p245
    %p248 = scmp.ne.s32.totalorder %s231, %s247
    %p249 = scmp.eq.s32.totalorder %s29, 0
    %p250 = por %p248, %p249
    %s251 = ssub.s32 %s31, %s38
    %p252 = scmp.eq.s32.totalorder %s251, 0
    %s254 = sadd.s32 %s253, 1
    %s255 = scalar_select %p252, %s253, %s254
    %p258 = pneg %p252
    %p259 = scmp.eq.s32.totalorder %s23, 3
    %p260 = por %p258, %p259
    %p261 = scmp.ne.s32.totalorder %s253, %s256
    %p262 = scmp.eq.s32.totalorder %s23, 0
    %p263 = por %p261, %p262
    %p264 = scmp.ne.s32.totalorder %s253, %s256
    %p265 = scmp.eq.s32.totalorder %s28, 3
    %p266 = por %p264, %p265
    %p267 = scmp.ne.s32.totalorder %s256, %s257
    %p268 = scmp.eq.s32.totalorder %s28, 0
    %p269 = por %p267, %p268
    %p270 = scmp.ne.s32.totalorder %s256, %s257
    %p271 = scmp.eq.s32.totalorder %s29, 3
    %p272 = por %p270, %p271
    %p274 = scmp.ne.s32.totalorder %s257, %s273
    %p275 = scmp.eq.s32.totalorder %s29, 0
    %p276 = por %p274, %p275
    %s277 = ssub.s32 %s31, %s38
    %p278 = scmp.eq.s32.totalorder %s277, 0
    %s280 = sadd.s32 %s279, 1
    %s281 = scalar_select %p278, %s279, %s280
    %p284 = pneg %p278
    %p285 = scmp.eq.s32.totalorder %s23, 3
    %p286 = por %p284, %p285
    %p287 = scmp.ne.s32.totalorder %s279, %s282
    %p288 = scmp.eq.s32.totalorder %s23, 0
    %p289 = por %p287, %p288
    %p290 = scmp.ne.s32.totalorder %s279, %s282
    %p291 = scmp.eq.s32.totalorder %s28, 3
    %p292 = por %p290, %p291
    %p293 = scmp.ne.s32.totalorder %s282, %s283
    %p294 = scmp.eq.s32.totalorder %s28, 0
    %p295 = por %p293, %p294
    %p296 = scmp.ne.s32.totalorder %s282, %s283
    %p297 = scmp.eq.s32.totalorder %s29, 3
    %p298 = por %p296, %p297
    %p300 = scmp.ne.s32.totalorder %s283, %s299
    %p301 = scmp.eq.s32.totalorder %s29, 0
    %p302 = por %p300, %p301
    %s303 = ssub.s32 %s31, %s38
    %p304 = scmp.eq.s32.totalorder %s303, 0
    %s306 = sadd.s32 %s305, 1
    %s307 = scalar_select %p304, %s305, %s306
    %p310 = pneg %p304
    %p311 = scmp.eq.s32.totalorder %s23, 3
    %p312 = por %p310, %p311
    %p313 = scmp.ne.s32.totalorder %s305, %s308
    %p314 = scmp.eq.s32.totalorder %s23, 0
    %p315 = por %p313, %p314
    %p316 = scmp.ne.s32.totalorder %s305, %s308
    %p317 = scmp.eq.s32.totalorder %s28, 3
    %p318 = por %p316, %p317
    %p319 = scmp.ne.s32.totalorder %s308, %s309
    %p320 = scmp.eq.s32.totalorder %s28, 0
    %p321 = por %p319, %p320
    %p322 = scmp.ne.s32.totalorder %s308, %s309
    %p323 = scmp.eq.s32.totalorder %s29, 3
    %p324 = por %p322, %p323
    %p326 = scmp.ne.s32.totalorder %s309, %s325
    %p327 = scmp.eq.s32.totalorder %s29, 0
    %p328 = por %p326, %p327
    %s329 = ssub.s32 %s31, %s38
    %p330 = scmp.eq.s32.totalorder %s329, 0
    %s332 = sadd.s32 %s331, 1
    %s333 = scalar_select %p330, %s331, %s332
    %p336 = pneg %p330
    %p337 = scmp.eq.s32.totalorder %s23, 3
    %p338 = por %p336, %p337
    %p339 = scmp.ne.s32.totalorder %s331, %s334
    %p340 = scmp.eq.s32.totalorder %s23, 0
    %p341 = por %p339, %p340
    %p342 = scmp.ne.s32.totalorder %s331, %s334
    %p343 = scmp.eq.s32.totalorder %s28, 3
    %p344 = por %p342, %p343
    %p345 = scmp.ne.s32.totalorder %s334, %s335
    %p346 = scmp.eq.s32.totalorder %s28, 0
    %p347 = por %p345, %p346
    %p348 = scmp.ne.s32.totalorder %s334, %s335
    %p349 = scmp.eq.s32.totalorder %s29, 3
    %p350 = por %p348, %p349
    %p352 = scmp.ne.s32.totalorder %s335, %s351
    %p353 = scmp.eq.s32.totalorder %s29, 0
    %p354 = por %p352, %p353
    %s355 = ssub.s32 %s31, %s38
    %p356 = scmp.eq.s32.totalorder %s355, 0
    %s358 = sadd.s32 %s357, 1
    %s359 = scalar_select %p356, %s357, %s358
    %p362 = pneg %p356
    %p363 = scmp.eq.s32.totalorder %s23, 3
    %p364 = por %p362, %p363
    %p365 = scmp.ne.s32.totalorder %s357, %s360
    %p366 = scmp.eq.s32.totalorder %s23, 0
    %p367 = por %p365, %p366
    %p368 = scmp.ne.s32.totalorder %s357, %s360
    %p369 = scmp.eq.s32.totalorder %s28, 3
    %p370 = por %p368, %p369
    %p371 = scmp.ne.s32.totalorder %s360, %s361
    %p372 = scmp.eq.s32.totalorder %s28, 0
    %p373 = por %p371, %p372
    %p374 = scmp.ne.s32.totalorder %s360, %s361
    %p375 = scmp.eq.s32.totalorder %s29, 3
    %p376 = por %p374, %p375
    %p378 = scmp.ne.s32.totalorder %s361, %s377
    %p379 = scmp.eq.s32.totalorder %s29, 0
    %p380 = por %p378, %p379
    %s381 = ssub.s32 %s31, %s38
    %p382 = scmp.eq.s32.totalorder %s381, 0
    %s384 = sadd.s32 %s383, 1
    %s385 = scalar_select %p382, %s383, %s384
    %p388 = pneg %p382
    %p389 = scmp.eq.s32.totalorder %s23, 3
    %p390 = por %p388, %p389
    %p391 = scmp.ne.s32.totalorder %s383, %s386
    %p392 = scmp.eq.s32.totalorder %s23, 0
    %p393 = por %p391, %p392
    %p394 = scmp.ne.s32.totalorder %s383, %s386
    %p395 = scmp.eq.s32.totalorder %s28, 3
    %p396 = por %p394, %p395
    %p397 = scmp.ne.s32.totalorder %s386, %s387
    %p398 = scmp.eq.s32.totalorder %s28, 0
    %p399 = por %p397, %p398
    %p400 = scmp.ne.s32.totalorder %s386, %s387
    %p401 = scmp.eq.s32.totalorder %s29, 3
    %p402 = por %p400, %p401
    %p404 = scmp.ne.s32.totalorder %s387, %s403
    %p405 = scmp.eq.s32.totalorder %s29, 0
    %p406 = por %p404, %p405
    %s407 = ssub.s32 %s31, %s38
    %p408 = scmp.eq.s32.totalorder %s407, 0
    %s410 = sadd.s32 %s409, 1
    %s411 = scalar_select %p408, %s409, %s410
    %p414 = pneg %p408
    %p415 = scmp.eq.s32.totalorder %s23, 3
    %p416 = por %p414, %p415
    %p417 = scmp.ne.s32.totalorder %s409, %s412
    %p418 = scmp.eq.s32.totalorder %s23, 0
    %p419 = por %p417, %p418
    %p420 = scmp.ne.s32.totalorder %s409, %s412
    %p421 = scmp.eq.s32.totalorder %s28, 3
    %p422 = por %p420, %p421
    %p423 = scmp.ne.s32.totalorder %s412, %s413
    %p424 = scmp.eq.s32.totalorder %s28, 0
    %p425 = por %p423, %p424
    %p426 = scmp.ne.s32.totalorder %s412, %s413
    %p427 = scmp.eq.s32.totalorder %s29, 3
    %p428 = por %p426, %p427
    %p430 = scmp.ne.s32.totalorder %s413, %s429
    %p431 = scmp.eq.s32.totalorder %s29, 0
    %p432 = por %p430, %p431
    %s433 = ssub.s32 %s31, %s38
    %p434 = scmp.eq.s32.totalorder %s433, 0
    %s436 = sadd.s32 %s435, 1
    %s437 = scalar_select %p434, %s435, %s436
    %p440 = pneg %p434
    %p441 = scmp.eq.s32.totalorder %s23, 3
    %p442 = por %p440, %p441
    %p443 = scmp.ne.s32.totalorder %s435, %s438
    %p444 = scmp.eq.s32.totalorder %s23, 0
    %p445 = por %p443, %p444
    %p446 = scmp.ne.s32.totalorder %s435, %s438
    %p447 = scmp.eq.s32.totalorder %s28, 3
    %p448 = por %p446, %p447
    %p449 = scmp.ne.s32.totalorder %s438, %s439
    %p450 = scmp.eq.s32.totalorder %s28, 0
    %p451 = por %p449, %p450
    %p452 = scmp.ne.s32.totalorder %s438, %s439
    %p453 = scmp.eq.s32.totalorder %s29, 3
    %p454 = por %p452, %p453
    %p456 = scmp.ne.s32.totalorder %s439, %s455
    %p457 = scmp.eq.s32.totalorder %s29, 0
    %p458 = por %p456, %p457
    %s459 = ssub.s32 %s31, %s38
    %p460 = scmp.eq.s32.totalorder %s459, 0
    %s462 = sadd.s32 %s461, 1
    %s463 = scalar_select %p460, %s461, %s462
    %p466 = pneg %p460
    %p467 = scmp.eq.s32.totalorder %s23, 3
    %p468 = por %p466, %p467
    %p469 = scmp.ne.s32.totalorder %s461, %s464
    %p470 = scmp.eq.s32.totalorder %s23, 0
    %p471 = por %p469, %p470
    %p472 = scmp.ne.s32.totalorder %s461, %s464
    %p473 = scmp.eq.s32.totalorder %s28, 3
    %p474 = por %p472, %p473
    %p475 = scmp.ne.s32.totalorder %s464, %s465
    %p476 = scmp.eq.s32.totalorder %s28, 0
    %p477 = por %p475, %p476
    %p478 = scmp.ne.s32.totalorder %s464, %s465
    %p479 = scmp.eq.s32.totalorder %s29, 3
    %p480 = por %p478, %p479
    %p482 = scmp.ne.s32.totalorder %s465, %s481
    %p483 = scmp.eq.s32.totalorder %s29, 0
    %p484 = por %p482, %p483
    %s485 = ssub.s32 %s30, %s42
    %p486 = scmp.eq.s32.totalorder %s485, 0
    %s488 = sadd.s32 %s487, 1
    %s489 = scalar_select %p486, %s487, %s488
    %p492 = pneg %p486
    %p493 = scmp.eq.s32.totalorder %s23, 3
    %p494 = por %p492, %p493
    %p495 = scmp.ne.s32.totalorder %s487, %s490
    %p496 = scmp.eq.s32.totalorder %s23, 0
    %p497 = por %p495, %p496
    %p498 = scmp.ne.s32.totalorder %s487, %s490
    %p499 = scmp.eq.s32.totalorder %s28, 3
    %p500 = por %p498, %p499
    %p501 = scmp.ne.s32.totalorder %s490, %s491
    %p502 = scmp.eq.s32.totalorder %s28, 0
    %p503 = por %p501, %p502
    %p504 = scmp.ne.s32.totalorder %s490, %s491
    %p505 = scmp.eq.s32.totalorder %s29, 3
    %p506 = por %p504, %p505
    %p508 = scmp.ne.s32.totalorder %s491, %s507
    %p509 = scmp.eq.s32.totalorder %s29, 0
    %p510 = por %p508, %p509
    %p511 = scmp.le.s32.totalorder 1, %s23
    %p512 = scmp.lt.s32.totalorder %s23, 5
    %p513 = pnand %p511, %p512
    %p514 = pneg %p513
    // Predicated region
    $region9: #{_lambda_.4} parent=5 // pred_check
      _
    $region10: #{_lambda_.4} parent=5 // pred_check_branch
      %516 = sbr.rel (%p513) target = $region12
    $region11: #{_lambda_.4} parent=5 // pred_region
      %s517 = ssub.s32 %s23, 1
    $region12: #{_lambda_.4} parent=5 // pred_fallthru
      _
    %p518 = scmp.lt.s32.totalorder %s23, 4
    // Predicated region
    $region13: #{_lambda_.4} parent=5 // pred_check
      %p519 = pneg %p518
    $region14: #{_lambda_.4} parent=5 // pred_check_branch
      %521 = sbr.rel (%p519) target = $region16
    $region15: #{_lambda_.4} parent=5 // pred_region
      // Predicated region
      $region17: #{_lambda_.4} parent=15 // pred_check
        %p522 = pneg %p55
      $region18: #{_lambda_.4} parent=15 // pred_check_branch
        %524 = sbr.rel (%p522) target = $region20
      $region19: #{_lambda_.4} parent=15 // pred_region
        %p525 = scmp.lt.s32.totalorder %s30, 1
        %s526 = scalar_select %p525, %s30, 1
        %s527 = smul.addr %s526, 8
        %s528 = scalar_lea.vmem %s0, %s527
      $region20: #{_lambda_.4} parent=15 // pred_fallthru
        _
      // Predicated region
      $region21: #{_lambda_.4} parent=15 // pred_check
        %p529 = pneg %p81
      $region22: #{_lambda_.4} parent=15 // pred_check_branch
        %531 = sbr.rel (%p529) target = $region24
      $region23: #{_lambda_.4} parent=15 // pred_region
        %p532 = scmp.lt.s32.totalorder %s31, 1
        %s533 = scalar_select %p532, %s31, 1
        %s534 = scalar_lea.vmem %s1, %s533
      $region24: #{_lambda_.4} parent=15 // pred_fallthru
        _
      // Predicated region
      $region25: #{_lambda_.4} parent=15 // pred_check
        %p535 = pneg %p107
      $region26: #{_lambda_.4} parent=15 // pred_check_branch
        %537 = sbr.rel (%p535) target = $region28
      $region27: #{_lambda_.4} parent=15 // pred_region
        %p538 = scmp.lt.s32.totalorder %s31, 1
        %s539 = scalar_select %p538, %s31, 1
        %s540 = scalar_lea.vmem %s2, %s539
      $region28: #{_lambda_.4} parent=15 // pred_fallthru
        _
      // Predicated region
      $region29: #{_lambda_.4} parent=15 // pred_check
        %p541 = pneg %p133
      $region30: #{_lambda_.4} parent=15 // pred_check_branch
        %543 = sbr.rel (%p541) target = $region32
      $region31: #{_lambda_.4} parent=15 // pred_region
        %p544 = scmp.lt.s32.totalorder %s31, 1
        %s545 = scalar_select %p544, %s31, 1
        %s546 = smul.addr %s545, 16
        %s547 = smul.addr %s546, 4
        %s548 = scalar_lea.vmem %s3, %s547
      $region32: #{_lambda_.4} parent=15 // pred_fallthru
        _
      // Predicated region
      $region33: #{_lambda_.4} parent=15 // pred_check
        %p549 = pneg %p159
      $region34: #{_lambda_.4} parent=15 // pred_check_branch
        %551 = sbr.rel (%p549) target = $region36
      $region35: #{_lambda_.4} parent=15 // pred_region
        %p552 = scmp.lt.s32.totalorder %s31, 1
        %s553 = scalar_select %p552, %s31, 1
        %s554 = smul.addr %s553, 4
        %s555 = scalar_lea.vmem %s4, %s554
      $region36: #{_lambda_.4} parent=15 // pred_fallthru
        _
      // Predicated region
      $region37: #{_lambda_.4} parent=15 // pred_check
        %p556 = pneg %p185
      $region38: #{_lambda_.4} parent=15 // pred_check_branch
        %558 = sbr.rel (%p556) target = $region40
      $region39: #{_lambda_.4} parent=15 // pred_region
        %p559 = scmp.lt.s32.totalorder %s31, 1
        %s560 = scalar_select %p559, %s31, 1
        %s561 = smul.addr %s560, 16
        %s562 = smul.addr %s561, 4
        %s563 = scalar_lea.vmem %s5, %s562
      $region40: #{_lambda_.4} parent=15 // pred_fallthru
        _
      // Predicated region
      $region41: #{_lambda_.4} parent=15 // pred_check
        %p564 = pneg %p211
      $region42: #{_lambda_.4} parent=15 // pred_check_branch
        %566 = sbr.rel (%p564) target = $region44
      $region43: #{_lambda_.4} parent=15 // pred_region
        %p567 = scmp.lt.s32.totalorder %s31, 1
        %s568 = scalar_select %p567, %s31, 1
        %s569 = smul.addr %s568, 4
        %s570 = scalar_lea.vmem %s6, %s569
      $region44: #{_lambda_.4} parent=15 // pred_fallthru
        _
      // Predicated region
      $region45: #{_lambda_.4} parent=15 // pred_check
        %p571 = pneg %p237
      $region46: #{_lambda_.4} parent=15 // pred_check_branch
        %573 = sbr.rel (%p571) target = $region48
      $region47: #{_lambda_.4} parent=15 // pred_region
        %p574 = scmp.lt.s32.totalorder %s31, 1
        %s575 = scalar_select %p574, %s31, 1
        %s576 = smul.addr %s575, 16
        %s577 = smul.addr %s576, 4
        %s578 = scalar_lea.vmem %s7, %s577
      $region48: #{_lambda_.4} parent=15 // pred_fallthru
        _
      // Predicated region
      $region49: #{_lambda_.4} parent=15 // pred_check
        %p579 = pneg %p263
      $region50: #{_lambda_.4} parent=15 // pred_check_branch
        %581 = sbr.rel (%p579) target = $region52
      $region51: #{_lambda_.4} parent=15 // pred_region
        %p582 = scmp.lt.s32.totalorder %s31, 1
        %s583 = scalar_select %p582, %s31, 1
        %s584 = smul.addr %s583, 4
        %s585 = scalar_lea.vmem %s8, %s584
      $region52: #{_lambda_.4} parent=15 // pred_fallthru
        _
      // Predicated region
      $region53: #{_lambda_.4} parent=15 // pred_check
        %p586 = pneg %p289
      $region54: #{_lambda_.4} parent=15 // pred_check_branch
        %588 = sbr.rel (%p586) target = $region56
      $region55: #{_lambda_.4} parent=15 // pred_region
        %p589 = scmp.lt.s32.totalorder %s31, 1
        %s590 = scalar_select %p589, %s31, 1
        %s591 = smul.addr %s590, 4
        %s592 = smul.addr %s591, 4
        %s593 = scalar_lea.vmem %s9, %s592
      $region56: #{_lambda_.4} parent=15 // pred_fallthru
        _
      // Predicated region
      $region57: #{_lambda_.4} parent=15 // pred_check
        %p594 = pneg %p315
      $region58: #{_lambda_.4} parent=15 // pred_check_branch
        %596 = sbr.rel (%p594) target = $region60
      $region59: #{_lambda_.4} parent=15 // pred_region
        %p597 = scmp.lt.s32.totalorder %s31, 1
        %s598 = scalar_select %p597, %s31, 1
        %s599 = scalar_lea.vmem %s10, %s598
      $region60: #{_lambda_.4} parent=15 // pred_fallthru
        _
      // Predicated region
      $region61: #{_lambda_.4} parent=15 // pred_check
        %p600 = pneg %p341
      $region62: #{_lambda_.4} parent=15 // pred_check_branch
        %602 = sbr.rel (%p600) target = $region64
      $region63: #{_lambda_.4} parent=15 // pred_region
        %p603 = scmp.lt.s32.totalorder %s31, 1
        %s604 = scalar_select %p603, %s31, 1
        %s605 = scalar_lea.vmem %s11, %s604
      $region64: #{_lambda_.4} parent=15 // pred_fallthru
        _
      // Predicated region
      $region65: #{_lambda_.4} parent=15 // pred_check
        %p606 = pneg %p367
      $region66: #{_lambda_.4} parent=15 // pred_check_branch
        %608 = sbr.rel (%p606) target = $region68
      $region67: #{_lambda_.4} parent=15 // pred_region
        %p609 = scmp.lt.s32.totalorder %s31, 1
        %s610 = scalar_select %p609, %s31, 1
        %s611 = scalar_lea.vmem %s12, %s610
      $region68: #{_lambda_.4} parent=15 // pred_fallthru
        _
      // Predicated region
      $region69: #{_lambda_.4} parent=15 // pred_check
        %p612 = pneg %p393
      $region70: #{_lambda_.4} parent=15 // pred_check_branch
        %614 = sbr.rel (%p612) target = $region72
      $region71: #{_lambda_.4} parent=15 // pred_region
        %p615 = scmp.lt.s32.totalorder %s31, 1
        %s616 = scalar_select %p615, %s31, 1
        %s617 = smul.addr %s616, 4
        %s618 = smul.addr %s617, 4
        %s619 = scalar_lea.vmem %s13, %s618
      $region72: #{_lambda_.4} parent=15 // pred_fallthru
        _
      // Predicated region
      $region73: #{_lambda_.4} parent=15 // pred_check
        %p620 = pneg %p419
      $region74: #{_lambda_.4} parent=15 // pred_check_branch
        %622 = sbr.rel (%p620) target = $region76
      $region75: #{_lambda_.4} parent=15 // pred_region
        %p623 = scmp.lt.s32.totalorder %s31, 1
        %s624 = scalar_select %p623, %s31, 1
        %s625 = scalar_lea.vmem %s14, %s624
      $region76: #{_lambda_.4} parent=15 // pred_fallthru
        _
      // Predicated region
      $region77: #{_lambda_.4} parent=15 // pred_check
        %p626 = pneg %p445
      $region78: #{_lambda_.4} parent=15 // pred_check_branch
        %628 = sbr.rel (%p626) target = $region80
      $region79: #{_lambda_.4} parent=15 // pred_region
        %p629 = scmp.lt.s32.totalorder %s31, 1
        %s630 = scalar_select %p629, %s31, 1
        %s631 = smul.addr %s630, 8
        %s632 = smul.addr %s631, 4
        %s633 = scalar_lea.vmem %s15, %s632
      $region80: #{_lambda_.4} parent=15 // pred_fallthru
        _
      // Predicated region
      $region81: #{_lambda_.4} parent=15 // pred_check
        %p634 = pneg %p471
      $region82: #{_lambda_.4} parent=15 // pred_check_branch
        %636 = sbr.rel (%p634) target = $region84
      $region83: #{_lambda_.4} parent=15 // pred_region
        %p637 = scmp.lt.s32.totalorder %s31, 1
        %s638 = scalar_select %p637, %s31, 1
        %s639 = scalar_lea.vmem %s16, %s638
      $region84: #{_lambda_.4} parent=15 // pred_fallthru
        _
    $region16: #{_lambda_.4} parent=5 // pred_fallthru
      _
    %p640 = scmp.le.s32.totalorder 1, %s23
    %p641 = scmp.lt.s32.totalorder %s23, 5
    %p642 = pnand %p640, %p641
    %p643 = pneg %p642
    // Predicated region
    $region85: #{_lambda_.4} parent=5 // pred_check
      _
    $region86: #{_lambda_.4} parent=5 // pred_check_branch
      %645 = sbr.rel (%p642) target = $region88
    $region87: #{_lambda_.4} parent=5 // pred_region
      %s646 = ssub.s32 %s23, 1
      %p647 = scmp.lt.s32.totalorder %s32, 1
      %s648 = scalar_select %p647, %s32, 1
      %s649 = smul.addr %s648, 8
      %s650 = scalar_lea.vmem %s0, %s649
      %p651 = pneg %p61
      %p652 = pneg %p58
      %p653 = scmp.lt.s32.totalorder %s33, 1
      %s654 = scalar_select %p653, %s33, 1
      %s655 = scalar_lea.vmem %s1, %s654
      %p656 = pneg %p87
      %p657 = pneg %p84
      %p658 = scmp.lt.s32.totalorder %s33, 1
      %s659 = scalar_select %p658, %s33, 1
      %s660 = scalar_lea.vmem %s2, %s659
      %p661 = pneg %p113
      %p662 = pneg %p110
      %p663 = scmp.lt.s32.totalorder %s33, 1
      %s664 = scalar_select %p663, %s33, 1
      %s665 = smul.addr %s664, 16
      %s666 = smul.addr %s665, 4
      %s667 = scalar_lea.vmem %s3, %s666
      %p668 = pneg %p139
      %p669 = pneg %p136
      %p670 = scmp.lt.s32.totalorder %s33, 1
      %s671 = scalar_select %p670, %s33, 1
      %s672 = smul.addr %s671, 4
      %s673 = scalar_lea.vmem %s4, %s672
      %p674 = pneg %p165
      %p675 = pneg %p162
      %p676 = scmp.lt.s32.totalorder %s33, 1
      %s677 = scalar_select %p676, %s33, 1
      %s678 = smul.addr %s677, 16
      %s679 = smul.addr %s678, 4
      %s680 = scalar_lea.vmem %s5, %s679
      %p681 = pneg %p191
      %p682 = pneg %p188
      %p683 = scmp.lt.s32.totalorder %s33, 1
      %s684 = scalar_select %p683, %s33, 1
      %s685 = smul.addr %s684, 4
      %s686 = scalar_lea.vmem %s6, %s685
      %p687 = pneg %p217
      %p688 = pneg %p214
      %p689 = scmp.lt.s32.totalorder %s33, 1
      %s690 = scalar_select %p689, %s33, 1
      %s691 = smul.addr %s690, 16
      %s692 = smul.addr %s691, 4
      %s693 = scalar_lea.vmem %s7, %s692
      %p694 = pneg %p243
      %p695 = pneg %p240
      %p696 = scmp.lt.s32.totalorder %s33, 1
      %s697 = scalar_select %p696, %s33, 1
      %s698 = smul.addr %s697, 4
      %s699 = scalar_lea.vmem %s8, %s698
      %p700 = pneg %p269
      %p701 = pneg %p266
      %p702 = scmp.lt.s32.totalorder %s33, 1
      %s703 = scalar_select %p702, %s33, 1
      %s704 = smul.addr %s703, 4
      %s705 = smul.addr %s704, 4
      %s706 = scalar_lea.vmem %s9, %s705
      %p707 = pneg %p295
      %p708 = pneg %p292
      %p709 = scmp.lt.s32.totalorder %s33, 1
      %s710 = scalar_select %p709, %s33, 1
      %s711 = scalar_lea.vmem %s10, %s710
      %p712 = pneg %p321
      %p713 = pneg %p318
      %p714 = scmp.lt.s32.totalorder %s33, 1
      %s715 = scalar_select %p714, %s33, 1
      %s716 = scalar_lea.vmem %s11, %s715
      %p717 = pneg %p347
      %p718 = pneg %p344
      %p719 = scmp.lt.s32.totalorder %s33, 1
      %s720 = scalar_select %p719, %s33, 1
      %s721 = scalar_lea.vmem %s12, %s720
      %p722 = pneg %p373
      %p723 = pneg %p370
      %p724 = scmp.lt.s32.totalorder %s33, 1
      %s725 = scalar_select %p724, %s33, 1
      %s726 = smul.addr %s725, 4
      %s727 = smul.addr %s726, 4
      %s728 = scalar_lea.vmem %s13, %s727
      %p729 = pneg %p399
      %p730 = pneg %p396
      %p731 = scmp.lt.s32.totalorder %s33, 1
      %s732 = scalar_select %p731, %s33, 1
      %s733 = scalar_lea.vmem %s14, %s732
      %p734 = pneg %p425
      %p735 = pneg %p422
      %p736 = scmp.lt.s32.totalorder %s33, 1
      %s737 = scalar_select %p736, %s33, 1
      %s738 = smul.addr %s737, 8
      %s739 = smul.addr %s738, 4
      %s740 = scalar_lea.vmem %s15, %s739
      %p741 = pneg %p451
      %p742 = pneg %p448
      %p743 = scmp.lt.s32.totalorder %s33, 1
      %s744 = scalar_select %p743, %s33, 1
      %s745 = scalar_lea.vmem %s16, %s744
      %p746 = pneg %p477
      %p747 = pneg %p474
      %p748 = pneg %p503
      %p749 = pneg %p500
      %p750 = scmp.lt.s32.totalorder %s32, 1
      %s751 = scalar_select %p750, %s32, 1
      %s752 = smul.addr %s751, 8
      %s753 = scalar_lea.vmem %s17, %s752
      %p754 = scmp.lt.s32.totalorder %s32, 1
      %s755 = scalar_select %p754, %s32, 1
      %s756 = smul.addr %s755, 8
      %s757 = scalar_lea.vmem %s0, %s756
      %p758 = scmp.lt.s32.totalorder %s33, 1
      %s759 = scalar_select %p758, %s33, 1
      %s760 = scalar_lea.vmem %s1, %s759
      %p761 = scmp.lt.s32.totalorder %s33, 1
      %s762 = scalar_select %p761, %s33, 1
      %s763 = scalar_lea.vmem %s2, %s762
      %p764 = scmp.lt.s32.totalorder %s33, 1
      %s765 = scalar_select %p764, %s33, 1
      %s766 = smul.addr %s765, 16
      %s767 = smul.addr %s766, 4
      %s768 = scalar_lea.vmem %s3, %s767
      %p769 = scmp.lt.s32.totalorder %s33, 1
      %s770 = scalar_select %p769, %s33, 1
      %s771 = smul.addr %s770, 4
      %s772 = scalar_lea.vmem %s4, %s771
      %p773 = scmp.lt.s32.totalorder %s33, 1
      %s774 = scalar_select %p773, %s33, 1
      %s775 = smul.addr %s774, 16
      %s776 = smul.addr %s775, 4
      %s777 = scalar_lea.vmem %s5, %s776
      %p778 = scmp.lt.s32.totalorder %s33, 1
      %s779 = scalar_select %p778, %s33, 1
      %s780 = smul.addr %s779, 4
      %s781 = scalar_lea.vmem %s6, %s780
      %p782 = scmp.lt.s32.totalorder %s33, 1
      %s783 = scalar_select %p782, %s33, 1
      %s784 = smul.addr %s783, 16
      %s785 = smul.addr %s784, 4
      %s786 = scalar_lea.vmem %s7, %s785
      %p787 = scmp.lt.s32.totalorder %s33, 1
      %s788 = scalar_select %p787, %s33, 1
      %s789 = smul.addr %s788, 4
      %s790 = scalar_lea.vmem %s8, %s789
      %p791 = scmp.lt.s32.totalorder %s33, 1
      %s792 = scalar_select %p791, %s33, 1
      %s793 = smul.addr %s792, 4
      %s794 = smul.addr %s793, 4
      %s795 = scalar_lea.vmem %s9, %s794
      %p796 = scmp.lt.s32.totalorder %s33, 1
      %s797 = scalar_select %p796, %s33, 1
      %s798 = scalar_lea.vmem %s10, %s797
      %p799 = scmp.lt.s32.totalorder %s33, 1
      %s800 = scalar_select %p799, %s33, 1
      %s801 = scalar_lea.vmem %s11, %s800
      %p802 = scmp.lt.s32.totalorder %s33, 1
      %s803 = scalar_select %p802, %s33, 1
      %s804 = scalar_lea.vmem %s12, %s803
      %p805 = scmp.lt.s32.totalorder %s33, 1
      %s806 = scalar_select %p805, %s33, 1
      %s807 = smul.addr %s806, 4
      %s808 = smul.addr %s807, 4
      %s809 = scalar_lea.vmem %s13, %s808
      %p810 = scmp.lt.s32.totalorder %s33, 1
      %s811 = scalar_select %p810, %s33, 1
      %s812 = scalar_lea.vmem %s14, %s811
      %p813 = scmp.lt.s32.totalorder %s33, 1
      %s814 = scalar_select %p813, %s33, 1
      %s815 = smul.addr %s814, 8
      %s816 = smul.addr %s815, 4
      %s817 = scalar_lea.vmem %s15, %s816
      %p818 = scmp.lt.s32.totalorder %s33, 1
      %s819 = scalar_select %p818, %s33, 1
      %s820 = scalar_lea.vmem %s16, %s819
      %p821 = scmp.lt.s32.totalorder %s32, 1
      %s822 = scalar_select %p821, %s32, 1
      %s823 = smul.addr %s822, 8
      %s824 = scalar_lea.vmem %s17, %s823
      %p826 = scmp.eq.s32.totalorder %s33, 0
      // Predicated region
      $region89: #{_lambda_.4} parent=87 // pred_check
        %p827 = pneg %p826
      $region90: #{_lambda_.4} parent=87 // pred_check_branch
        %829 = sbr.rel (%p827) target = $region92
      $region91: #{_lambda_.4} parent=87 // pred_region
        %v830 = vld [vmem:[%s757] sm:$0x1f]
        %vm831 = vcmask 258048
        %832 = vst.msk [vmem:[#allocation2] sm:$0x1f] %vm831, %v830
      $region92: #{_lambda_.4} parent=87 // pred_fallthru
        _
      %v833 = vld [vmem:[#allocation2] sm:$0x1f]
      %v834 = vld [vmem:[%s760] sm:$0x1]
      %v835 = vld [vmem:[%s763] sm:$0x1]
      %vm836 = vcmask 258048
      %v837 = vsel %vm836, %v833, 0.0
      %838 = vadd.xlane.f32.xlu0 %v837
      %v839 = vpop.xlane.xlu0 %838
      %v840 = vrcp.pop 32.0
      %v841 = vmul.f32 32.0, %v840
      %v842 = vsub.f32 1.0, %v841
      %v843 = vmul.f32 %v840, %v842
      %v844 = vadd.f32 %v840, %v843
      %vm845 = vweird.f32 %v840
      %v846 = vsel %vm845, %v840, %v844
      %v847 = vmul.f32 %v839, %v846
      %v848 = vsub.f32 %v833, %v847
      %v849 = vmul.f32 %v848, %v848
      %v850 = vsel %vm836, %v849, 0.0
      %851 = vadd.xlane.f32.xlu0 %v850
      %v852 = vpop.xlane.xlu0 %851
      %v853 = vmul.f32 %v852, %v846
      %v854 = vadd.f32 %v853, 1e-05
      %v855 = vrsqrt.pop %v854
      %v856 = vmul.f32 %v855, %v854
      %v857 = vmul.f32 %v856, %v855
      %v858 = vmul.f32 0.5, %v857
      %v859 = vsub.f32 1.5, %v858
      %v860 = vmul.f32 %v855, %v859
      %vm861 = vweird.f32 %v854
      %vm862 = vweird.f32 %v855
      %vm863 = vmor %vm861, %vm862
      %v864 = vsel %vm863, %v855, %v860
      %v865 = vmul.f32 %v848, %v864
      %v867 = vperm.slane %v834, 0
      %v869 = vmul.f32 %v865, %v867
      %v871 = vperm.slane %v835, 0
      %v873 = vadd.f32 %v869, %v871
      %v874 = vpack.c.bf16 %v873, %v873
      %v875 = vld [vmem:[%s798] sm:$0x1]
      %v877 = vperm.slane %v875, 0
      %v879 = vadd.f32 %v833, %v877
      %v880 = vld [vmem:[%s768] sm:$0xf]
      %v881 = vld [vmem:[%s768 + $0x4] sm:$0xf]
      %v882 = vld [vmem:[%s768 + $0x8] sm:$0xf]
      %v883 = vld [vmem:[%s768 + $0xc] sm:$0xf]
      %v884 = vld [vmem:[%s772] sm:$0x1]
      %v886 = vperm.slane %v884, 0
      %v892 = vunpack.c.l.b16 %v880
      %v893 = vunpack.c.l.b16 %v881
      %v894 = vunpack.c.l.b16 %v882
      %v895 = vunpack.c.l.b16 %v883
      %v896 = vpack.c.b16 %v893, %v892
      %v897 = vpack.c.b16 %v895, %v894
      %vm900 = vcmask 261120
      %v902 = vsel %vm900, %v874, 0
      %904 = vmatpush.bf16.msra.mxu0 0
      %905 = vmatpush.bf16.msra.mxu0 0
      %906 = vmatpush.bf16.msra.mxu0 0
      %907 = vmatpush.bf16.msra.mxu0 0
      %908 = vmatpush.bf16.msra.mxu0 0
      %909 = vmatpush.bf16.msra.mxu0 0
      %910 = vmatpush.bf16.msra.mxu0 %v897
      %911 = vmatpush.bf16.msra.mxu0 %v896
      %912 = vmatmul.bf16.gmra.mxu0 %v902
      %v913 = vpop.f32.mrf.mxu0
      %v914 = vadd.f32 %v886, %v913
      %v915 = vpop.f32.mrf.mxu0
      %916 = vdwg.mxu0
      %v917 = vld [vmem:[%s777] sm:$0xf]
      %v918 = vld [vmem:[%s777 + $0x4] sm:$0xf]
      %v919 = vld [vmem:[%s777 + $0x8] sm:$0xf]
      %v920 = vld [vmem:[%s777 + $0xc] sm:$0xf]
      %v921 = vld [vmem:[%s781] sm:$0x1]
      %v923 = vperm.slane %v921, 0
      %v929 = vunpack.c.l.b16 %v917
      %v930 = vunpack.c.l.b16 %v918
      %v931 = vunpack.c.l.b16 %v919
      %v932 = vunpack.c.l.b16 %v920
      %v933 = vpack.c.b16 %v930, %v929
      %v934 = vpack.c.b16 %v932, %v931
      %937 = vmatpush.bf16.msra.mxu0 0
      %938 = vmatpush.bf16.msra.mxu0 0
      %939 = vmatpush.bf16.msra.mxu0 0
      %940 = vmatpush.bf16.msra.mxu0 0
      %941 = vmatpush.bf16.msra.mxu0 0
      %942 = vmatpush.bf16.msra.mxu0 0
      %943 = vmatpush.bf16.msra.mxu0 %v934
      %944 = vmatpush.bf16.msra.mxu0 %v933
      %945 = vmatmul.bf16.gmra.mxu0 %v902
      %v946 = vpop.f32.mrf.mxu0
      %v947 = vadd.f32 %v923, %v946
      %v948 = vpop.f32.mrf.mxu0
      %949 = vdwg.mxu0
      %v950 = vld [vmem:[%s786] sm:$0xf]
      %v951 = vld [vmem:[%s786 + $0x4] sm:$0xf]
      %v952 = vld [vmem:[%s786 + $0x8] sm:$0xf]
      %v953 = vld [vmem:[%s786 + $0xc] sm:$0xf]
      %v954 = vld [vmem:[%s790] sm:$0x1]
      %v956 = vperm.slane %v954, 0
      %v962 = vunpack.c.l.b16 %v950
      %v963 = vunpack.c.l.b16 %v951
      %v964 = vunpack.c.l.b16 %v952
      %v965 = vunpack.c.l.b16 %v953
      %v966 = vpack.c.b16 %v963, %v962
      %v967 = vpack.c.b16 %v965, %v964
      %970 = vmatpush.bf16.msra.mxu0 0
      %971 = vmatpush.bf16.msra.mxu0 0
      %972 = vmatpush.bf16.msra.mxu0 0
      %973 = vmatpush.bf16.msra.mxu0 0
      %974 = vmatpush.bf16.msra.mxu0 0
      %975 = vmatpush.bf16.msra.mxu0 0
      %976 = vmatpush.bf16.msra.mxu0 %v967
      %977 = vmatpush.bf16.msra.mxu0 %v966
      %978 = vmatmul.bf16.gmra.mxu0 %v902
      %v979 = vpop.f32.mrf.mxu0
      %v980 = vadd.f32 %v956, %v979
      %v981 = vpop.f32.mrf.mxu0
      %982 = vdwg.mxu0
      %v983 = vmul.f32 %v914, 0.35355338
      %v984 = vpack.c.bf16 %v983, %v983
      %v985 = vpack.c.bf16 %v947, %v947
      %vm986 = vcmask 64512
      %v988 = vsel %vm986, %v984, 0
      %v991 = vsel %vm986, %v985, 0
      %993 = vmatpush.bf16.xpose.msra.mxu0 0
      %994 = vmatpush.bf16.xpose.msra.mxu0 0
      %995 = vmatpush.bf16.xpose.msra.mxu0 0
      %996 = vmatpush.bf16.xpose.msra.mxu0 0
      %997 = vmatpush.bf16.xpose.msra.mxu0 0
      %998 = vmatpush.bf16.xpose.msra.mxu0 0
      %999 = vmatpush.bf16.xpose.msra.mxu0 0
      %1000 = vmatpush.bf16.xpose.msra.mxu0 %v991
      %1001 = vmatmul.bf16.gmra.mxu0 %v988
      %v1002 = vpop.f32.mrf.mxu0
      %v1003 = vadd.f32 0.0, %v1002
      %v1004 = vpop.f32.mrf.mxu0
      %1005 = vdwg.mxu0
      %vm1006 = vcmask 36864
      %v1007 = vsel %vm1006, %v1003, -inf
      %1008 = vmax.xlane.f32.xlu0 %v1007
      %v1009 = vpop.xlane.xlu0 %1008
      %v1010 = vsub.f32 %v1003, %v1009
      %v1011 = vmul.f32 %v1010, 1.442695
      %v1012 = vpow.pop %v1011
      %v1013 = vsel %vm1006, %v1012, 0.0
      %1014 = vadd.xlane.f32.xlu0 %v1013
      %v1015 = vpop.xlane.xlu0 %1014
      %v1016 = vrcp.pop %v1015
      %v1017 = vmul.f32 %v1012, %v1016
      %v1018 = vpack.c.bf16 %v1017, %v1017
      %v1019 = vpack.c.bf16 %v980, %v980
      %vm1020 = vcmask 39936
      %v1022 = vsel %vm1020, %v1018, 0
      %vm1024 = vcmask 1041408
      %vm1025 = vcmask 1042432
      %v1026 = vsel %vm1024, 4294967295, 65535
      %v1027 = vsel %vm1025, %v1026, 0
      %v1029 = vand.u32 %v1019, %v1027
      %1031 = vmatpush.bf16.msra.mxu0 0
      %1032 = vmatpush.bf16.msra.mxu0 0
      %1033 = vmatpush.bf16.msra.mxu0 0
      %1034 = vmatpush.bf16.msra.mxu0 0
      %1035 = vmatpush.bf16.msra.mxu0 0
      %1036 = vmatpush.bf16.msra.mxu0 0
      %1037 = vmatpush.bf16.msra.mxu0 0
      %1038 = vmatpush.bf16.msra.mxu0 %v1029
      %1039 = vmatmul.bf16.gmra.mxu0 %v1022
      %v1040 = vpop.f32.mrf.mxu0
      %v1041 = vadd.f32 0.0, %v1040
      %v1042 = vpop.f32.mrf.mxu0
      %1043 = vdwg.mxu0
      %v1044 = vpack.c.bf16 %v1041, %v1041
      %v1045 = vld [vmem:[%s795] sm:$0xf]
      %v1047 = vsel %vm986, %v1044, 0
      %vm1049 = vcmask 1043456
      %v1051 = vsel %vm1049, %v1045, 0
      %1053 = vmatpush.bf16.msra.mxu0 0
      %1054 = vmatpush.bf16.msra.mxu0 0
      %1055 = vmatpush.bf16.msra.mxu0 0
      %1056 = vmatpush.bf16.msra.mxu0 0
      %1057 = vmatpush.bf16.msra.mxu0 0
      %1058 = vmatpush.bf16.msra.mxu0 0
      %1059 = vmatpush.bf16.msra.mxu0 0
      %1060 = vmatpush.bf16.msra.mxu0 %v1051
      %1061 = vmatmul.bf16.gmra.mxu0 %v1047
      %v1062 = vpop.f32.mrf.mxu0
      %v1063 = vadd.f32 0.0, %v1062
      %v1064 = vpop.f32.mrf.mxu0
      %1065 = vdwg.mxu0
      %v1066 = vadd.f32 %v879, %v1063
      %s1067 = scalar_lea.vmem %s768, 16
      %v1068 = vld [vmem:[%s1067] sm:$0xf]
      %v1069 = vld [vmem:[%s1067 + $0x4] sm:$0xf]
      %v1070 = vld [vmem:[%s1067 + $0x8] sm:$0xf]
      %v1071 = vld [vmem:[%s1067 + $0xc] sm:$0xf]
      %s1072 = scalar_lea.vmem %s772, 1
      %v1073 = vld [vmem:[%s1072] sm:$0x1]
      %v1075 = vperm.slane %v1073, 0
      %v1081 = vunpack.c.l.b16 %v1068
      %v1082 = vunpack.c.l.b16 %v1069
      %v1083 = vunpack.c.l.b16 %v1070
      %v1084 = vunpack.c.l.b16 %v1071
      %v1085 = vpack.c.b16 %v1082, %v1081
      %v1086 = vpack.c.b16 %v1084, %v1083
      %1089 = vmatpush.bf16.msra.mxu0 0
      %1090 = vmatpush.bf16.msra.mxu0 0
      %1091 = vmatpush.bf16.msra.mxu0 0
      %1092 = vmatpush.bf16.msra.mxu0 0
      %1093 = vmatpush.bf16.msra.mxu0 0
      %1094 = vmatpush.bf16.msra.mxu0 0
      %1095 = vmatpush.bf16.msra.mxu0 %v1086
      %1096 = vmatpush.bf16.msra.mxu0 %v1085
      %1097 = vmatmul.bf16.gmra.mxu0 %v902
      %v1098 = vpop.f32.mrf.mxu0
      %v1099 = vadd.f32 %v1075, %v1098
      %v1100 = vpop.f32.mrf.mxu0
      %1101 = vdwg.mxu0
      %s1102 = scalar_lea.vmem %s777, 16
      %v1103 = vld [vmem:[%s1102] sm:$0xf]
      %v1104 = vld [vmem:[%s1102 + $0x4] sm:$0xf]
      %v1105 = vld [vmem:[%s1102 + $0x8] sm:$0xf]
      %v1106 = vld [vmem:[%s1102 + $0xc] sm:$0xf]
      %s1107 = scalar_lea.vmem %s781, 1
      %v1108 = vld [vmem:[%s1107] sm:$0x1]
      %v1110 = vperm.slane %v1108, 0
      %v1116 = vunpack.c.l.b16 %v1103
      %v1117 = vunpack.c.l.b16 %v1104
      %v1118 = vunpack.c.l.b16 %v1105
      %v1119 = vunpack.c.l.b16 %v1106
      %v1120 = vpack.c.b16 %v1117, %v1116
      %v1121 = vpack.c.b16 %v1119, %v1118
      %1124 = vmatpush.bf16.msra.mxu0 0
      %1125 = vmatpush.bf16.msra.mxu0 0
      %1126 = vmatpush.bf16.msra.mxu0 0
      %1127 = vmatpush.bf16.msra.mxu0 0
      %1128 = vmatpush.bf16.msra.mxu0 0
      %1129 = vmatpush.bf16.msra.mxu0 0
      %1130 = vmatpush.bf16.msra.mxu0 %v1121
      %1131 = vmatpush.bf16.msra.mxu0 %v1120
      %1132 = vmatmul.bf16.gmra.mxu0 %v902
      %v1133 = vpop.f32.mrf.mxu0
      %v1134 = vadd.f32 %v1110, %v1133
      %v1135 = vpop.f32.mrf.mxu0
      %1136 = vdwg.mxu0
      %s1137 = scalar_lea.vmem %s786, 16
      %v1138 = vld [vmem:[%s1137] sm:$0xf]
      %v1139 = vld [vmem:[%s1137 + $0x4] sm:$0xf]
      %v1140 = vld [vmem:[%s1137 + $0x8] sm:$0xf]
      %v1141 = vld [vmem:[%s1137 + $0xc] sm:$0xf]
      %s1142 = scalar_lea.vmem %s790, 1
      %v1143 = vld [vmem:[%s1142] sm:$0x1]
      %v1145 = vperm.slane %v1143, 0
      %v1151 = vunpack.c.l.b16 %v1138
      %v1152 = vunpack.c.l.b16 %v1139
      %v1153 = vunpack.c.l.b16 %v1140
      %v1154 = vunpack.c.l.b16 %v1141
      %v1155 = vpack.c.b16 %v1152, %v1151
      %v1156 = vpack.c.b16 %v1154, %v1153
      %1159 = vmatpush.bf16.msra.mxu0 0
      %1160 = vmatpush.bf16.msra.mxu0 0
      %1161 = vmatpush.bf16.msra.mxu0 0
      %1162 = vmatpush.bf16.msra.mxu0 0
      %1163 = vmatpush.bf16.msra.mxu0 0
      %1164 = vmatpush.bf16.msra.mxu0 0
      %1165 = vmatpush.bf16.msra.mxu0 %v1156
      %1166 = vmatpush.bf16.msra.mxu0 %v1155
      %1167 = vmatmul.bf16.gmra.mxu0 %v902
      %v1168 = vpop.f32.mrf.mxu0
      %v1169 = vadd.f32 %v1145, %v1168
      %v1170 = vpop.f32.mrf.mxu0
      %1171 = vdwg.mxu0
      %v1172 = vmul.f32 %v1099, 0.35355338
      %v1173 = vpack.c.bf16 %v1172, %v1172
      %v1174 = vpack.c.bf16 %v1134, %v1134
      %v1176 = vsel %vm986, %v1173, 0
      %v1179 = vsel %vm986, %v1174, 0
      %1181 = vmatpush.bf16.xpose.msra.mxu0 0
      %1182 = vmatpush.bf16.xpose.msra.mxu0 0
      %1183 = vmatpush.bf16.xpose.msra.mxu0 0
      %1184 = vmatpush.bf16.xpose.msra.mxu0 0
      %1185 = vmatpush.bf16.xpose.msra.mxu0 0
      %1186 = vmatpush.bf16.xpose.msra.mxu0 0
      %1187 = vmatpush.bf16.xpose.msra.mxu0 0
      %1188 = vmatpush.bf16.xpose.msra.mxu0 %v1179
      %1189 = vmatmul.bf16.gmra.mxu0 %v1176
      %v1190 = vpop.f32.mrf.mxu0
      %v1191 = vadd.f32 0.0, %v1190
      %v1192 = vpop.f32.mrf.mxu0
      %1193 = vdwg.mxu0
      %v1194 = vsel %vm1006, %v1191, -inf
      %1195 = vmax.xlane.f32.xlu0 %v1194
      %v1196 = vpop.xlane.xlu0 %1195
      %v1197 = vsub.f32 %v1191, %v1196
      %v1198 = vmul.f32 %v1197, 1.442695
      %v1199 = vpow.pop %v1198
      %v1200 = vsel %vm1006, %v1199, 0.0
      %1201 = vadd.xlane.f32.xlu0 %v1200
      %v1202 = vpop.xlane.xlu0 %1201
      %v1203 = vrcp.pop %v1202
      %v1204 = vmul.f32 %v1199, %v1203
      %v1205 = vpack.c.bf16 %v1204, %v1204
      %v1206 = vpack.c.bf16 %v1169, %v1169
      %v1208 = vsel %vm1020, %v1205, 0
      %v1211 = vand.u32 %v1206, %v1027
      %1213 = vmatpush.bf16.msra.mxu0 0
      %1214 = vmatpush.bf16.msra.mxu0 0
      %1215 = vmatpush.bf16.msra.mxu0 0
      %1216 = vmatpush.bf16.msra.mxu0 0
      %1217 = vmatpush.bf16.msra.mxu0 0
      %1218 = vmatpush.bf16.msra.mxu0 0
      %1219 = vmatpush.bf16.msra.mxu0 0
      %1220 = vmatpush.bf16.msra.mxu0 %v1211
      %1221 = vmatmul.bf16.gmra.mxu0 %v1208
      %v1222 = vpop.f32.mrf.mxu0
      %v1223 = vadd.f32 0.0, %v1222
      %v1224 = vpop.f32.mrf.mxu0
      %1225 = vdwg.mxu0
      %v1226 = vpack.c.bf16 %v1223, %v1223
      %s1227 = scalar_lea.vmem %s795, 4
      %v1228 = vld [vmem:[%s1227] sm:$0xf]
      %v1230 = vsel %vm986, %v1226, 0
      %v1233 = vsel %vm1049, %v1228, 0
      %1235 = vmatpush.bf16.msra.mxu0 0
      %1236 = vmatpush.bf16.msra.mxu0 0
      %1237 = vmatpush.bf16.msra.mxu0 0
      %1238 = vmatpush.bf16.msra.mxu0 0
      %1239 = vmatpush.bf16.msra.mxu0 0
      %1240 = vmatpush.bf16.msra.mxu0 0
      %1241 = vmatpush.bf16.msra.mxu0 0
      %1242 = vmatpush.bf16.msra.mxu0 %v1233
      %1243 = vmatmul.bf16.gmra.mxu0 %v1230
      %v1244 = vpop.f32.mrf.mxu0
      %v1245 = vadd.f32 0.0, %v1244
      %v1246 = vpop.f32.mrf.mxu0
      %1247 = vdwg.mxu0
      %v1248 = vadd.f32 %v1066, %v1245
      %s1249 = scalar_lea.vmem %s768, 32
      %v1250 = vld [vmem:[%s1249] sm:$0xf]
      %v1251 = vld [vmem:[%s1249 + $0x4] sm:$0xf]
      %v1252 = vld [vmem:[%s1249 + $0x8] sm:$0xf]
      %v1253 = vld [vmem:[%s1249 + $0xc] sm:$0xf]
      %s1254 = scalar_lea.vmem %s772, 2
      %v1255 = vld [vmem:[%s1254] sm:$0x1]
      %v1257 = vperm.slane %v1255, 0
      %v1263 = vunpack.c.l.b16 %v1250
      %v1264 = vunpack.c.l.b16 %v1251
      %v1265 = vunpack.c.l.b16 %v1252
      %v1266 = vunpack.c.l.b16 %v1253
      %v1267 = vpack.c.b16 %v1264, %v1263
      %v1268 = vpack.c.b16 %v1266, %v1265
      %1271 = vmatpush.bf16.msra.mxu0 0
      %1272 = vmatpush.bf16.msra.mxu0 0
      %1273 = vmatpush.bf16.msra.mxu0 0
      %1274 = vmatpush.bf16.msra.mxu0 0
      %1275 = vmatpush.bf16.msra.mxu0 0
      %1276 = vmatpush.bf16.msra.mxu0 0
      %1277 = vmatpush.bf16.msra.mxu0 %v1268
      %1278 = vmatpush.bf16.msra.mxu0 %v1267
      %1279 = vmatmul.bf16.gmra.mxu0 %v902
      %v1280 = vpop.f32.mrf.mxu0
      %v1281 = vadd.f32 %v1257, %v1280
      %v1282 = vpop.f32.mrf.mxu0
      %1283 = vdwg.mxu0
      %s1284 = scalar_lea.vmem %s777, 32
      %v1285 = vld [vmem:[%s1284] sm:$0xf]
      %v1286 = vld [vmem:[%s1284 + $0x4] sm:$0xf]
      %v1287 = vld [vmem:[%s1284 + $0x8] sm:$0xf]
      %v1288 = vld [vmem:[%s1284 + $0xc] sm:$0xf]
      %s1289 = scalar_lea.vmem %s781, 2
      %v1290 = vld [vmem:[%s1289] sm:$0x1]
      %v1292 = vperm.slane %v1290, 0
      %v1298 = vunpack.c.l.b16 %v1285
      %v1299 = vunpack.c.l.b16 %v1286
      %v1300 = vunpack.c.l.b16 %v1287
      %v1301 = vunpack.c.l.b16 %v1288
      %v1302 = vpack.c.b16 %v1299, %v1298
      %v1303 = vpack.c.b16 %v1301, %v1300
      %1306 = vmatpush.bf16.msra.mxu0 0
      %1307 = vmatpush.bf16.msra.mxu0 0
      %1308 = vmatpush.bf16.msra.mxu0 0
      %1309 = vmatpush.bf16.msra.mxu0 0
      %1310 = vmatpush.bf16.msra.mxu0 0
      %1311 = vmatpush.bf16.msra.mxu0 0
      %1312 = vmatpush.bf16.msra.mxu0 %v1303
      %1313 = vmatpush.bf16.msra.mxu0 %v1302
      %1314 = vmatmul.bf16.gmra.mxu0 %v902
      %v1315 = vpop.f32.mrf.mxu0
      %v1316 = vadd.f32 %v1292, %v1315
      %v1317 = vpop.f32.mrf.mxu0
      %1318 = vdwg.mxu0
      %s1319 = scalar_lea.vmem %s786, 32
      %v1320 = vld [vmem:[%s1319] sm:$0xf]
      %v1321 = vld [vmem:[%s1319 + $0x4] sm:$0xf]
      %v1322 = vld [vmem:[%s1319 + $0x8] sm:$0xf]
      %v1323 = vld [vmem:[%s1319 + $0xc] sm:$0xf]
      %s1324 = scalar_lea.vmem %s790, 2
      %v1325 = vld [vmem:[%s1324] sm:$0x1]
      %v1327 = vperm.slane %v1325, 0
      %v1333 = vunpack.c.l.b16 %v1320
      %v1334 = vunpack.c.l.b16 %v1321
      %v1335 = vunpack.c.l.b16 %v1322
      %v1336 = vunpack.c.l.b16 %v1323
      %v1337 = vpack.c.b16 %v1334, %v1333
      %v1338 = vpack.c.b16 %v1336, %v1335
      %1341 = vmatpush.bf16.msra.mxu0 0
      %1342 = vmatpush.bf16.msra.mxu0 0
      %1343 = vmatpush.bf16.msra.mxu0 0
      %1344 = vmatpush.bf16.msra.mxu0 0
      %1345 = vmatpush.bf16.msra.mxu0 0
      %1346 = vmatpush.bf16.msra.mxu0 0
      %1347 = vmatpush.bf16.msra.mxu0 %v1338
      %1348 = vmatpush.bf16.msra.mxu0 %v1337
      %1349 = vmatmul.bf16.gmra.mxu0 %v902
      %v1350 = vpop.f32.mrf.mxu0
      %v1351 = vadd.f32 %v1327, %v1350
      %v1352 = vpop.f32.mrf.mxu0
      %1353 = vdwg.mxu0
      %v1354 = vmul.f32 %v1281, 0.35355338
      %v1355 = vpack.c.bf16 %v1354, %v1354
      %v1356 = vpack.c.bf16 %v1316, %v1316
      %v1358 = vsel %vm986, %v1355, 0
      %v1361 = vsel %vm986, %v1356, 0
      %1363 = vmatpush.bf16.xpose.msra.mxu0 0
      %1364 = vmatpush.bf16.xpose.msra.mxu0 0
      %1365 = vmatpush.bf16.xpose.msra.mxu0 0
      %1366 = vmatpush.bf16.xpose.msra.mxu0 0
      %1367 = vmatpush.bf16.xpose.msra.mxu0 0
      %1368 = vmatpush.bf16.xpose.msra.mxu0 0
      %1369 = vmatpush.bf16.xpose.msra.mxu0 0
      %1370 = vmatpush.bf16.xpose.msra.mxu0 %v1361
      %1371 = vmatmul.bf16.gmra.mxu0 %v1358
      %v1372 = vpop.f32.mrf.mxu0
      %v1373 = vadd.f32 0.0, %v1372
      %v1374 = vpop.f32.mrf.mxu0
      %1375 = vdwg.mxu0
      %v1376 = vsel %vm1006, %v1373, -inf
      %1377 = vmax.xlane.f32.xlu0 %v1376
      %v1378 = vpop.xlane.xlu0 %1377
      %v1379 = vsub.f32 %v1373, %v1378
      %v1380 = vmul.f32 %v1379, 1.442695
      %v1381 = vpow.pop %v1380
      %v1382 = vsel %vm1006, %v1381, 0.0
      %1383 = vadd.xlane.f32.xlu0 %v1382
      %v1384 = vpop.xlane.xlu0 %1383
      %v1385 = vrcp.pop %v1384
      %v1386 = vmul.f32 %v1381, %v1385
      %v1387 = vpack.c.bf16 %v1386, %v1386
      %v1388 = vpack.c.bf16 %v1351, %v1351
      %v1390 = vsel %vm1020, %v1387, 0
      %v1393 = vand.u32 %v1388, %v1027
      %1395 = vmatpush.bf16.msra.mxu0 0
      %1396 = vmatpush.bf16.msra.mxu0 0
      %1397 = vmatpush.bf16.msra.mxu0 0
      %1398 = vmatpush.bf16.msra.mxu0 0
      %1399 = vmatpush.bf16.msra.mxu0 0
      %1400 = vmatpush.bf16.msra.mxu0 0
      %1401 = vmatpush.bf16.msra.mxu0 0
      %1402 = vmatpush.bf16.msra.mxu0 %v1393
      %1403 = vmatmul.bf16.gmra.mxu0 %v1390
      %v1404 = vpop.f32.mrf.mxu0
      %v1405 = vadd.f32 0.0, %v1404
      %v1406 = vpop.f32.mrf.mxu0
      %1407 = vdwg.mxu0
      %v1408 = vpack.c.bf16 %v1405, %v1405
      %s1409 = scalar_lea.vmem %s795, 8
      %v1410 = vld [vmem:[%s1409] sm:$0xf]
      %v1412 = vsel %vm986, %v1408, 0
      %v1415 = vsel %vm1049, %v1410, 0
      %1417 = vmatpush.bf16.msra.mxu0 0
      %1418 = vmatpush.bf16.msra.mxu0 0
      %1419 = vmatpush.bf16.msra.mxu0 0
      %1420 = vmatpush.bf16.msra.mxu0 0
      %1421 = vmatpush.bf16.msra.mxu0 0
      %1422 = vmatpush.bf16.msra.mxu0 0
      %1423 = vmatpush.bf16.msra.mxu0 0
      %1424 = vmatpush.bf16.msra.mxu0 %v1415
      %1425 = vmatmul.bf16.gmra.mxu0 %v1412
      %v1426 = vpop.f32.mrf.mxu0
      %v1427 = vadd.f32 0.0, %v1426
      %v1428 = vpop.f32.mrf.mxu0
      %1429 = vdwg.mxu0
      %v1430 = vadd.f32 %v1248, %v1427
      %s1431 = scalar_lea.vmem %s768, 48
      %v1432 = vld [vmem:[%s1431] sm:$0xf]
      %v1433 = vld [vmem:[%s1431 + $0x4] sm:$0xf]
      %v1434 = vld [vmem:[%s1431 + $0x8] sm:$0xf]
      %v1435 = vld [vmem:[%s1431 + $0xc] sm:$0xf]
      %s1436 = scalar_lea.vmem %s772, 3
      %v1437 = vld [vmem:[%s1436] sm:$0x1]
      %v1439 = vperm.slane %v1437, 0
      %v1445 = vunpack.c.l.b16 %v1432
      %v1446 = vunpack.c.l.b16 %v1433
      %v1447 = vunpack.c.l.b16 %v1434
      %v1448 = vunpack.c.l.b16 %v1435
      %v1449 = vpack.c.b16 %v1446, %v1445
      %v1450 = vpack.c.b16 %v1448, %v1447
      %1453 = vmatpush.bf16.msra.mxu0 0
      %1454 = vmatpush.bf16.msra.mxu0 0
      %1455 = vmatpush.bf16.msra.mxu0 0
      %1456 = vmatpush.bf16.msra.mxu0 0
      %1457 = vmatpush.bf16.msra.mxu0 0
      %1458 = vmatpush.bf16.msra.mxu0 0
      %1459 = vmatpush.bf16.msra.mxu0 %v1450
      %1460 = vmatpush.bf16.msra.mxu0 %v1449
      %1461 = vmatmul.bf16.gmra.mxu0 %v902
      %v1462 = vpop.f32.mrf.mxu0
      %v1463 = vadd.f32 %v1439, %v1462
      %v1464 = vpop.f32.mrf.mxu0
      %1465 = vdwg.mxu0
      %s1466 = scalar_lea.vmem %s777, 48
      %v1467 = vld [vmem:[%s1466] sm:$0xf]
      %v1468 = vld [vmem:[%s1466 + $0x4] sm:$0xf]
      %v1469 = vld [vmem:[%s1466 + $0x8] sm:$0xf]
      %v1470 = vld [vmem:[%s1466 + $0xc] sm:$0xf]
      %s1471 = scalar_lea.vmem %s781, 3
      %v1472 = vld [vmem:[%s1471] sm:$0x1]
      %v1474 = vperm.slane %v1472, 0
      %v1480 = vunpack.c.l.b16 %v1467
      %v1481 = vunpack.c.l.b16 %v1468
      %v1482 = vunpack.c.l.b16 %v1469
      %v1483 = vunpack.c.l.b16 %v1470
      %v1484 = vpack.c.b16 %v1481, %v1480
      %v1485 = vpack.c.b16 %v1483, %v1482
      %1488 = vmatpush.bf16.msra.mxu0 0
      %1489 = vmatpush.bf16.msra.mxu0 0
      %1490 = vmatpush.bf16.msra.mxu0 0
      %1491 = vmatpush.bf16.msra.mxu0 0
      %1492 = vmatpush.bf16.msra.mxu0 0
      %1493 = vmatpush.bf16.msra.mxu0 0
      %1494 = vmatpush.bf16.msra.mxu0 %v1485
      %1495 = vmatpush.bf16.msra.mxu0 %v1484
      %1496 = vmatmul.bf16.gmra.mxu0 %v902
      %v1497 = vpop.f32.mrf.mxu0
      %v1498 = vadd.f32 %v1474, %v1497
      %v1499 = vpop.f32.mrf.mxu0
      %1500 = vdwg.mxu0
      %s1501 = scalar_lea.vmem %s786, 48
      %v1502 = vld [vmem:[%s1501] sm:$0xf]
      %v1503 = vld [vmem:[%s1501 + $0x4] sm:$0xf]
      %v1504 = vld [vmem:[%s1501 + $0x8] sm:$0xf]
      %v1505 = vld [vmem:[%s1501 + $0xc] sm:$0xf]
      %s1506 = scalar_lea.vmem %s790, 3
      %v1507 = vld [vmem:[%s1506] sm:$0x1]
      %v1509 = vperm.slane %v1507, 0
      %v1515 = vunpack.c.l.b16 %v1502
      %v1516 = vunpack.c.l.b16 %v1503
      %v1517 = vunpack.c.l.b16 %v1504
      %v1518 = vunpack.c.l.b16 %v1505
      %v1519 = vpack.c.b16 %v1516, %v1515
      %v1520 = vpack.c.b16 %v1518, %v1517
      %1523 = vmatpush.bf16.msra.mxu0 0
      %1524 = vmatpush.bf16.msra.mxu0 0
      %1525 = vmatpush.bf16.msra.mxu0 0
      %1526 = vmatpush.bf16.msra.mxu0 0
      %1527 = vmatpush.bf16.msra.mxu0 0
      %1528 = vmatpush.bf16.msra.mxu0 0
      %1529 = vmatpush.bf16.msra.mxu0 %v1520
      %1530 = vmatpush.bf16.msra.mxu0 %v1519
      %1531 = vmatmul.bf16.gmra.mxu0 %v902
      %v1532 = vpop.f32.mrf.mxu0
      %v1533 = vadd.f32 %v1509, %v1532
      %v1534 = vpop.f32.mrf.mxu0
      %1535 = vdwg.mxu0
      %v1536 = vmul.f32 %v1463, 0.35355338
      %v1537 = vpack.c.bf16 %v1536, %v1536
      %v1538 = vpack.c.bf16 %v1498, %v1498
      %v1540 = vsel %vm986, %v1537, 0
      %v1543 = vsel %vm986, %v1538, 0
      %1545 = vmatpush.bf16.xpose.msra.mxu0 0
      %1546 = vmatpush.bf16.xpose.msra.mxu0 0
      %1547 = vmatpush.bf16.xpose.msra.mxu0 0
      %1548 = vmatpush.bf16.xpose.msra.mxu0 0
      %1549 = vmatpush.bf16.xpose.msra.mxu0 0
      %1550 = vmatpush.bf16.xpose.msra.mxu0 0
      %1551 = vmatpush.bf16.xpose.msra.mxu0 0
      %1552 = vmatpush.bf16.xpose.msra.mxu0 %v1543
      %1553 = vmatmul.bf16.gmra.mxu0 %v1540
      %v1554 = vpop.f32.mrf.mxu0
      %v1555 = vadd.f32 0.0, %v1554
      %v1556 = vpop.f32.mrf.mxu0
      %1557 = vdwg.mxu0
      %v1558 = vsel %vm1006, %v1555, -inf
      %1559 = vmax.xlane.f32.xlu0 %v1558
      %v1560 = vpop.xlane.xlu0 %1559
      %v1561 = vsub.f32 %v1555, %v1560
      %v1562 = vmul.f32 %v1561, 1.442695
      %v1563 = vpow.pop %v1562
      %v1564 = vsel %vm1006, %v1563, 0.0
      %1565 = vadd.xlane.f32.xlu0 %v1564
      %v1566 = vpop.xlane.xlu0 %1565
      %v1567 = vrcp.pop %v1566
      %v1568 = vmul.f32 %v1563, %v1567
      %v1569 = vpack.c.bf16 %v1568, %v1568
      %v1570 = vpack.c.bf16 %v1533, %v1533
      %v1572 = vsel %vm1020, %v1569, 0
      %v1575 = vand.u32 %v1570, %v1027
      %1577 = vmatpush.bf16.msra.mxu0 0
      %1578 = vmatpush.bf16.msra.mxu0 0
      %1579 = vmatpush.bf16.msra.mxu0 0
      %1580 = vmatpush.bf16.msra.mxu0 0
      %1581 = vmatpush.bf16.msra.mxu0 0
      %1582 = vmatpush.bf16.msra.mxu0 0
      %1583 = vmatpush.bf16.msra.mxu0 0
      %1584 = vmatpush.bf16.msra.mxu0 %v1575
      %1585 = vmatmul.bf16.gmra.mxu0 %v1572
      %v1586 = vpop.f32.mrf.mxu0
      %v1587 = vadd.f32 0.0, %v1586
      %v1588 = vpop.f32.mrf.mxu0
      %1589 = vdwg.mxu0
      %v1590 = vpack.c.bf16 %v1587, %v1587
      %s1591 = scalar_lea.vmem %s795, 12
      %v1592 = vld [vmem:[%s1591] sm:$0xf]
      %v1594 = vsel %vm986, %v1590, 0
      %v1597 = vsel %vm1049, %v1592, 0
      %1599 = vmatpush.bf16.msra.mxu0 0
      %1600 = vmatpush.bf16.msra.mxu0 0
      %1601 = vmatpush.bf16.msra.mxu0 0
      %1602 = vmatpush.bf16.msra.mxu0 0
      %1603 = vmatpush.bf16.msra.mxu0 0
      %1604 = vmatpush.bf16.msra.mxu0 0
      %1605 = vmatpush.bf16.msra.mxu0 0
      %1606 = vmatpush.bf16.msra.mxu0 %v1597
      %1607 = vmatmul.bf16.gmra.mxu0 %v1594
      %v1608 = vpop.f32.mrf.mxu0
      %v1609 = vadd.f32 0.0, %v1608
      %v1610 = vpop.f32.mrf.mxu0
      %1611 = vdwg.mxu0
      %v1612 = vadd.f32 %v1430, %v1609
      %v1613 = vld [vmem:[%s801] sm:$0x1]
      %v1614 = vld [vmem:[%s804] sm:$0x1]
      %v1615 = vsel %vm836, %v1612, 0.0
      %1616 = vadd.xlane.f32.xlu0 %v1615
      %v1617 = vpop.xlane.xlu0 %1616
      %v1618 = vmul.f32 %v1617, %v846
      %v1619 = vsub.f32 %v1612, %v1618
      %v1620 = vmul.f32 %v1619, %v1619
      %v1621 = vsel %vm836, %v1620, 0.0
      %1622 = vadd.xlane.f32.xlu0 %v1621
      %v1623 = vpop.xlane.xlu0 %1622
      %v1624 = vmul.f32 %v1623, %v846
      %v1625 = vadd.f32 %v1624, 1e-05
      %v1626 = vrsqrt.pop %v1625
      %v1627 = vmul.f32 %v1626, %v1625
      %v1628 = vmul.f32 %v1627, %v1626
      %v1629 = vmul.f32 0.5, %v1628
      %v1630 = vsub.f32 1.5, %v1629
      %v1631 = vmul.f32 %v1626, %v1630
      %vm1632 = vweird.f32 %v1625
      %vm1633 = vweird.f32 %v1626
      %vm1634 = vmor %vm1632, %vm1633
      %v1635 = vsel %vm1634, %v1626, %v1631
      %v1636 = vmul.f32 %v1619, %v1635
      %v1638 = vperm.slane %v1613, 0
      %v1640 = vmul.f32 %v1636, %v1638
      %v1642 = vperm.slane %v1614, 0
      %v1644 = vadd.f32 %v1640, %v1642
      %v1645 = vpack.c.bf16 %v1644, %v1644
      %v1646 = vld [vmem:[%s809] sm:$0xf]
      %v1647 = vld [vmem:[%s809 + $0x4] sm:$0xf]
      %v1648 = vld [vmem:[%s809 + $0x8] sm:$0xf]
      %v1649 = vld [vmem:[%s809 + $0xc] sm:$0xf]
      %v1650 = vld [vmem:[%s812] sm:$0x1]
      %v1652 = vperm.slane %v1650, 0
      %v1658 = vunpack.c.l.b16 %v1646
      %v1659 = vunpack.c.l.b16 %v1647
      %v1660 = vunpack.c.l.b16 %v1648
      %v1661 = vunpack.c.l.b16 %v1649
      %v1662 = vpack.c.b16 %v1659, %v1658
      %v1663 = vpack.c.b16 %v1661, %v1660
      %v1667 = vsel %vm900, %v1645, 0
      %1669 = vmatpush.bf16.msra.mxu0 0
      %1670 = vmatpush.bf16.msra.mxu0 0
      %1671 = vmatpush.bf16.msra.mxu0 0
      %1672 = vmatpush.bf16.msra.mxu0 0
      %1673 = vmatpush.bf16.msra.mxu0 0
      %1674 = vmatpush.bf16.msra.mxu0 0
      %1675 = vmatpush.bf16.msra.mxu0 %v1663
      %1676 = vmatpush.bf16.msra.mxu0 %v1662
      %1677 = vmatmul.bf16.gmra.mxu0 %v1667
      %v1678 = vpop.f32.mrf.mxu0
      %v1679 = vadd.f32 %v1652, %v1678
      %v1680 = vpop.f32.mrf.mxu0
      %1681 = vdwg.mxu0
      %v1682 = vmul.f32 %v1679, 1.702
      %v1683 = vxor.u32 %v1682, 2147483648
      %v1684 = vmul.f32 %v1683, 1.442695
      %v1685 = vpow.pop %v1684
      %v1686 = vadd.f32 %v1685, 1.0
      %v1687 = vrcp.pop %v1686
      %v1688 = vmul.f32 %v1686, %v1687
      %v1689 = vsub.f32 1.0, %v1688
      %v1690 = vmul.f32 %v1687, %v1689
      %v1691 = vadd.f32 %v1687, %v1690
      %vm1692 = vweird.f32 %v1686
      %vm1693 = vweird.f32 %v1687
      %vm1694 = vmor %vm1692, %vm1693
      %v1695 = vsel %vm1694, %v1687, %v1691
      %v1696 = vand.u32 2147483647, %v1686
      %vm1697 = vcmp.eq.f32.partialorder %v1696, 8.507059e+37
      %v1698 = vand.u32 %v1686, 2147483648
      %v1699 = vor.u32 1.1754944e-38, %v1698
      %v1700 = vsel %vm1697, %v1699, %v1695
      %v1701 = vmul.f32 1.0, %v1700
      %v1702 = vmul.f32 %v1679, %v1701
      %v1703 = vpack.c.bf16 %v1702, %v1702
      %v1704 = vld [vmem:[%s817] sm:$0xf]
      %v1705 = vld [vmem:[%s817 + $0x4] sm:$0xf]
      %v1706 = vld [vmem:[%s817 + $0x8] sm:$0xf]
      %v1707 = vld [vmem:[%s817 + $0xc] sm:$0xf]
      %v1708 = vld [vmem:[%s817 + $0x10] sm:$0xf]
      %v1709 = vld [vmem:[%s817 + $0x14] sm:$0xf]
      %v1710 = vld [vmem:[%s817 + $0x18] sm:$0xf]
      %v1711 = vld [vmem:[%s817 + $0x1c] sm:$0xf]
      %v1720 = vunpack.c.l.b16 %v1704
      %v1721 = vunpack.c.l.b16 %v1705
      %v1722 = vunpack.c.l.b16 %v1706
      %v1723 = vunpack.c.l.b16 %v1707
      %v1724 = vunpack.c.l.b16 %v1708
      %v1725 = vunpack.c.l.b16 %v1709
      %v1726 = vunpack.c.l.b16 %v1710
      %v1727 = vunpack.c.l.b16 %v1711
      %v1728 = vpack.c.b16 %v1721, %v1720
      %v1729 = vpack.c.b16 %v1723, %v1722
      %v1730 = vpack.c.b16 %v1725, %v1724
      %v1731 = vpack.c.b16 %v1727, %v1726
      %vm1736 = vcmask 523264
      %v1738 = vsel %vm1736, %v1703, 0
      %1740 = vmatpush.bf16.msra.mxu0 0
      %1741 = vmatpush.bf16.msra.mxu0 0
      %1742 = vmatpush.bf16.msra.mxu0 0
      %1743 = vmatpush.bf16.msra.mxu0 0
      %1744 = vmatpush.bf16.msra.mxu0 %v1731
      %1745 = vmatpush.bf16.msra.mxu0 %v1730
      %1746 = vmatpush.bf16.msra.mxu0 %v1729
      %1747 = vmatpush.bf16.msra.mxu0 %v1728
      %1748 = vmatmul.bf16.gmra.mxu0 %v1738
      %v1749 = vpop.f32.mrf.mxu0
      %v1750 = vadd.f32 0.0, %v1749
      %v1751 = vpop.f32.mrf.mxu0
      %1752 = vdwg.mxu0
      %v1753 = vadd.f32 %v1612, %v1750
      %v1754 = vld [vmem:[%s820] sm:$0x1]
      %v1756 = vperm.slane %v1754, 0
      %v1758 = vadd.f32 %v1753, %v1756
      %1759 = vst.msk [vmem:[#allocation2] sm:$0x1f] %vm836, %v1758
      %p1760 = scmp.eq.s32.totalorder %s33, 1
      // Predicated region
      $region93: #{_lambda_.4} parent=87 // pred_check
        %p1761 = pneg %p1760
      $region94: #{_lambda_.4} parent=87 // pred_check_branch
        %1763 = sbr.rel (%p1761) target = $region96
      $region95: #{_lambda_.4} parent=87 // pred_region
        %v1764 = vld [vmem:[#allocation2] sm:$0x1f]
        %1765 = vst.msk [vmem:[%s824] sm:$0x1f] %vm836, %v1764
      $region96: #{_lambda_.4} parent=87 // pred_fallthru
        _
      %p1766 = scmp.lt.s32.totalorder %s32, 1
      %s1767 = scalar_select %p1766, %s32, 1
      %s1768 = smul.addr %s1767, 8
      %s1769 = scalar_lea.vmem %s17, %s1768
      // Predicated region
      $region97: #{_lambda_.4} parent=87 // pred_check
        %p1770 = pneg %p500
      $region98: #{_lambda_.4} parent=87 // pred_check_branch
        %1772 = sbr.rel (%p1770) target = $region100
      $region99: #{_lambda_.4} parent=87 // pred_region
        _
      $region100: #{_lambda_.4} parent=87 // pred_fallthru
        _
    $region88: #{_lambda_.4} parent=5 // pred_fallthru
      _
    %p1773 = scmp.le.s32.totalorder 2, %s23
    // Predicated region
    $region101: #{_lambda_.4} parent=5 // pred_check
      %p1774 = pneg %p1773
    $region102: #{_lambda_.4} parent=5 // pred_check_branch
      %1776 = sbr.rel (%p1774) target = $region104
    $region103: #{_lambda_.4} parent=5 // pred_region
      %s1777 = ssub.s32 %s23, 2
      // Predicated region
      $region105: #{_lambda_.4} parent=103 // pred_check
        %p1778 = pneg %p506
      $region106: #{_lambda_.4} parent=103 // pred_check_branch
        %1780 = sbr.rel (%p1778) target = $region108
      $region107: #{_lambda_.4} parent=103 // pred_region
        %p1781 = scmp.lt.s32.totalorder %s34, 1
        %s1782 = scalar_select %p1781, %s34, 1
        %s1783 = smul.addr %s1782, 8
        %s1784 = scalar_lea.vmem %s17, %s1783
      $region108: #{_lambda_.4} parent=103 // pred_fallthru
        _
    $region104: #{_lambda_.4} parent=5 // pred_fallthru
      _
  $region6: #{_lambda_.4} parent=0 // loop_footer
    %s27 = sadd.s32 1, %s23
  $region7: #{_lambda_.4} parent=0 // loop_footer_branch
    %22 = sbr.rel target = $region3
  $region8: #{_lambda_.4} parent=0 // loop_exit
    _

</llo_original>
